<compile_context>
chip_gen: v5e
topology: v5e:2x2
jax: 0.10.0
libtpu: 0.0.40
codegen_flags: <defaults>
</compile_context>

<pallas_src>
import jax
import jax.numpy as jnp
from jax.experimental import pallas as pl
from jax.experimental.pallas import tpu as pltpu


def _up_conv_kernel(x_ref, w_ref, scale_ref, bias_ref, o_ref):
    # x_ref:     (1, H+2, W+2, Cin)  original-resolution input, zero-padded by 1
    # w_ref:     (4, 4, Cin, Cout)   folded polyphase weights [phase, tap, Cin, Cout]
    # scale_ref: (1, Cout)           folded BN scale  = gamma / sqrt(var + eps)
    # bias_ref:  (1, Cout)           folded bias      = (conv_b - mean) * scale + beta
    # o_ref:     (1, H, 2, W, 2*Cout)  phase-interleaved output
    Hp, Wp, Cin = x_ref.shape[1], x_ref.shape[2], x_ref.shape[3]
    H, W = Hp - 2, Wp - 2
    Cout = scale_ref.shape[1]

    # 9 distinct low-res tap views (rectangular sub-windows of the block),
    # each reused by up to 4 of the phases below.
    taps = [[x_ref[0, a:a + H, b:b + W, :].reshape(H * W, Cin)
             for b in range(3)] for a in range(3)]

    scale = scale_ref[...]   # (1, Cout)
    bias = bias_ref[...]     # (1, Cout)

    # Phase (ry, rx) produces output pixels (2*y + ry, 2*x + rx); it only needs
    # the 2x2 low-res window with row starts {ry, ry+1}, col starts {rx, rx+1}.
    for ry in range(2):
        for rx in range(2):
            p = ry * 2 + rx
            acc = jnp.zeros((H * W, Cout), dtype=jnp.float32)
            for ky in range(2):
                for kx in range(2):
                    acc = acc + jnp.dot(
                        taps[ry + ky][rx + kx],
                        w_ref[p, ky * 2 + kx],
                        preferred_element_type=jnp.float32,
                    )
            # Fused (folded) BatchNorm + ReLU on the f32 accumulator, once per phase.
            y = jnp.maximum(acc * scale + bias, 0.0)
            o_ref[0, :, ry, :, rx * Cout:(rx + 1) * Cout] = (
                y.reshape(H, W, Cout).astype(o_ref.dtype))


def up_conv_forward(x_nchw, w_oihw, conv_b, gamma, beta, run_mean, run_var,
                    eps=1e-5):
    """Forward pass of up_conv. Input/output follow PyTorch NCHW convention."""
    N, Cin, H, W = x_nchw.shape
    Cout = w_oihw.shape[0]

    # NCHW -> NHWC (channels on the lane axis); zero-pad at ORIGINAL resolution.
    x = jnp.transpose(x_nchw, (0, 2, 3, 1))
    x_pad = jnp.pad(x, ((0, 0), (1, 1), (1, 1), (0, 0)))     # (N, H+2, W+2, Cin)

    # --- Polyphase weight fold (one-time wrapper cost) ---------------------
    # k[dy, dx, i, o] = conv weight tap.  For output phase r (row or col), the
    # 3 conv taps map onto 2 low-res source taps:
    #   r=0: dy=0 -> tap 0,  dy=1,2 -> tap 1
    #   r=1: dy=0,1 -> tap 0, dy=2 -> tap 1
    k = jnp.transpose(w_oihw, (2, 3, 1, 0)).astype(jnp.float32)  # (3,3,Cin,Cout)
    S = jnp.array([[[1., 0., 0.], [0., 1., 1.]],
                   [[1., 1., 0.], [0., 0., 1.]]], dtype=k.dtype)  # [r, tap, d]
    # wf[ry, rx, ky, kx, i, o] = sum_{dy,dx mapping to (ky,kx)} k[dy, dx, i, o]
    wf = jnp.einsum('pad,qbe,deio->pqabio', S, S, k)
    w_fold = wf.reshape(4, 4, Cin, Cout)                      # [phase, tap, Cin, Cout]

    # Fold inference-mode BatchNorm + conv bias into per-channel scale/shift.
    scale = (gamma / jnp.sqrt(run_var + eps)).reshape(1, Cout)
    bias = ((conv_b - run_mean) * scale[0] + beta).reshape(1, Cout)

    out5 = pl.pallas_call(
        _up_conv_kernel,
        out_shape=jax.ShapeDtypeStruct((N, H, 2, W, 2 * Cout), x.dtype),
        grid_spec=pltpu.PrefetchScalarGridSpec(
            num_scalar_prefetch=0,
            grid=(N,),
            in_specs=[
                pl.BlockSpec((1, H + 2, W + 2, Cin), lambda n: (n, 0, 0, 0)),
                # Constant block index -> weights stay resident in VMEM.
                pl.BlockSpec((4, 4, Cin, Cout), lambda n: (0, 0, 0, 0)),
                pl.BlockSpec((1, Cout), lambda n: (0, 0)),
                pl.BlockSpec((1, Cout), lambda n: (0, 0)),
            ],
            out_specs=pl.BlockSpec((1, H, 2, W, 2 * Cout),
                                   lambda n: (n, 0, 0, 0, 0)),
        ),
        compiler_params=pltpu.CompilerParams(
            dimension_semantics=("parallel",)),
    )(x_pad, w_fold, scale, bias)

    # (N, H, 2, W, 2*Cout) is exactly NHWC (N, 2H, 2W, Cout) phase-interleaved:
    # this reshape is free (no data movement).
    out_nhwc = out5.reshape(N, 2 * H, 2 * W, Cout)
    return jnp.transpose(out_nhwc, (0, 3, 1, 2))              # NHWC -> NCHW


def _reference(x_nchw, w_oihw, conv_b, gamma, beta, run_mean, run_var,
               eps=1e-5):
    """Pure-JAX reference mirroring PyTorch semantics (eval-mode BN)."""
    x = jnp.repeat(jnp.repeat(x_nchw, 2, axis=2), 2, axis=3)
    y = jax.lax.conv_general_dilated(
        x, w_oihw, window_strides=(1, 1), padding=((1, 1), (1, 1)),
        dimension_numbers=("NCHW", "OIHW", "NCHW"))
    y = y + conv_b[None, :, None, None]
    y = (y - run_mean[None, :, None, None]) / jnp.sqrt(
        run_var[None, :, None, None] + eps)
    y = y * gamma[None, :, None, None] + beta[None, :, None, None]
    return jnp.maximum(y, 0.0)


if __name__ == "__main__":
    key = jax.random.PRNGKey(0)
    k_x, k_w, k_b, k_g, k_be, k_m, k_v = jax.random.split(key, 7)

    N, Cin, Cout, H, W = 2, 4, 8, 16, 16          # upsampled spatial = 32x32

    x = jax.random.normal(k_x, (N, Cin, H, W), dtype=jnp.float32)
    w = jax.random.normal(k_w, (Cout, Cin, 3, 3), dtype=jnp.float32) * 0.1
    conv_b = jax.random.normal(k_b, (Cout,), dtype=jnp.float32) * 0.1
    gamma = 1.0 + 0.1 * jax.random.normal(k_g, (Cout,), dtype=jnp.float32)
    beta = 0.1 * jax.random.normal(k_be, (Cout,), dtype=jnp.float32)
    run_mean = 0.1 * jax.random.normal(k_m, (Cout,), dtype=jnp.float32)
    run_var = jnp.abs(1.0 + 0.1 * jax.random.normal(k_v, (Cout,),
                                                    dtype=jnp.float32))

    fwd = jax.jit(up_conv_forward)
    out = fwd(x, w, conv_b, gamma, beta, run_mean, run_var)
    out = jax.block_until_ready(out)

    ref = _reference(x, w, conv_b, gamma, beta, run_mean, run_var)
    assert out.shape == (N, Cout, 2 * H, 2 * W), out.shape
    assert jnp.allclose(out, ref, atol=1e-4, rtol=1e-4), (
        float(jnp.max(jnp.abs(out - ref))))

    print("KERNEL_OK")
</pallas_src>

<mosaic_0001>
module attributes {stable_mosaic.version = 11 : i64} {
  func.func @_up_conv_kernel(%arg0: i32, %arg1: memref<1x18x18x4xf32, #tpu.memory_space<vmem>>, %arg2: memref<4x4x4x8xf32, #tpu.memory_space<vmem>>, %arg3: memref<1x8xf32, #tpu.memory_space<vmem>>, %arg4: memref<1x8xf32, #tpu.memory_space<vmem>>, %arg5: memref<1x16x2x16x16xf32, #tpu.memory_space<vmem>>) attributes {dimension_semantics = [#tpu.dimension_semantics<parallel>], iteration_bounds = array<i64: 2>, scalar_prefetch = 0 : i64, scratch_operands = 0 : i64, tpu.core_type = #tpu.core_type<tc>, window_params = [{transform_indices = @transform_0, window_bounds = array<i64: 1, 18, 18, 4>}, {pipeline_mode = #tpu.pipeline_mode<synchronous>, transform_indices = @transform_1, window_bounds = array<i64: 4, 4, 4, 8>}, {pipeline_mode = #tpu.pipeline_mode<synchronous>, transform_indices = @transform_2, window_bounds = array<i64: 1, 8>}, {pipeline_mode = #tpu.pipeline_mode<synchronous>, transform_indices = @transform_3, window_bounds = array<i64: 1, 8>}, {transform_indices = @transform_4, window_bounds = array<i64: 1, 16, 2, 16, 16>}]} {
    %c0 = arith.constant 0 : index
    %c0_0 = arith.constant 0 : index
    %c0_1 = arith.constant 0 : index
    %c0_2 = arith.constant 0 : index
    %0 = vector.load %arg1[%c0, %c0_0, %c0_1, %c0_2] : memref<1x18x18x4xf32, #tpu.memory_space<vmem>>, vector<1x16x16x4xf32>
    %1 = vector.shape_cast %0 : vector<1x16x16x4xf32> to vector<16x16x4xf32>
    %2 = vector.shape_cast %1 : vector<16x16x4xf32> to vector<256x4xf32>
    %c0_3 = arith.constant 0 : index
    %c0_4 = arith.constant 0 : index
    %c1 = arith.constant 1 : index
    %c0_5 = arith.constant 0 : index
    %3 = vector.load %arg1[%c0_3, %c0_4, %c1, %c0_5] : memref<1x18x18x4xf32, #tpu.memory_space<vmem>>, vector<1x16x16x4xf32>
    %4 = vector.shape_cast %3 : vector<1x16x16x4xf32> to vector<16x16x4xf32>
    %5 = vector.shape_cast %4 : vector<16x16x4xf32> to vector<256x4xf32>
    %c0_6 = arith.constant 0 : index
    %c0_7 = arith.constant 0 : index
    %c2 = arith.constant 2 : index
    %c0_8 = arith.constant 0 : index
    %6 = vector.load %arg1[%c0_6, %c0_7, %c2, %c0_8] : memref<1x18x18x4xf32, #tpu.memory_space<vmem>>, vector<1x16x16x4xf32>
    %7 = vector.shape_cast %6 : vector<1x16x16x4xf32> to vector<16x16x4xf32>
    %8 = vector.shape_cast %7 : vector<16x16x4xf32> to vector<256x4xf32>
    %c0_9 = arith.constant 0 : index
    %c1_10 = arith.constant 1 : index
    %c0_11 = arith.constant 0 : index
    %c0_12 = arith.constant 0 : index
    %9 = vector.load %arg1[%c0_9, %c1_10, %c0_11, %c0_12] : memref<1x18x18x4xf32, #tpu.memory_space<vmem>>, vector<1x16x16x4xf32>
    %10 = vector.shape_cast %9 : vector<1x16x16x4xf32> to vector<16x16x4xf32>
    %11 = vector.shape_cast %10 : vector<16x16x4xf32> to vector<256x4xf32>
    %c0_13 = arith.constant 0 : index
    %c1_14 = arith.constant 1 : index
    %c1_15 = arith.constant 1 : index
    %c0_16 = arith.constant 0 : index
    %12 = vector.load %arg1[%c0_13, %c1_14, %c1_15, %c0_16] : memref<1x18x18x4xf32, #tpu.memory_space<vmem>>, vector<1x16x16x4xf32>
    %13 = vector.shape_cast %12 : vector<1x16x16x4xf32> to vector<16x16x4xf32>
    %14 = vector.shape_cast %13 : vector<16x16x4xf32> to vector<256x4xf32>
    %c0_17 = arith.constant 0 : index
    %c1_18 = arith.constant 1 : index
    %c2_19 = arith.constant 2 : index
    %c0_20 = arith.constant 0 : index
    %15 = vector.load %arg1[%c0_17, %c1_18, %c2_19, %c0_20] : memref<1x18x18x4xf32, #tpu.memory_space<vmem>>, vector<1x16x16x4xf32>
    %16 = vector.shape_cast %15 : vector<1x16x16x4xf32> to vector<16x16x4xf32>
    %17 = vector.shape_cast %16 : vector<16x16x4xf32> to vector<256x4xf32>
    %c0_21 = arith.constant 0 : index
    %c2_22 = arith.constant 2 : index
    %c0_23 = arith.constant 0 : index
    %c0_24 = arith.constant 0 : index
    %18 = vector.load %arg1[%c0_21, %c2_22, %c0_23, %c0_24] : memref<1x18x18x4xf32, #tpu.memory_space<vmem>>, vector<1x16x16x4xf32>
    %19 = vector.shape_cast %18 : vector<1x16x16x4xf32> to vector<16x16x4xf32>
    %20 = vector.shape_cast %19 : vector<16x16x4xf32> to vector<256x4xf32>
    %c0_25 = arith.constant 0 : index
    %c2_26 = arith.constant 2 : index
    %c1_27 = arith.constant 1 : index
    %c0_28 = arith.constant 0 : index
    %21 = vector.load %arg1[%c0_25, %c2_26, %c1_27, %c0_28] : memref<1x18x18x4xf32, #tpu.memory_space<vmem>>, vector<1x16x16x4xf32>
    %22 = vector.shape_cast %21 : vector<1x16x16x4xf32> to vector<16x16x4xf32>
    %23 = vector.shape_cast %22 : vector<16x16x4xf32> to vector<256x4xf32>
    %c0_29 = arith.constant 0 : index
    %c2_30 = arith.constant 2 : index
    %c2_31 = arith.constant 2 : index
    %c0_32 = arith.constant 0 : index
    %24 = vector.load %arg1[%c0_29, %c2_30, %c2_31, %c0_32] : memref<1x18x18x4xf32, #tpu.memory_space<vmem>>, vector<1x16x16x4xf32>
    %25 = vector.shape_cast %24 : vector<1x16x16x4xf32> to vector<16x16x4xf32>
    %26 = vector.shape_cast %25 : vector<16x16x4xf32> to vector<256x4xf32>
    %c0_33 = arith.constant 0 : index
    %c0_34 = arith.constant 0 : index
    %27 = vector.load %arg3[%c0_33, %c0_34] : memref<1x8xf32, #tpu.memory_space<vmem>>, vector<1x8xf32>
    %c0_35 = arith.constant 0 : index
    %c0_36 = arith.constant 0 : index
    %28 = vector.load %arg4[%c0_35, %c0_36] : memref<1x8xf32, #tpu.memory_space<vmem>>, vector<1x8xf32>
    %cst = arith.constant 0.000000e+00 : f32
    %29 = vector.broadcast %cst : f32 to vector<256x8xf32>
    %c0_37 = arith.constant 0 : index
    %c0_38 = arith.constant 0 : index
    %c0_39 = arith.constant 0 : index
    %c0_40 = arith.constant 0 : index
    %30 = vector.load %arg2[%c0_37, %c0_38, %c0_39, %c0_40] : memref<4x4x4x8xf32, #tpu.memory_space<vmem>>, vector<1x1x4x8xf32>
    %31 = vector.shape_cast %30 : vector<1x1x4x8xf32> to vector<4x8xf32>
    %cst_41 = arith.constant dense<0.000000e+00> : vector<256x8xf32>
    %32 = tpu.matmul %2, %31, %cst_41 {dimension_numbers = #tpu.dot_dimension_numbers<[1], [0], [0], [1], [0, 0, 1, 1], [], []>} : vector<256x4xf32>, vector<4x8xf32>, vector<256x8xf32> -> vector<256x8xf32>
    %33 = arith.addf %29, %32 : vector<256x8xf32>
    %c0_42 = arith.constant 0 : index
    %c1_43 = arith.constant 1 : index
    %c0_44 = arith.constant 0 : index
    %c0_45 = arith.constant 0 : index
    %34 = vector.load %arg2[%c0_42, %c1_43, %c0_44, %c0_45] : memref<4x4x4x8xf32, #tpu.memory_space<vmem>>, vector<1x1x4x8xf32>
    %35 = vector.shape_cast %34 : vector<1x1x4x8xf32> to vector<4x8xf32>
    %cst_46 = arith.constant dense<0.000000e+00> : vector<256x8xf32>
    %36 = tpu.matmul %5, %35, %cst_46 {dimension_numbers = #tpu.dot_dimension_numbers<[1], [0], [0], [1], [0, 0, 1, 1], [], []>} : vector<256x4xf32>, vector<4x8xf32>, vector<256x8xf32> -> vector<256x8xf32>
    %37 = arith.addf %33, %36 : vector<256x8xf32>
    %c0_47 = arith.constant 0 : index
    %c2_48 = arith.constant 2 : index
    %c0_49 = arith.constant 0 : index
    %c0_50 = arith.constant 0 : index
    %38 = vector.load %arg2[%c0_47, %c2_48, %c0_49, %c0_50] : memref<4x4x4x8xf32, #tpu.memory_space<vmem>>, vector<1x1x4x8xf32>
    %39 = vector.shape_cast %38 : vector<1x1x4x8xf32> to vector<4x8xf32>
    %cst_51 = arith.constant dense<0.000000e+00> : vector<256x8xf32>
    %40 = tpu.matmul %11, %39, %cst_51 {dimension_numbers = #tpu.dot_dimension_numbers<[1], [0], [0], [1], [0, 0, 1, 1], [], []>} : vector<256x4xf32>, vector<4x8xf32>, vector<256x8xf32> -> vector<256x8xf32>
    %41 = arith.addf %37, %40 : vector<256x8xf32>
    %c0_52 = arith.constant 0 : index
    %c3 = arith.constant 3 : index
    %c0_53 = arith.constant 0 : index
    %c0_54 = arith.constant 0 : index
    %42 = vector.load %arg2[%c0_52, %c3, %c0_53, %c0_54] : memref<4x4x4x8xf32, #tpu.memory_space<vmem>>, vector<1x1x4x8xf32>
    %43 = vector.shape_cast %42 : vector<1x1x4x8xf32> to vector<4x8xf32>
    %cst_55 = arith.constant dense<0.000000e+00> : vector<256x8xf32>
    %44 = tpu.matmul %14, %43, %cst_55 {dimension_numbers = #tpu.dot_dimension_numbers<[1], [0], [0], [1], [0, 0, 1, 1], [], []>} : vector<256x4xf32>, vector<4x8xf32>, vector<256x8xf32> -> vector<256x8xf32>
    %45 = arith.addf %41, %44 : vector<256x8xf32>
    %46 = vector.broadcast %27 : vector<1x8xf32> to vector<256x8xf32>
    %47 = arith.mulf %45, %46 : vector<256x8xf32>
    %48 = vector.broadcast %28 : vector<1x8xf32> to vector<256x8xf32>
    %49 = arith.addf %47, %48 : vector<256x8xf32>
    %cst_56 = arith.constant 0.000000e+00 : f32
    %50 = vector.broadcast %cst_56 : f32 to vector<256x8xf32>
    %51 = arith.maximumf %49, %50 : vector<256x8xf32>
    %52 = vector.shape_cast %51 : vector<256x8xf32> to vector<16x16x8xf32>
    %c0_57 = arith.constant 0 : index
    %c0_58 = arith.constant 0 : index
    %c0_59 = arith.constant 0 : index
    %c0_60 = arith.constant 0 : index
    %c0_61 = arith.constant 0 : index
    %53 = vector.load %arg5[%c0_57, %c0_58, %c0_59, %c0_60, %c0_61] : memref<1x16x2x16x16xf32, #tpu.memory_space<vmem>>, vector<1x16x1x16x8xf32>
    %54 = vector.shape_cast %53 : vector<1x16x1x16x8xf32> to vector<16x16x8xf32>
    %55 = vector.shape_cast %52 : vector<16x16x8xf32> to vector<1x16x1x16x8xf32>
    tpu.vector_store %arg5[%c0_57, %c0_58, %c0_59, %c0_60, %c0_61], %55 {strides = array<i32>} : memref<1x16x2x16x16xf32, #tpu.memory_space<vmem>>, vector<1x16x1x16x8xf32>,
    %cst_62 = arith.constant 0.000000e+00 : f32
    %56 = vector.broadcast %cst_62 : f32 to vector<256x8xf32>
    %c1_63 = arith.constant 1 : index
    %c0_64 = arith.constant 0 : index
    %c0_65 = arith.constant 0 : index
    %c0_66 = arith.constant 0 : index
    %57 = vector.load %arg2[%c1_63, %c0_64, %c0_65, %c0_66] : memref<4x4x4x8xf32, #tpu.memory_space<vmem>>, vector<1x1x4x8xf32>
    %58 = vector.shape_cast %57 : vector<1x1x4x8xf32> to vector<4x8xf32>
    %cst_67 = arith.constant dense<0.000000e+00> : vector<256x8xf32>
    %59 = tpu.matmul %5, %58, %cst_67 {dimension_numbers = #tpu.dot_dimension_numbers<[1], [0], [0], [1], [0, 0, 1, 1], [], []>} : vector<256x4xf32>, vector<4x8xf32>, vector<256x8xf32> -> vector<256x8xf32>
    %60 = arith.addf %56, %59 : vector<256x8xf32>
    %c1_68 = arith.constant 1 : index
    %c1_69 = arith.constant 1 : index
    %c0_70 = arith.constant 0 : index
    %c0_71 = arith.constant 0 : index
    %61 = vector.load %arg2[%c1_68, %c1_69, %c0_70, %c0_71] : memref<4x4x4x8xf32, #tpu.memory_space<vmem>>, vector<1x1x4x8xf32>
    %62 = vector.shape_cast %61 : vector<1x1x4x8xf32> to vector<4x8xf32>
    %cst_72 = arith.constant dense<0.000000e+00> : vector<256x8xf32>
    %63 = tpu.matmul %8, %62, %cst_72 {dimension_numbers = #tpu.dot_dimension_numbers<[1], [0], [0], [1], [0, 0, 1, 1], [], []>} : vector<256x4xf32>, vector<4x8xf32>, vector<256x8xf32> -> vector<256x8xf32>
    %64 = arith.addf %60, %63 : vector<256x8xf32>
    %c1_73 = arith.constant 1 : index
    %c2_74 = arith.constant 2 : index
    %c0_75 = arith.constant 0 : index
    %c0_76 = arith.constant 0 : index
    %65 = vector.load %arg2[%c1_73, %c2_74, %c0_75, %c0_76] : memref<4x4x4x8xf32, #tpu.memory_space<vmem>>, vector<1x1x4x8xf32>
    %66 = vector.shape_cast %65 : vector<1x1x4x8xf32> to vector<4x8xf32>
    %cst_77 = arith.constant dense<0.000000e+00> : vector<256x8xf32>
    %67 = tpu.matmul %14, %66, %cst_77 {dimension_numbers = #tpu.dot_dimension_numbers<[1], [0], [0], [1], [0, 0, 1, 1], [], []>} : vector<256x4xf32>, vector<4x8xf32>, vector<256x8xf32> -> vector<256x8xf32>
    %68 = arith.addf %64, %67 : vector<256x8xf32>
    %c1_78 = arith.constant 1 : index
    %c3_79 = arith.constant 3 : index
    %c0_80 = arith.constant 0 : index
    %c0_81 = arith.constant 0 : index
    %69 = vector.load %arg2[%c1_78, %c3_79, %c0_80, %c0_81] : memref<4x4x4x8xf32, #tpu.memory_space<vmem>>, vector<1x1x4x8xf32>
    %70 = vector.shape_cast %69 : vector<1x1x4x8xf32> to vector<4x8xf32>
    %cst_82 = arith.constant dense<0.000000e+00> : vector<256x8xf32>
    %71 = tpu.matmul %17, %70, %cst_82 {dimension_numbers = #tpu.dot_dimension_numbers<[1], [0], [0], [1], [0, 0, 1, 1], [], []>} : vector<256x4xf32>, vector<4x8xf32>, vector<256x8xf32> -> vector<256x8xf32>
    %72 = arith.addf %68, %71 : vector<256x8xf32>
    %73 = vector.broadcast %27 : vector<1x8xf32> to vector<256x8xf32>
    %74 = arith.mulf %72, %73 : vector<256x8xf32>
    %75 = vector.broadcast %28 : vector<1x8xf32> to vector<256x8xf32>
    %76 = arith.addf %74, %75 : vector<256x8xf32>
    %cst_83 = arith.constant 0.000000e+00 : f32
    %77 = vector.broadcast %cst_83 : f32 to vector<256x8xf32>
    %78 = arith.maximumf %76, %77 : vector<256x8xf32>
    %79 = vector.shape_cast %78 : vector<256x8xf32> to vector<16x16x8xf32>
    %c0_84 = arith.constant 0 : index
    %c0_85 = arith.constant 0 : index
    %c0_86 = arith.constant 0 : index
    %c0_87 = arith.constant 0 : index
    %c8 = arith.constant 8 : index
    %80 = vector.load %arg5[%c0_84, %c0_85, %c0_86, %c0_87, %c8] : memref<1x16x2x16x16xf32, #tpu.memory_space<vmem>>, vector<1x16x1x16x8xf32>
    %81 = vector.shape_cast %80 : vector<1x16x1x16x8xf32> to vector<16x16x8xf32>
    %82 = vector.shape_cast %79 : vector<16x16x8xf32> to vector<1x16x1x16x8xf32>
    tpu.vector_store %arg5[%c0_84, %c0_85, %c0_86, %c0_87, %c8], %82 {strides = array<i32>} : memref<1x16x2x16x16xf32, #tpu.memory_space<vmem>>, vector<1x16x1x16x8xf32>,
    %cst_88 = arith.constant 0.000000e+00 : f32
    %83 = vector.broadcast %cst_88 : f32 to vector<256x8xf32>
    %c2_89 = arith.constant 2 : index
    %c0_90 = arith.constant 0 : index
    %c0_91 = arith.constant 0 : index
    %c0_92 = arith.constant 0 : index
    %84 = vector.load %arg2[%c2_89, %c0_90, %c0_91, %c0_92] : memref<4x4x4x8xf32, #tpu.memory_space<vmem>>, vector<1x1x4x8xf32>
    %85 = vector.shape_cast %84 : vector<1x1x4x8xf32> to vector<4x8xf32>
    %cst_93 = arith.constant dense<0.000000e+00> : vector<256x8xf32>
    %86 = tpu.matmul %11, %85, %cst_93 {dimension_numbers = #tpu.dot_dimension_numbers<[1], [0], [0], [1], [0, 0, 1, 1], [], []>} : vector<256x4xf32>, vector<4x8xf32>, vector<256x8xf32> -> vector<256x8xf32>
    %87 = arith.addf %83, %86 : vector<256x8xf32>
    %c2_94 = arith.constant 2 : index
    %c1_95 = arith.constant 1 : index
    %c0_96 = arith.constant 0 : index
    %c0_97 = arith.constant 0 : index
    %88 = vector.load %arg2[%c2_94, %c1_95, %c0_96, %c0_97] : memref<4x4x4x8xf32, #tpu.memory_space<vmem>>, vector<1x1x4x8xf32>
    %89 = vector.shape_cast %88 : vector<1x1x4x8xf32> to vector<4x8xf32>
    %cst_98 = arith.constant dense<0.000000e+00> : vector<256x8xf32>
    %90 = tpu.matmul %14, %89, %cst_98 {dimension_numbers = #tpu.dot_dimension_numbers<[1], [0], [0], [1], [0, 0, 1, 1], [], []>} : vector<256x4xf32>, vector<4x8xf32>, vector<256x8xf32> -> vector<256x8xf32>
    %91 = arith.addf %87, %90 : vector<256x8xf32>
    %c2_99 = arith.constant 2 : index
    %c2_100 = arith.constant 2 : index
    %c0_101 = arith.constant 0 : index
    %c0_102 = arith.constant 0 : index
    %92 = vector.load %arg2[%c2_99, %c2_100, %c0_101, %c0_102] : memref<4x4x4x8xf32, #tpu.memory_space<vmem>>, vector<1x1x4x8xf32>
    %93 = vector.shape_cast %92 : vector<1x1x4x8xf32> to vector<4x8xf32>
    %cst_103 = arith.constant dense<0.000000e+00> : vector<256x8xf32>
    %94 = tpu.matmul %20, %93, %cst_103 {dimension_numbers = #tpu.dot_dimension_numbers<[1], [0], [0], [1], [0, 0, 1, 1], [], []>} : vector<256x4xf32>, vector<4x8xf32>, vector<256x8xf32> -> vector<256x8xf32>
    %95 = arith.addf %91, %94 : vector<256x8xf32>
    %c2_104 = arith.constant 2 : index
    %c3_105 = arith.constant 3 : index
    %c0_106 = arith.constant 0 : index
    %c0_107 = arith.constant 0 : index
    %96 = vector.load %arg2[%c2_104, %c3_105, %c0_106, %c0_107] : memref<4x4x4x8xf32, #tpu.memory_space<vmem>>, vector<1x1x4x8xf32>
    %97 = vector.shape_cast %96 : vector<1x1x4x8xf32> to vector<4x8xf32>
    %cst_108 = arith.constant dense<0.000000e+00> : vector<256x8xf32>
    %98 = tpu.matmul %23, %97, %cst_108 {dimension_numbers = #tpu.dot_dimension_numbers<[1], [0], [0], [1], [0, 0, 1, 1], [], []>} : vector<256x4xf32>, vector<4x8xf32>, vector<256x8xf32> -> vector<256x8xf32>
    %99 = arith.addf %95, %98 : vector<256x8xf32>
    %100 = vector.broadcast %27 : vector<1x8xf32> to vector<256x8xf32>
    %101 = arith.mulf %99, %100 : vector<256x8xf32>
    %102 = vector.broadcast %28 : vector<1x8xf32> to vector<256x8xf32>
    %103 = arith.addf %101, %102 : vector<256x8xf32>
    %cst_109 = arith.constant 0.000000e+00 : f32
    %104 = vector.broadcast %cst_109 : f32 to vector<256x8xf32>
    %105 = arith.maximumf %103, %104 : vector<256x8xf32>
    %106 = vector.shape_cast %105 : vector<256x8xf32> to vector<16x16x8xf32>
    %c0_110 = arith.constant 0 : index
    %c0_111 = arith.constant 0 : index
    %c1_112 = arith.constant 1 : index
    %c0_113 = arith.constant 0 : index
    %c0_114 = arith.constant 0 : index
    %107 = vector.load %arg5[%c0_110, %c0_111, %c1_112, %c0_113, %c0_114] : memref<1x16x2x16x16xf32, #tpu.memory_space<vmem>>, vector<1x16x1x16x8xf32>
    %108 = vector.shape_cast %107 : vector<1x16x1x16x8xf32> to vector<16x16x8xf32>
    %109 = vector.shape_cast %106 : vector<16x16x8xf32> to vector<1x16x1x16x8xf32>
    tpu.vector_store %arg5[%c0_110, %c0_111, %c1_112, %c0_113, %c0_114], %109 {strides = array<i32>} : memref<1x16x2x16x16xf32, #tpu.memory_space<vmem>>, vector<1x16x1x16x8xf32>,
    %cst_115 = arith.constant 0.000000e+00 : f32
    %110 = vector.broadcast %cst_115 : f32 to vector<256x8xf32>
    %c3_116 = arith.constant 3 : index
    %c0_117 = arith.constant 0 : index
    %c0_118 = arith.constant 0 : index
    %c0_119 = arith.constant 0 : index
    %111 = vector.load %arg2[%c3_116, %c0_117, %c0_118, %c0_119] : memref<4x4x4x8xf32, #tpu.memory_space<vmem>>, vector<1x1x4x8xf32>
    %112 = vector.shape_cast %111 : vector<1x1x4x8xf32> to vector<4x8xf32>
    %cst_120 = arith.constant dense<0.000000e+00> : vector<256x8xf32>
    %113 = tpu.matmul %14, %112, %cst_120 {dimension_numbers = #tpu.dot_dimension_numbers<[1], [0], [0], [1], [0, 0, 1, 1], [], []>} : vector<256x4xf32>, vector<4x8xf32>, vector<256x8xf32> -> vector<256x8xf32>
    %114 = arith.addf %110, %113 : vector<256x8xf32>
    %c3_121 = arith.constant 3 : index
    %c1_122 = arith.constant 1 : index
    %c0_123 = arith.constant 0 : index
    %c0_124 = arith.constant 0 : index
    %115 = vector.load %arg2[%c3_121, %c1_122, %c0_123, %c0_124] : memref<4x4x4x8xf32, #tpu.memory_space<vmem>>, vector<1x1x4x8xf32>
    %116 = vector.shape_cast %115 : vector<1x1x4x8xf32> to vector<4x8xf32>
    %cst_125 = arith.constant dense<0.000000e+00> : vector<256x8xf32>
    %117 = tpu.matmul %17, %116, %cst_125 {dimension_numbers = #tpu.dot_dimension_numbers<[1], [0], [0], [1], [0, 0, 1, 1], [], []>} : vector<256x4xf32>, vector<4x8xf32>, vector<256x8xf32> -> vector<256x8xf32>
    %118 = arith.addf %114, %117 : vector<256x8xf32>
    %c3_126 = arith.constant 3 : index
    %c2_127 = arith.constant 2 : index
    %c0_128 = arith.constant 0 : index
    %c0_129 = arith.constant 0 : index
    %119 = vector.load %arg2[%c3_126, %c2_127, %c0_128, %c0_129] : memref<4x4x4x8xf32, #tpu.memory_space<vmem>>, vector<1x1x4x8xf32>
    %120 = vector.shape_cast %119 : vector<1x1x4x8xf32> to vector<4x8xf32>
    %cst_130 = arith.constant dense<0.000000e+00> : vector<256x8xf32>
    %121 = tpu.matmul %23, %120, %cst_130 {dimension_numbers = #tpu.dot_dimension_numbers<[1], [0], [0], [1], [0, 0, 1, 1], [], []>} : vector<256x4xf32>, vector<4x8xf32>, vector<256x8xf32> -> vector<256x8xf32>
    %122 = arith.addf %118, %121 : vector<256x8xf32>
    %c3_131 = arith.constant 3 : index
    %c3_132 = arith.constant 3 : index
    %c0_133 = arith.constant 0 : index
    %c0_134 = arith.constant 0 : index
    %123 = vector.load %arg2[%c3_131, %c3_132, %c0_133, %c0_134] : memref<4x4x4x8xf32, #tpu.memory_space<vmem>>, vector<1x1x4x8xf32>
    %124 = vector.shape_cast %123 : vector<1x1x4x8xf32> to vector<4x8xf32>
    %cst_135 = arith.constant dense<0.000000e+00> : vector<256x8xf32>
    %125 = tpu.matmul %26, %124, %cst_135 {dimension_numbers = #tpu.dot_dimension_numbers<[1], [0], [0], [1], [0, 0, 1, 1], [], []>} : vector<256x4xf32>, vector<4x8xf32>, vector<256x8xf32> -> vector<256x8xf32>
    %126 = arith.addf %122, %125 : vector<256x8xf32>
    %127 = vector.broadcast %27 : vector<1x8xf32> to vector<256x8xf32>
    %128 = arith.mulf %126, %127 : vector<256x8xf32>
    %129 = vector.broadcast %28 : vector<1x8xf32> to vector<256x8xf32>
    %130 = arith.addf %128, %129 : vector<256x8xf32>
    %cst_136 = arith.constant 0.000000e+00 : f32
    %131 = vector.broadcast %cst_136 : f32 to vector<256x8xf32>
    %132 = arith.maximumf %130, %131 : vector<256x8xf32>
    %133 = vector.shape_cast %132 : vector<256x8xf32> to vector<16x16x8xf32>
    %c0_137 = arith.constant 0 : index
    %c0_138 = arith.constant 0 : index
    %c1_139 = arith.constant 1 : index
    %c0_140 = arith.constant 0 : index
    %c8_141 = arith.constant 8 : index
    %134 = vector.load %arg5[%c0_137, %c0_138, %c1_139, %c0_140, %c8_141] : memref<1x16x2x16x16xf32, #tpu.memory_space<vmem>>, vector<1x16x1x16x8xf32>
    %135 = vector.shape_cast %134 : vector<1x16x1x16x8xf32> to vector<16x16x8xf32>
    %136 = vector.shape_cast %133 : vector<16x16x8xf32> to vector<1x16x1x16x8xf32>
    tpu.vector_store %arg5[%c0_137, %c0_138, %c1_139, %c0_140, %c8_141], %136 {strides = array<i32>} : memref<1x16x2x16x16xf32, #tpu.memory_space<vmem>>, vector<1x16x1x16x8xf32>,
    return
  }
  func.func @transform_0(%arg0: i32) -> (i32, i32, i32, i32) {
    %c0_i32 = arith.constant 0 : i32
    %c0_i32_0 = arith.constant 0 : i32
    %c0_i32_1 = arith.constant 0 : i32
    %c0_i32_2 = arith.constant 0 : i32
    return %arg0, %c0_i32, %c0_i32_0, %c0_i32_1 : i32, i32, i32, i32
  }
  func.func @transform_1(%arg0: i32) -> (i32, i32, i32, i32) {
    %c0_i32 = arith.constant 0 : i32
    %c0_i32_0 = arith.constant 0 : i32
    %c0_i32_1 = arith.constant 0 : i32
    %c0_i32_2 = arith.constant 0 : i32
    %c0_i32_3 = arith.constant 0 : i32
    return %c0_i32, %c0_i32_0, %c0_i32_1, %c0_i32_2 : i32, i32, i32, i32
  }
  func.func @transform_2(%arg0: i32) -> (i32, i32) {
    %c0_i32 = arith.constant 0 : i32
    %c0_i32_0 = arith.constant 0 : i32
    %c0_i32_1 = arith.constant 0 : i32
    return %c0_i32, %c0_i32_0 : i32, i32
  }
  func.func @transform_3(%arg0: i32) -> (i32, i32) {
    %c0_i32 = arith.constant 0 : i32
    %c0_i32_0 = arith.constant 0 : i32
    %c0_i32_1 = arith.constant 0 : i32
    return %c0_i32, %c0_i32_0 : i32, i32
  }
  func.func @transform_4(%arg0: i32) -> (i32, i32, i32, i32, i32) {
    %c0_i32 = arith.constant 0 : i32
    %c0_i32_0 = arith.constant 0 : i32
    %c0_i32_1 = arith.constant 0 : i32
    %c0_i32_2 = arith.constant 0 : i32
    %c0_i32_3 = arith.constant 0 : i32
    return %arg0, %c0_i32, %c0_i32_0, %c0_i32_1, %c0_i32_2 : i32, i32, i32, i32, i32
  }
}

</mosaic_0001>

<llo_original>
// kernel: up_conv_forward.1
$region0: #{up_conv_forward.1}
  #allocation0 [shape = 'u32[]', space=smem, size = 0x4, offset = 0x4, fixed_abs, tag = 'smem constant byte address 0x4 - core index']
  #allocation1 [shape = 'u32[72,128]{1,0:T(1,128)}', space=vmem, size = 0x9000, scoped, tag = 'internal scratch']
  %s0 = inlined_call_operand.vmem [shape: f32[2,18,18,4], index: 0, kind: input, shape index: {}]
  %s1 = inlined_call_operand.vmem [shape: f32[4,4,4,8], index: 1, kind: input, shape index: {}]
  %s2 = inlined_call_operand.vmem [shape: f32[1,8], index: 2, kind: input, shape index: {}]
  %s3 = inlined_call_operand.vmem [shape: f32[1,8], index: 3, kind: input, shape index: {}]
  %s4 = inlined_call_operand.vmem [shape: f32[2,16,2,16,16], index: 4, kind: output, shape index: {}]
  %s5 = sld [smem:[#allocation0]]
  $region49: #{up_conv_forward.1} parent=0
    _
  %s7 = ssub.s32 1, %s5
  %s8 = scalar_select 0, %s7, %s5
  loop: start=0, step=1, limit=4
  $region2: #{up_conv_forward.1} parent=0 // loop_pre_header
    _
  $region3: #{up_conv_forward.1} parent=0 // loop_header
    %s10 = sphi 0, %s14
    %p11 = scmp.ge.s32.totalorder %s10, 4
    %s20 = sphi 0, %s22
    %s23 = sphi 0, %s20
    %s24 = sphi 0, %s23
    %s40 = sphi 0, %s24
    %s44 = sphi 0, %s44
    %s46 = sphi 0, %s44
    %s47 = sphi 0, %s46
    %s61 = sphi 0, %s47
    %s65 = sphi 0, %s65
    %s67 = sphi 0, %s65
    %s68 = sphi 0, %s67
    %s82 = sphi 0, %s68
    %s86 = sphi 0, %s86
    %s88 = sphi 0, %s86
    %s89 = sphi 0, %s88
    %s103 = sphi 0, %s89
    %s109 = sphi 0, %s111
    %s112 = sphi 0, %s109
    %s113 = sphi 0, %s112
    %s129 = sphi 0, %s113
  $region4: #{up_conv_forward.1} parent=0 // loop_header_branch
    %13 = sbr.rel (%p11) target = $region8
  $region5: #{up_conv_forward.1} parent=0 // loop_body
    %s15 = ssub.s32 %s10, 1
    %s16 = ssub.s32 %s10, 2
    %s17 = sadd.s32 %s10, 1
    %s18 = ssub.s32 %s10, %s17
    %p19 = scmp.eq.s32.totalorder %s18, 0
    %s21 = sadd.s32 %s20, 1
    %s22 = scalar_select %p19, %s20, %s21
    %p25 = pneg %p19
    %p26 = scmp.eq.s32.totalorder %s10, 1
    %p27 = por %p25, %p26
    %p28 = scmp.ne.s32.totalorder %s20, %s23
    %p29 = scmp.eq.s32.totalorder %s10, 0
    %p30 = por %p28, %p29
    %p31 = scmp.ne.s32.totalorder %s20, %s23
    %p32 = scmp.eq.s32.totalorder %s15, 1
    %p33 = por %p31, %p32
    %p34 = scmp.ne.s32.totalorder %s23, %s24
    %p35 = scmp.eq.s32.totalorder %s15, 0
    %p36 = por %p34, %p35
    %p37 = scmp.ne.s32.totalorder %s23, %s24
    %p38 = scmp.eq.s32.totalorder %s16, 1
    %p39 = por %p37, %p38
    %p41 = scmp.ne.s32.totalorder %s24, %s40
    %p42 = scmp.eq.s32.totalorder %s16, 0
    %p43 = por %p41, %p42
    %s45 = sadd.s32 %s44, 1
    %p48 = scmp.eq.s32.totalorder %s10, 1
    %p49 = scmp.ne.s32.totalorder %s44, %s46
    %p50 = scmp.eq.s32.totalorder %s10, 0
    %p51 = por %p49, %p50
    %p52 = scmp.ne.s32.totalorder %s44, %s46
    %p53 = scmp.eq.s32.totalorder %s15, 1
    %p54 = por %p52, %p53
    %p55 = scmp.ne.s32.totalorder %s46, %s47
    %p56 = scmp.eq.s32.totalorder %s15, 0
    %p57 = por %p55, %p56
    %p58 = scmp.ne.s32.totalorder %s46, %s47
    %p59 = scmp.eq.s32.totalorder %s16, 1
    %p60 = por %p58, %p59
    %p62 = scmp.ne.s32.totalorder %s47, %s61
    %p63 = scmp.eq.s32.totalorder %s16, 0
    %p64 = por %p62, %p63
    %s66 = sadd.s32 %s65, 1
    %p69 = scmp.eq.s32.totalorder %s10, 1
    %p70 = scmp.ne.s32.totalorder %s65, %s67
    %p71 = scmp.eq.s32.totalorder %s10, 0
    %p72 = por %p70, %p71
    %p73 = scmp.ne.s32.totalorder %s65, %s67
    %p74 = scmp.eq.s32.totalorder %s15, 1
    %p75 = por %p73, %p74
    %p76 = scmp.ne.s32.totalorder %s67, %s68
    %p77 = scmp.eq.s32.totalorder %s15, 0
    %p78 = por %p76, %p77
    %p79 = scmp.ne.s32.totalorder %s67, %s68
    %p80 = scmp.eq.s32.totalorder %s16, 1
    %p81 = por %p79, %p80
    %p83 = scmp.ne.s32.totalorder %s68, %s82
    %p84 = scmp.eq.s32.totalorder %s16, 0
    %p85 = por %p83, %p84
    %s87 = sadd.s32 %s86, 1
    %p90 = scmp.eq.s32.totalorder %s10, 1
    %p91 = scmp.ne.s32.totalorder %s86, %s88
    %p92 = scmp.eq.s32.totalorder %s10, 0
    %p93 = por %p91, %p92
    %p94 = scmp.ne.s32.totalorder %s86, %s88
    %p95 = scmp.eq.s32.totalorder %s15, 1
    %p96 = por %p94, %p95
    %p97 = scmp.ne.s32.totalorder %s88, %s89
    %p98 = scmp.eq.s32.totalorder %s15, 0
    %p99 = por %p97, %p98
    %p100 = scmp.ne.s32.totalorder %s88, %s89
    %p101 = scmp.eq.s32.totalorder %s16, 1
    %p102 = por %p100, %p101
    %p104 = scmp.ne.s32.totalorder %s89, %s103
    %p105 = scmp.eq.s32.totalorder %s16, 0
    %p106 = por %p104, %p105
    %s107 = ssub.s32 %s10, %s17
    %p108 = scmp.eq.s32.totalorder %s107, 0
    %s110 = sadd.s32 %s109, 1
    %s111 = scalar_select %p108, %s109, %s110
    %p114 = pneg %p108
    %p115 = scmp.eq.s32.totalorder %s10, 1
    %p116 = por %p114, %p115
    %p117 = scmp.ne.s32.totalorder %s109, %s112
    %p118 = scmp.eq.s32.totalorder %s10, 0
    %p119 = por %p117, %p118
    %p120 = scmp.ne.s32.totalorder %s109, %s112
    %p121 = scmp.eq.s32.totalorder %s15, 1
    %p122 = por %p120, %p121
    %p123 = scmp.ne.s32.totalorder %s112, %s113
    %p124 = scmp.eq.s32.totalorder %s15, 0
    %p125 = por %p123, %p124
    %p126 = scmp.ne.s32.totalorder %s112, %s113
    %p127 = scmp.eq.s32.totalorder %s16, 1
    %p128 = por %p126, %p127
    %p130 = scmp.ne.s32.totalorder %s113, %s129
    %p131 = scmp.eq.s32.totalorder %s16, 0
    %p132 = por %p130, %p131
    %p133 = scmp.le.s32.totalorder 1, %s10
    %p134 = scmp.lt.s32.totalorder %s10, 3
    %p135 = pnand %p133, %p134
    %p136 = pneg %p135
    // Predicated region
    $region9: #{up_conv_forward.1} parent=5 // pred_check
      _
    $region10: #{up_conv_forward.1} parent=5 // pred_check_branch
      %138 = sbr.rel (%p135) target = $region12
    $region11: #{up_conv_forward.1} parent=5 // pred_region
      %s139 = ssub.s32 %s10, 1
      // Predicated region
      $region13: #{up_conv_forward.1} parent=11 // pred_check
        %p140 = pneg %p57
      $region14: #{up_conv_forward.1} parent=11 // pred_check_branch
        %142 = sbr.rel (%p140) target = $region16
      $region15: #{up_conv_forward.1} parent=11 // pred_region
        _
      $region16: #{up_conv_forward.1} parent=11 // pred_fallthru
        _
      // Predicated region
      $region17: #{up_conv_forward.1} parent=11 // pred_check
        %p143 = pneg %p78
      $region18: #{up_conv_forward.1} parent=11 // pred_check_branch
        %145 = sbr.rel (%p143) target = $region20
      $region19: #{up_conv_forward.1} parent=11 // pred_region
        _
      $region20: #{up_conv_forward.1} parent=11 // pred_fallthru
        _
      // Predicated region
      $region21: #{up_conv_forward.1} parent=11 // pred_check
        %p146 = pneg %p99
      $region22: #{up_conv_forward.1} parent=11 // pred_check_branch
        %148 = sbr.rel (%p146) target = $region24
      $region23: #{up_conv_forward.1} parent=11 // pred_region
        _
      $region24: #{up_conv_forward.1} parent=11 // pred_fallthru
        _
    $region12: #{up_conv_forward.1} parent=5 // pred_fallthru
      _
    %p149 = scmp.lt.s32.totalorder %s10, 2
    // Predicated region
    $region25: #{up_conv_forward.1} parent=5 // pred_check
      %p150 = pneg %p149
    $region26: #{up_conv_forward.1} parent=5 // pred_check_branch
      %152 = sbr.rel (%p150) target = $region28
    $region27: #{up_conv_forward.1} parent=5 // pred_region
      // Predicated region
      $region29: #{up_conv_forward.1} parent=27 // pred_check
        %p153 = pneg %p30
      $region30: #{up_conv_forward.1} parent=27 // pred_check_branch
        %155 = sbr.rel (%p153) target = $region32
      $region31: #{up_conv_forward.1} parent=27 // pred_region
        %p156 = scmp.lt.s32.totalorder %s10, 1
        %s157 = scalar_select %p156, %s10, 1
        %s158 = smul.addr %s157, 54
        %s159 = smul.addr %s158, 8
        %s160 = scalar_lea.vmem %s0, %s159
      $region32: #{up_conv_forward.1} parent=27 // pred_fallthru
        _
    $region28: #{up_conv_forward.1} parent=5 // pred_fallthru
      _
    %p161 = scmp.le.s32.totalorder 1, %s10
    %p162 = scmp.lt.s32.totalorder %s10, 3
    %p163 = pnand %p161, %p162
    %p164 = pneg %p163
    // Predicated region
    $region33: #{up_conv_forward.1} parent=5 // pred_check
      _
    $region34: #{up_conv_forward.1} parent=5 // pred_check_branch
      %166 = sbr.rel (%p163) target = $region36
    $region35: #{up_conv_forward.1} parent=5 // pred_region
      %s167 = ssub.s32 %s10, 1
      %p168 = scmp.lt.s32.totalorder %s15, 1
      %s169 = scalar_select %p168, %s15, 1
      %s170 = smul.addr %s169, 54
      %s171 = smul.addr %s170, 8
      %s172 = scalar_lea.vmem %s0, %s171
      %p173 = pneg %p36
      %p174 = pneg %p33
      %p175 = pneg %p57
      %p176 = pneg %p54
      %p177 = pneg %p78
      %p178 = pneg %p75
      %p179 = pneg %p99
      %p180 = pneg %p96
      %p181 = pneg %p125
      %p182 = pneg %p122
      %p183 = scmp.lt.s32.totalorder %s15, 1
      %s184 = scalar_select %p183, %s15, 1
      %s185 = smul.addr %s184, 64
      %s186 = smul.addr %s185, 8
      %s187 = scalar_lea.vmem %s4, %s186
      %p188 = scmp.lt.s32.totalorder %s15, 1
      %s189 = scalar_select %p188, %s15, 1
      %s190 = smul.addr %s189, 54
      %s191 = smul.addr %s190, 8
      %s192 = scalar_lea.vmem %s0, %s191
      %p193 = scmp.lt.s32.totalorder %s15, 1
      %s194 = scalar_select %p193, %s15, 1
      %s195 = smul.addr %s194, 64
      %s196 = smul.addr %s195, 8
      %s197 = scalar_lea.vmem %s4, %s196
      %v198 = vld [vmem:[%s192] sm:$0xff]
      %v199 = vld [vmem:[%s192 + $0x8] sm:$0xff]
      %v200 = vld [vmem:[%s192 + $0x18] sm:$0xff]
      %v201 = vld [vmem:[%s192 + $0x20] sm:$0xff]
      %v202 = vld [vmem:[%s192 + $0x30] sm:$0xff]
      %v203 = vld [vmem:[%s192 + $0x38] sm:$0xff]
      %v204 = vld [vmem:[%s192 + $0x48] sm:$0xff]
      %v205 = vld [vmem:[%s192 + $0x50] sm:$0xff]
      %v206 = vld [vmem:[%s192 + $0x60] sm:$0xff]
      %v207 = vld [vmem:[%s192 + $0x68] sm:$0xff]
      %v208 = vld [vmem:[%s192 + $0x78] sm:$0xff]
      %v209 = vld [vmem:[%s192 + $0x80] sm:$0xff]
      %v210 = vld [vmem:[%s192 + $0x90] sm:$0xff]
      %v211 = vld [vmem:[%s192 + $0x98] sm:$0xff]
      %v212 = vld [vmem:[%s192 + $0xa8] sm:$0xff]
      %v213 = vld [vmem:[%s192 + $0xb0] sm:$0xff]
      %v214 = vld [vmem:[%s192 + $0xc0] sm:$0xff]
      %v215 = vld [vmem:[%s192 + $0xc8] sm:$0xff]
      %v216 = vld [vmem:[%s192 + $0xd8] sm:$0xff]
      %v217 = vld [vmem:[%s192 + $0xe0] sm:$0xff]
      %v218 = vld [vmem:[%s192 + $0xf0] sm:$0xff]
      %v219 = vld [vmem:[%s192 + $0xf8] sm:$0xff]
      %v220 = vld [vmem:[%s192 + $0x108] sm:$0xff]
      %v221 = vld [vmem:[%s192 + $0x110] sm:$0xff]
      %v222 = vld [vmem:[%s192 + $0x120] sm:$0xff]
      %v223 = vld [vmem:[%s192 + $0x128] sm:$0xff]
      %v224 = vld [vmem:[%s192 + $0x138] sm:$0xff]
      %v225 = vld [vmem:[%s192 + $0x140] sm:$0xff]
      %v226 = vld [vmem:[%s192 + $0x150] sm:$0xff]
      %v227 = vld [vmem:[%s192 + $0x158] sm:$0xff]
      %v228 = vld [vmem:[%s192 + $0x168] sm:$0xff]
      %v229 = vld [vmem:[%s192 + $0x170] sm:$0xff]
      %v230 = vld [vmem:[%s192 + $0x1] sm:$0xff]
      %v231 = vld [vmem:[%s192 + $0x9] sm:$0xff]
      %v232 = vld [vmem:[%s192 + $0x19] sm:$0xff]
      %v233 = vld [vmem:[%s192 + $0x21] sm:$0xff]
      %v234 = vld [vmem:[%s192 + $0x31] sm:$0xff]
      %v235 = vld [vmem:[%s192 + $0x39] sm:$0xff]
      %v236 = vld [vmem:[%s192 + $0x49] sm:$0xff]
      %v237 = vld [vmem:[%s192 + $0x51] sm:$0xff]
      %v238 = vld [vmem:[%s192 + $0x61] sm:$0xff]
      %v239 = vld [vmem:[%s192 + $0x69] sm:$0xff]
      %v240 = vld [vmem:[%s192 + $0x79] sm:$0xff]
      %v241 = vld [vmem:[%s192 + $0x81] sm:$0xff]
      %v242 = vld [vmem:[%s192 + $0x91] sm:$0xff]
      %v243 = vld [vmem:[%s192 + $0x99] sm:$0xff]
      %v244 = vld [vmem:[%s192 + $0xa9] sm:$0xff]
      %v245 = vld [vmem:[%s192 + $0xb1] sm:$0xff]
      %v246 = vld [vmem:[%s192 + $0xc1] sm:$0xff]
      %v247 = vld [vmem:[%s192 + $0xc9] sm:$0xff]
      %v248 = vld [vmem:[%s192 + $0xd9] sm:$0xff]
      %v249 = vld [vmem:[%s192 + $0xe1] sm:$0xff]
      %v250 = vld [vmem:[%s192 + $0xf1] sm:$0xff]
      %v251 = vld [vmem:[%s192 + $0xf9] sm:$0xff]
      %v252 = vld [vmem:[%s192 + $0x109] sm:$0xff]
      %v253 = vld [vmem:[%s192 + $0x111] sm:$0xff]
      %v254 = vld [vmem:[%s192 + $0x121] sm:$0xff]
      %v255 = vld [vmem:[%s192 + $0x129] sm:$0xff]
      %v256 = vld [vmem:[%s192 + $0x139] sm:$0xff]
      %v257 = vld [vmem:[%s192 + $0x141] sm:$0xff]
      %v258 = vld [vmem:[%s192 + $0x151] sm:$0xff]
      %v259 = vld [vmem:[%s192 + $0x159] sm:$0xff]
      %v260 = vld [vmem:[%s192 + $0x169] sm:$0xff]
      %v261 = vld [vmem:[%s192 + $0x171] sm:$0xff]
      %v262 = vld [vmem:[%s192 + $0x2] sm:$0xff]
      %v263 = vld [vmem:[%s192 + $0xa] sm:$0xff]
      %v264 = vld [vmem:[%s192 + $0x1a] sm:$0xff]
      %v265 = vld [vmem:[%s192 + $0x22] sm:$0xff]
      %v266 = vld [vmem:[%s192 + $0x32] sm:$0xff]
      %v267 = vld [vmem:[%s192 + $0x3a] sm:$0xff]
      %v268 = vld [vmem:[%s192 + $0x4a] sm:$0xff]
      %v269 = vld [vmem:[%s192 + $0x52] sm:$0xff]
      %v270 = vld [vmem:[%s192 + $0x62] sm:$0xff]
      %v271 = vld [vmem:[%s192 + $0x6a] sm:$0xff]
      %v272 = vld [vmem:[%s192 + $0x7a] sm:$0xff]
      %v273 = vld [vmem:[%s192 + $0x82] sm:$0xff]
      %v274 = vld [vmem:[%s192 + $0x92] sm:$0xff]
      %v275 = vld [vmem:[%s192 + $0x9a] sm:$0xff]
      %v276 = vld [vmem:[%s192 + $0xaa] sm:$0xff]
      %v277 = vld [vmem:[%s192 + $0xb2] sm:$0xff]
      %v278 = vld [vmem:[%s192 + $0xc2] sm:$0xff]
      %v279 = vld [vmem:[%s192 + $0xca] sm:$0xff]
      %v280 = vld [vmem:[%s192 + $0xda] sm:$0xff]
      %v281 = vld [vmem:[%s192 + $0xe2] sm:$0xff]
      %v282 = vld [vmem:[%s192 + $0xf2] sm:$0xff]
      %v283 = vld [vmem:[%s192 + $0xfa] sm:$0xff]
      %v284 = vld [vmem:[%s192 + $0x10a] sm:$0xff]
      %v285 = vld [vmem:[%s192 + $0x112] sm:$0xff]
      %v286 = vld [vmem:[%s192 + $0x122] sm:$0xff]
      %v287 = vld [vmem:[%s192 + $0x12a] sm:$0xff]
      %v288 = vld [vmem:[%s192 + $0x13a] sm:$0xff]
      %v289 = vld [vmem:[%s192 + $0x142] sm:$0xff]
      %v290 = vld [vmem:[%s192 + $0x152] sm:$0xff]
      %v291 = vld [vmem:[%s192 + $0x15a] sm:$0xff]
      %v292 = vld [vmem:[%s192 + $0x16a] sm:$0xff]
      %v293 = vld [vmem:[%s192 + $0x172] sm:$0xff]
      %s294 = scalar_lea.vmem %s192, 24
      %v295 = vld [vmem:[%s294] sm:$0xff]
      %v296 = vld [vmem:[%s294 + $0x8] sm:$0xff]
      %v297 = vld [vmem:[%s294 + $0x18] sm:$0xff]
      %v298 = vld [vmem:[%s294 + $0x20] sm:$0xff]
      %v299 = vld [vmem:[%s294 + $0x30] sm:$0xff]
      %v300 = vld [vmem:[%s294 + $0x38] sm:$0xff]
      %v301 = vld [vmem:[%s294 + $0x48] sm:$0xff]
      %v302 = vld [vmem:[%s294 + $0x50] sm:$0xff]
      %v303 = vld [vmem:[%s294 + $0x60] sm:$0xff]
      %v304 = vld [vmem:[%s294 + $0x68] sm:$0xff]
      %v305 = vld [vmem:[%s294 + $0x78] sm:$0xff]
      %v306 = vld [vmem:[%s294 + $0x80] sm:$0xff]
      %v307 = vld [vmem:[%s294 + $0x90] sm:$0xff]
      %v308 = vld [vmem:[%s294 + $0x98] sm:$0xff]
      %v309 = vld [vmem:[%s294 + $0xa8] sm:$0xff]
      %v310 = vld [vmem:[%s294 + $0xb0] sm:$0xff]
      %v311 = vld [vmem:[%s294 + $0xc0] sm:$0xff]
      %v312 = vld [vmem:[%s294 + $0xc8] sm:$0xff]
      %v313 = vld [vmem:[%s294 + $0xd8] sm:$0xff]
      %v314 = vld [vmem:[%s294 + $0xe0] sm:$0xff]
      %v315 = vld [vmem:[%s294 + $0xf0] sm:$0xff]
      %v316 = vld [vmem:[%s294 + $0xf8] sm:$0xff]
      %v317 = vld [vmem:[%s294 + $0x108] sm:$0xff]
      %v318 = vld [vmem:[%s294 + $0x110] sm:$0xff]
      %v319 = vld [vmem:[%s294 + $0x120] sm:$0xff]
      %v320 = vld [vmem:[%s294 + $0x128] sm:$0xff]
      %v321 = vld [vmem:[%s294 + $0x138] sm:$0xff]
      %v322 = vld [vmem:[%s294 + $0x140] sm:$0xff]
      %v323 = vld [vmem:[%s294 + $0x150] sm:$0xff]
      %v324 = vld [vmem:[%s294 + $0x158] sm:$0xff]
      %v325 = vld [vmem:[%s294 + $0x168] sm:$0xff]
      %v326 = vld [vmem:[%s294 + $0x170] sm:$0xff]
      %v327 = vld [vmem:[%s294 + $0x1] sm:$0xff]
      %v328 = vld [vmem:[%s294 + $0x9] sm:$0xff]
      %v329 = vld [vmem:[%s294 + $0x19] sm:$0xff]
      %v330 = vld [vmem:[%s294 + $0x21] sm:$0xff]
      %v331 = vld [vmem:[%s294 + $0x31] sm:$0xff]
      %v332 = vld [vmem:[%s294 + $0x39] sm:$0xff]
      %v333 = vld [vmem:[%s294 + $0x49] sm:$0xff]
      %v334 = vld [vmem:[%s294 + $0x51] sm:$0xff]
      %v335 = vld [vmem:[%s294 + $0x61] sm:$0xff]
      %v336 = vld [vmem:[%s294 + $0x69] sm:$0xff]
      %v337 = vld [vmem:[%s294 + $0x79] sm:$0xff]
      %v338 = vld [vmem:[%s294 + $0x81] sm:$0xff]
      %v339 = vld [vmem:[%s294 + $0x91] sm:$0xff]
      %v340 = vld [vmem:[%s294 + $0x99] sm:$0xff]
      %v341 = vld [vmem:[%s294 + $0xa9] sm:$0xff]
      %v342 = vld [vmem:[%s294 + $0xb1] sm:$0xff]
      %v343 = vld [vmem:[%s294 + $0xc1] sm:$0xff]
      %v344 = vld [vmem:[%s294 + $0xc9] sm:$0xff]
      %v345 = vld [vmem:[%s294 + $0xd9] sm:$0xff]
      %v346 = vld [vmem:[%s294 + $0xe1] sm:$0xff]
      %v347 = vld [vmem:[%s294 + $0xf1] sm:$0xff]
      %v348 = vld [vmem:[%s294 + $0xf9] sm:$0xff]
      %v349 = vld [vmem:[%s294 + $0x109] sm:$0xff]
      %v350 = vld [vmem:[%s294 + $0x111] sm:$0xff]
      %v351 = vld [vmem:[%s294 + $0x121] sm:$0xff]
      %v352 = vld [vmem:[%s294 + $0x129] sm:$0xff]
      %v353 = vld [vmem:[%s294 + $0x139] sm:$0xff]
      %v354 = vld [vmem:[%s294 + $0x141] sm:$0xff]
      %v355 = vld [vmem:[%s294 + $0x151] sm:$0xff]
      %v356 = vld [vmem:[%s294 + $0x159] sm:$0xff]
      %v357 = vld [vmem:[%s294 + $0x169] sm:$0xff]
      %v358 = vld [vmem:[%s294 + $0x171] sm:$0xff]
      %v359 = vld [vmem:[%s294 + $0x2] sm:$0xff]
      %v360 = vld [vmem:[%s294 + $0xa] sm:$0xff]
      %v361 = vld [vmem:[%s294 + $0x1a] sm:$0xff]
      %v362 = vld [vmem:[%s294 + $0x22] sm:$0xff]
      %v363 = vld [vmem:[%s294 + $0x32] sm:$0xff]
      %v364 = vld [vmem:[%s294 + $0x3a] sm:$0xff]
      %v365 = vld [vmem:[%s294 + $0x4a] sm:$0xff]
      %v366 = vld [vmem:[%s294 + $0x52] sm:$0xff]
      %v367 = vld [vmem:[%s294 + $0x62] sm:$0xff]
      %v368 = vld [vmem:[%s294 + $0x6a] sm:$0xff]
      %v369 = vld [vmem:[%s294 + $0x7a] sm:$0xff]
      %v370 = vld [vmem:[%s294 + $0x82] sm:$0xff]
      %v371 = vld [vmem:[%s294 + $0x92] sm:$0xff]
      %v372 = vld [vmem:[%s294 + $0x9a] sm:$0xff]
      %v373 = vld [vmem:[%s294 + $0xaa] sm:$0xff]
      %v374 = vld [vmem:[%s294 + $0xb2] sm:$0xff]
      %v375 = vld [vmem:[%s294 + $0xc2] sm:$0xff]
      %v376 = vld [vmem:[%s294 + $0xca] sm:$0xff]
      %v377 = vld [vmem:[%s294 + $0xda] sm:$0xff]
      %v378 = vld [vmem:[%s294 + $0xe2] sm:$0xff]
      %v379 = vld [vmem:[%s294 + $0xf2] sm:$0xff]
      %v380 = vld [vmem:[%s294 + $0xfa] sm:$0xff]
      %v381 = vld [vmem:[%s294 + $0x10a] sm:$0xff]
      %v382 = vld [vmem:[%s294 + $0x112] sm:$0xff]
      %v383 = vld [vmem:[%s294 + $0x122] sm:$0xff]
      %v384 = vld [vmem:[%s294 + $0x12a] sm:$0xff]
      %v385 = vld [vmem:[%s294 + $0x13a] sm:$0xff]
      %v386 = vld [vmem:[%s294 + $0x142] sm:$0xff]
      %v387 = vld [vmem:[%s294 + $0x152] sm:$0xff]
      %v388 = vld [vmem:[%s294 + $0x15a] sm:$0xff]
      %v389 = vld [vmem:[%s294 + $0x16a] sm:$0xff]
      %v390 = vld [vmem:[%s294 + $0x172] sm:$0xff]
      %s391 = scalar_lea.vmem %s192, 48
      %v392 = vld [vmem:[%s391] sm:$0xff]
      %v393 = vld [vmem:[%s391 + $0x8] sm:$0xff]
      %v394 = vld [vmem:[%s391 + $0x18] sm:$0xff]
      %v395 = vld [vmem:[%s391 + $0x20] sm:$0xff]
      %v396 = vld [vmem:[%s391 + $0x30] sm:$0xff]
      %v397 = vld [vmem:[%s391 + $0x38] sm:$0xff]
      %v398 = vld [vmem:[%s391 + $0x48] sm:$0xff]
      %v399 = vld [vmem:[%s391 + $0x50] sm:$0xff]
      %v400 = vld [vmem:[%s391 + $0x60] sm:$0xff]
      %v401 = vld [vmem:[%s391 + $0x68] sm:$0xff]
      %v402 = vld [vmem:[%s391 + $0x78] sm:$0xff]
      %v403 = vld [vmem:[%s391 + $0x80] sm:$0xff]
      %v404 = vld [vmem:[%s391 + $0x90] sm:$0xff]
      %v405 = vld [vmem:[%s391 + $0x98] sm:$0xff]
      %v406 = vld [vmem:[%s391 + $0xa8] sm:$0xff]
      %v407 = vld [vmem:[%s391 + $0xb0] sm:$0xff]
      %v408 = vld [vmem:[%s391 + $0xc0] sm:$0xff]
      %v409 = vld [vmem:[%s391 + $0xc8] sm:$0xff]
      %v410 = vld [vmem:[%s391 + $0xd8] sm:$0xff]
      %v411 = vld [vmem:[%s391 + $0xe0] sm:$0xff]
      %v412 = vld [vmem:[%s391 + $0xf0] sm:$0xff]
      %v413 = vld [vmem:[%s391 + $0xf8] sm:$0xff]
      %v414 = vld [vmem:[%s391 + $0x108] sm:$0xff]
      %v415 = vld [vmem:[%s391 + $0x110] sm:$0xff]
      %v416 = vld [vmem:[%s391 + $0x120] sm:$0xff]
      %v417 = vld [vmem:[%s391 + $0x128] sm:$0xff]
      %v418 = vld [vmem:[%s391 + $0x138] sm:$0xff]
      %v419 = vld [vmem:[%s391 + $0x140] sm:$0xff]
      %v420 = vld [vmem:[%s391 + $0x150] sm:$0xff]
      %v421 = vld [vmem:[%s391 + $0x158] sm:$0xff]
      %v422 = vld [vmem:[%s391 + $0x168] sm:$0xff]
      %v423 = vld [vmem:[%s391 + $0x170] sm:$0xff]
      %v424 = vld [vmem:[%s391 + $0x1] sm:$0xff]
      %v425 = vld [vmem:[%s391 + $0x9] sm:$0xff]
      %v426 = vld [vmem:[%s391 + $0x19] sm:$0xff]
      %v427 = vld [vmem:[%s391 + $0x21] sm:$0xff]
      %v428 = vld [vmem:[%s391 + $0x31] sm:$0xff]
      %v429 = vld [vmem:[%s391 + $0x39] sm:$0xff]
      %v430 = vld [vmem:[%s391 + $0x49] sm:$0xff]
      %v431 = vld [vmem:[%s391 + $0x51] sm:$0xff]
      %v432 = vld [vmem:[%s391 + $0x61] sm:$0xff]
      %v433 = vld [vmem:[%s391 + $0x69] sm:$0xff]
      %v434 = vld [vmem:[%s391 + $0x79] sm:$0xff]
      %v435 = vld [vmem:[%s391 + $0x81] sm:$0xff]
      %v436 = vld [vmem:[%s391 + $0x91] sm:$0xff]
      %v437 = vld [vmem:[%s391 + $0x99] sm:$0xff]
      %v438 = vld [vmem:[%s391 + $0xa9] sm:$0xff]
      %v439 = vld [vmem:[%s391 + $0xb1] sm:$0xff]
      %v440 = vld [vmem:[%s391 + $0xc1] sm:$0xff]
      %v441 = vld [vmem:[%s391 + $0xc9] sm:$0xff]
      %v442 = vld [vmem:[%s391 + $0xd9] sm:$0xff]
      %v443 = vld [vmem:[%s391 + $0xe1] sm:$0xff]
      %v444 = vld [vmem:[%s391 + $0xf1] sm:$0xff]
      %v445 = vld [vmem:[%s391 + $0xf9] sm:$0xff]
      %v446 = vld [vmem:[%s391 + $0x109] sm:$0xff]
      %v447 = vld [vmem:[%s391 + $0x111] sm:$0xff]
      %v448 = vld [vmem:[%s391 + $0x121] sm:$0xff]
      %v449 = vld [vmem:[%s391 + $0x129] sm:$0xff]
      %v450 = vld [vmem:[%s391 + $0x139] sm:$0xff]
      %v451 = vld [vmem:[%s391 + $0x141] sm:$0xff]
      %v452 = vld [vmem:[%s391 + $0x151] sm:$0xff]
      %v453 = vld [vmem:[%s391 + $0x159] sm:$0xff]
      %v454 = vld [vmem:[%s391 + $0x169] sm:$0xff]
      %v455 = vld [vmem:[%s391 + $0x171] sm:$0xff]
      %v456 = vld [vmem:[%s391 + $0x2] sm:$0xff]
      %v457 = vld [vmem:[%s391 + $0xa] sm:$0xff]
      %v458 = vld [vmem:[%s391 + $0x1a] sm:$0xff]
      %v459 = vld [vmem:[%s391 + $0x22] sm:$0xff]
      %v460 = vld [vmem:[%s391 + $0x32] sm:$0xff]
      %v461 = vld [vmem:[%s391 + $0x3a] sm:$0xff]
      %v462 = vld [vmem:[%s391 + $0x4a] sm:$0xff]
      %v463 = vld [vmem:[%s391 + $0x52] sm:$0xff]
      %v464 = vld [vmem:[%s391 + $0x62] sm:$0xff]
      %v465 = vld [vmem:[%s391 + $0x6a] sm:$0xff]
      %v466 = vld [vmem:[%s391 + $0x7a] sm:$0xff]
      %v467 = vld [vmem:[%s391 + $0x82] sm:$0xff]
      %v468 = vld [vmem:[%s391 + $0x92] sm:$0xff]
      %v469 = vld [vmem:[%s391 + $0x9a] sm:$0xff]
      %v470 = vld [vmem:[%s391 + $0xaa] sm:$0xff]
      %v471 = vld [vmem:[%s391 + $0xb2] sm:$0xff]
      %v472 = vld [vmem:[%s391 + $0xc2] sm:$0xff]
      %v473 = vld [vmem:[%s391 + $0xca] sm:$0xff]
      %v474 = vld [vmem:[%s391 + $0xda] sm:$0xff]
      %v475 = vld [vmem:[%s391 + $0xe2] sm:$0xff]
      %v476 = vld [vmem:[%s391 + $0xf2] sm:$0xff]
      %v477 = vld [vmem:[%s391 + $0xfa] sm:$0xff]
      %v478 = vld [vmem:[%s391 + $0x10a] sm:$0xff]
      %v479 = vld [vmem:[%s391 + $0x112] sm:$0xff]
      %v480 = vld [vmem:[%s391 + $0x122] sm:$0xff]
      %v481 = vld [vmem:[%s391 + $0x12a] sm:$0xff]
      %v482 = vld [vmem:[%s391 + $0x13a] sm:$0xff]
      %v483 = vld [vmem:[%s391 + $0x142] sm:$0xff]
      %v484 = vld [vmem:[%s391 + $0x152] sm:$0xff]
      %v485 = vld [vmem:[%s391 + $0x15a] sm:$0xff]
      %v486 = vld [vmem:[%s391 + $0x16a] sm:$0xff]
      %v487 = vld [vmem:[%s391 + $0x172] sm:$0xff]
      %v488 = vld [vmem:[%s2] sm:$0x1]
      %v489 = vld [vmem:[%s3] sm:$0x1]
      %v490 = vld [vmem:[%s1] sm:$0xf]
      %s491 = scalar_lea.vmem %s1, 4
      %v492 = vld [vmem:[%s491] sm:$0xf]
      %vm493 = vcmask 31744
      %v495 = vsel %vm493, %v230, 0
      %v498 = vsel %vm493, %v231, 0
      %v501 = vsel %vm493, %v232, 0
      %v504 = vsel %vm493, %v233, 0
      %v507 = vsel %vm493, %v234, 0
      %v510 = vsel %vm493, %v235, 0
      %v513 = vsel %vm493, %v236, 0
      %v516 = vsel %vm493, %v237, 0
      %v519 = vsel %vm493, %v238, 0
      %v522 = vsel %vm493, %v239, 0
      %v525 = vsel %vm493, %v240, 0
      %v528 = vsel %vm493, %v241, 0
      %v531 = vsel %vm493, %v242, 0
      %v534 = vsel %vm493, %v243, 0
      %v537 = vsel %vm493, %v244, 0
      %v540 = vsel %vm493, %v245, 0
      %v543 = vsel %vm493, %v246, 0
      %v546 = vsel %vm493, %v247, 0
      %v549 = vsel %vm493, %v248, 0
      %v552 = vsel %vm493, %v249, 0
      %v555 = vsel %vm493, %v250, 0
      %v558 = vsel %vm493, %v251, 0
      %v561 = vsel %vm493, %v252, 0
      %v564 = vsel %vm493, %v253, 0
      %v567 = vsel %vm493, %v254, 0
      %v570 = vsel %vm493, %v255, 0
      %v573 = vsel %vm493, %v256, 0
      %v576 = vsel %vm493, %v257, 0
      %v579 = vsel %vm493, %v258, 0
      %v582 = vsel %vm493, %v259, 0
      %v585 = vsel %vm493, %v260, 0
      %v588 = vsel %vm493, %v261, 0
      %vm590 = vcmask 1043456
      %v592 = vsel %vm590, %v492, 0
      %594 = vmatpush.msra.mxu0 0.0
      %595 = vmatpush.msra.mxu0 0.0
      %596 = vmatpush.msra.mxu0 0.0
      %597 = vmatpush.msra.mxu0 0.0
      %598 = vmatpush.msra.mxu0 0.0
      %599 = vmatpush.msra.mxu0 0.0
      %600 = vmatpush.msra.mxu0 0.0
      %601 = vmatpush.msra.mxu0 0.0
      %602 = vmatpush.msra.mxu0 0.0
      %603 = vmatpush.msra.mxu0 0.0
      %604 = vmatpush.msra.mxu0 0.0
      %605 = vmatpush.msra.mxu0 0.0
      %606 = vmatpush.msra.mxu0 0.0
      %607 = vmatpush.msra.mxu0 0.0
      %608 = vmatpush.msra.mxu0 0.0
      %609 = vmatpush.msra.mxu0 %v592
      %610 = vmatmul.f32.gmra.mxu0 %v495
      %v611 = vpop.f32.mrf.mxu0
      %v612 = vadd.f32 0.0, %v611
      %613 = vmatmul.f32.gmra.mxu0 %v498
      %v614 = vpop.f32.mrf.mxu0
      %v615 = vadd.f32 0.0, %v614
      %616 = vmatmul.f32.gmra.mxu0 %v501
      %v617 = vpop.f32.mrf.mxu0
      %v618 = vadd.f32 0.0, %v617
      %619 = vmatmul.f32.gmra.mxu0 %v504
      %v620 = vpop.f32.mrf.mxu0
      %v621 = vadd.f32 0.0, %v620
      %622 = vmatmul.f32.gmra.mxu0 %v507
      %v623 = vpop.f32.mrf.mxu0
      %v624 = vadd.f32 0.0, %v623
      %625 = vmatmul.f32.gmra.mxu0 %v510
      %v626 = vpop.f32.mrf.mxu0
      %v627 = vadd.f32 0.0, %v626
      %628 = vmatmul.f32.gmra.mxu0 %v513
      %v629 = vpop.f32.mrf.mxu0
      %v630 = vadd.f32 0.0, %v629
      %631 = vmatmul.f32.gmra.mxu0 %v516
      %v632 = vpop.f32.mrf.mxu0
      %v633 = vadd.f32 0.0, %v632
      %634 = vmatmul.f32.gmra.mxu0 %v519
      %v635 = vpop.f32.mrf.mxu0
      %v636 = vadd.f32 0.0, %v635
      %637 = vmatmul.f32.gmra.mxu0 %v522
      %v638 = vpop.f32.mrf.mxu0
      %v639 = vadd.f32 0.0, %v638
      %640 = vmatmul.f32.gmra.mxu0 %v525
      %v641 = vpop.f32.mrf.mxu0
      %v642 = vadd.f32 0.0, %v641
      %643 = vmatmul.f32.gmra.mxu0 %v528
      %v644 = vpop.f32.mrf.mxu0
      %v645 = vadd.f32 0.0, %v644
      %646 = vmatmul.f32.gmra.mxu0 %v531
      %v647 = vpop.f32.mrf.mxu0
      %v648 = vadd.f32 0.0, %v647
      %649 = vmatmul.f32.gmra.mxu0 %v534
      %v650 = vpop.f32.mrf.mxu0
      %v651 = vadd.f32 0.0, %v650
      %652 = vmatmul.f32.gmra.mxu0 %v537
      %v653 = vpop.f32.mrf.mxu0
      %v654 = vadd.f32 0.0, %v653
      %655 = vmatmul.f32.gmra.mxu0 %v540
      %v656 = vpop.f32.mrf.mxu0
      %v657 = vadd.f32 0.0, %v656
      %658 = vmatmul.f32.gmra.mxu0 %v543
      %v659 = vpop.f32.mrf.mxu0
      %v660 = vadd.f32 0.0, %v659
      %661 = vmatmul.f32.gmra.mxu0 %v546
      %v662 = vpop.f32.mrf.mxu0
      %v663 = vadd.f32 0.0, %v662
      %664 = vmatmul.f32.gmra.mxu0 %v549
      %v665 = vpop.f32.mrf.mxu0
      %v666 = vadd.f32 0.0, %v665
      %667 = vmatmul.f32.gmra.mxu0 %v552
      %v668 = vpop.f32.mrf.mxu0
      %v669 = vadd.f32 0.0, %v668
      %670 = vmatmul.f32.gmra.mxu0 %v555
      %v671 = vpop.f32.mrf.mxu0
      %v672 = vadd.f32 0.0, %v671
      %673 = vmatmul.f32.gmra.mxu0 %v558
      %v674 = vpop.f32.mrf.mxu0
      %v675 = vadd.f32 0.0, %v674
      %676 = vmatmul.f32.gmra.mxu0 %v561
      %v677 = vpop.f32.mrf.mxu0
      %v678 = vadd.f32 0.0, %v677
      %679 = vmatmul.f32.gmra.mxu0 %v564
      %v680 = vpop.f32.mrf.mxu0
      %v681 = vadd.f32 0.0, %v680
      %682 = vmatmul.f32.gmra.mxu0 %v567
      %v683 = vpop.f32.mrf.mxu0
      %v684 = vadd.f32 0.0, %v683
      %685 = vmatmul.f32.gmra.mxu0 %v570
      %v686 = vpop.f32.mrf.mxu0
      %v687 = vadd.f32 0.0, %v686
      %688 = vmatmul.f32.gmra.mxu0 %v573
      %v689 = vpop.f32.mrf.mxu0
      %v690 = vadd.f32 0.0, %v689
      %691 = vmatmul.f32.gmra.mxu0 %v576
      %v692 = vpop.f32.mrf.mxu0
      %v693 = vadd.f32 0.0, %v692
      %694 = vmatmul.f32.gmra.mxu0 %v579
      %v695 = vpop.f32.mrf.mxu0
      %v696 = vadd.f32 0.0, %v695
      %697 = vmatmul.f32.gmra.mxu0 %v582
      %v698 = vpop.f32.mrf.mxu0
      %v699 = vadd.f32 0.0, %v698
      %700 = vmatmul.f32.gmra.mxu0 %v585
      %v701 = vpop.f32.mrf.mxu0
      %v702 = vadd.f32 0.0, %v701
      %703 = vmatmul.f32.gmra.mxu0 %v588
      %v704 = vpop.f32.mrf.mxu0
      %v705 = vadd.f32 0.0, %v704
      %706 = vdwg.mxu0
      %v708 = vsel %vm493, %v198, 0
      %v711 = vsel %vm493, %v199, 0
      %v714 = vsel %vm493, %v200, 0
      %v717 = vsel %vm493, %v201, 0
      %v720 = vsel %vm493, %v202, 0
      %v723 = vsel %vm493, %v203, 0
      %v726 = vsel %vm493, %v204, 0
      %v729 = vsel %vm493, %v205, 0
      %v732 = vsel %vm493, %v206, 0
      %v735 = vsel %vm493, %v207, 0
      %v738 = vsel %vm493, %v208, 0
      %v741 = vsel %vm493, %v209, 0
      %v744 = vsel %vm493, %v210, 0
      %v747 = vsel %vm493, %v211, 0
      %v750 = vsel %vm493, %v212, 0
      %v753 = vsel %vm493, %v213, 0
      %v756 = vsel %vm493, %v214, 0
      %v759 = vsel %vm493, %v215, 0
      %v762 = vsel %vm493, %v216, 0
      %v765 = vsel %vm493, %v217, 0
      %v768 = vsel %vm493, %v218, 0
      %v771 = vsel %vm493, %v219, 0
      %v774 = vsel %vm493, %v220, 0
      %v777 = vsel %vm493, %v221, 0
      %v780 = vsel %vm493, %v222, 0
      %v783 = vsel %vm493, %v223, 0
      %v786 = vsel %vm493, %v224, 0
      %v789 = vsel %vm493, %v225, 0
      %v792 = vsel %vm493, %v226, 0
      %v795 = vsel %vm493, %v227, 0
      %v798 = vsel %vm493, %v228, 0
      %v801 = vsel %vm493, %v229, 0
      %v804 = vsel %vm590, %v490, 0
      %806 = vmatpush.msra.mxu0 0.0
      %807 = vmatpush.msra.mxu0 0.0
      %808 = vmatpush.msra.mxu0 0.0
      %809 = vmatpush.msra.mxu0 0.0
      %810 = vmatpush.msra.mxu0 0.0
      %811 = vmatpush.msra.mxu0 0.0
      %812 = vmatpush.msra.mxu0 0.0
      %813 = vmatpush.msra.mxu0 0.0
      %814 = vmatpush.msra.mxu0 0.0
      %815 = vmatpush.msra.mxu0 0.0
      %816 = vmatpush.msra.mxu0 0.0
      %817 = vmatpush.msra.mxu0 0.0
      %818 = vmatpush.msra.mxu0 0.0
      %819 = vmatpush.msra.mxu0 0.0
      %820 = vmatpush.msra.mxu0 0.0
      %821 = vmatpush.msra.mxu0 %v804
      %822 = vmatmul.f32.gmra.mxu0 %v708
      %v823 = vpop.f32.mrf.mxu0
      %v824 = vadd.f32 %v612, %v823
      %825 = vmatmul.f32.gmra.mxu0 %v711
      %v826 = vpop.f32.mrf.mxu0
      %v827 = vadd.f32 %v615, %v826
      %828 = vmatmul.f32.gmra.mxu0 %v714
      %v829 = vpop.f32.mrf.mxu0
      %v830 = vadd.f32 %v618, %v829
      %831 = vmatmul.f32.gmra.mxu0 %v717
      %v832 = vpop.f32.mrf.mxu0
      %v833 = vadd.f32 %v621, %v832
      %834 = vmatmul.f32.gmra.mxu0 %v720
      %v835 = vpop.f32.mrf.mxu0
      %v836 = vadd.f32 %v624, %v835
      %837 = vmatmul.f32.gmra.mxu0 %v723
      %v838 = vpop.f32.mrf.mxu0
      %v839 = vadd.f32 %v627, %v838
      %840 = vmatmul.f32.gmra.mxu0 %v726
      %v841 = vpop.f32.mrf.mxu0
      %v842 = vadd.f32 %v630, %v841
      %843 = vmatmul.f32.gmra.mxu0 %v729
      %v844 = vpop.f32.mrf.mxu0
      %v845 = vadd.f32 %v633, %v844
      %846 = vmatmul.f32.gmra.mxu0 %v732
      %v847 = vpop.f32.mrf.mxu0
      %v848 = vadd.f32 %v636, %v847
      %849 = vmatmul.f32.gmra.mxu0 %v735
      %v850 = vpop.f32.mrf.mxu0
      %v851 = vadd.f32 %v639, %v850
      %852 = vmatmul.f32.gmra.mxu0 %v738
      %v853 = vpop.f32.mrf.mxu0
      %v854 = vadd.f32 %v642, %v853
      %855 = vmatmul.f32.gmra.mxu0 %v741
      %v856 = vpop.f32.mrf.mxu0
      %v857 = vadd.f32 %v645, %v856
      %858 = vmatmul.f32.gmra.mxu0 %v744
      %v859 = vpop.f32.mrf.mxu0
      %v860 = vadd.f32 %v648, %v859
      %861 = vmatmul.f32.gmra.mxu0 %v747
      %v862 = vpop.f32.mrf.mxu0
      %v863 = vadd.f32 %v651, %v862
      %864 = vmatmul.f32.gmra.mxu0 %v750
      %v865 = vpop.f32.mrf.mxu0
      %v866 = vadd.f32 %v654, %v865
      %867 = vmatmul.f32.gmra.mxu0 %v753
      %v868 = vpop.f32.mrf.mxu0
      %v869 = vadd.f32 %v657, %v868
      %870 = vmatmul.f32.gmra.mxu0 %v756
      %v871 = vpop.f32.mrf.mxu0
      %v872 = vadd.f32 %v660, %v871
      %873 = vmatmul.f32.gmra.mxu0 %v759
      %v874 = vpop.f32.mrf.mxu0
      %v875 = vadd.f32 %v663, %v874
      %876 = vmatmul.f32.gmra.mxu0 %v762
      %v877 = vpop.f32.mrf.mxu0
      %v878 = vadd.f32 %v666, %v877
      %879 = vmatmul.f32.gmra.mxu0 %v765
      %v880 = vpop.f32.mrf.mxu0
      %v881 = vadd.f32 %v669, %v880
      %882 = vmatmul.f32.gmra.mxu0 %v768
      %v883 = vpop.f32.mrf.mxu0
      %v884 = vadd.f32 %v672, %v883
      %885 = vmatmul.f32.gmra.mxu0 %v771
      %v886 = vpop.f32.mrf.mxu0
      %v887 = vadd.f32 %v675, %v886
      %888 = vmatmul.f32.gmra.mxu0 %v774
      %v889 = vpop.f32.mrf.mxu0
      %v890 = vadd.f32 %v678, %v889
      %891 = vmatmul.f32.gmra.mxu0 %v777
      %v892 = vpop.f32.mrf.mxu0
      %v893 = vadd.f32 %v681, %v892
      %894 = vmatmul.f32.gmra.mxu0 %v780
      %v895 = vpop.f32.mrf.mxu0
      %v896 = vadd.f32 %v684, %v895
      %897 = vmatmul.f32.gmra.mxu0 %v783
      %v898 = vpop.f32.mrf.mxu0
      %v899 = vadd.f32 %v687, %v898
      %900 = vmatmul.f32.gmra.mxu0 %v786
      %v901 = vpop.f32.mrf.mxu0
      %v902 = vadd.f32 %v690, %v901
      %903 = vmatmul.f32.gmra.mxu0 %v789
      %v904 = vpop.f32.mrf.mxu0
      %v905 = vadd.f32 %v693, %v904
      %906 = vmatmul.f32.gmra.mxu0 %v792
      %v907 = vpop.f32.mrf.mxu0
      %v908 = vadd.f32 %v696, %v907
      %909 = vmatmul.f32.gmra.mxu0 %v795
      %v910 = vpop.f32.mrf.mxu0
      %v911 = vadd.f32 %v699, %v910
      %912 = vmatmul.f32.gmra.mxu0 %v798
      %v913 = vpop.f32.mrf.mxu0
      %v914 = vadd.f32 %v702, %v913
      %915 = vmatmul.f32.gmra.mxu0 %v801
      %v916 = vpop.f32.mrf.mxu0
      %v917 = vadd.f32 %v705, %v916
      %918 = vdwg.mxu0
      %s919 = scalar_lea.vmem %s1, 8
      %v920 = vld [vmem:[%s919] sm:$0xf]
      %v922 = vsel %vm493, %v295, 0
      %v925 = vsel %vm493, %v296, 0
      %v928 = vsel %vm493, %v297, 0
      %v931 = vsel %vm493, %v298, 0
      %v934 = vsel %vm493, %v299, 0
      %v937 = vsel %vm493, %v300, 0
      %v940 = vsel %vm493, %v301, 0
      %v943 = vsel %vm493, %v302, 0
      %v946 = vsel %vm493, %v303, 0
      %v949 = vsel %vm493, %v304, 0
      %v952 = vsel %vm493, %v305, 0
      %v955 = vsel %vm493, %v306, 0
      %v958 = vsel %vm493, %v307, 0
      %v961 = vsel %vm493, %v308, 0
      %v964 = vsel %vm493, %v309, 0
      %v967 = vsel %vm493, %v310, 0
      %v970 = vsel %vm493, %v311, 0
      %v973 = vsel %vm493, %v312, 0
      %v976 = vsel %vm493, %v313, 0
      %v979 = vsel %vm493, %v314, 0
      %v982 = vsel %vm493, %v315, 0
      %v985 = vsel %vm493, %v316, 0
      %v988 = vsel %vm493, %v317, 0
      %v991 = vsel %vm493, %v318, 0
      %v994 = vsel %vm493, %v319, 0
      %v997 = vsel %vm493, %v320, 0
      %v1000 = vsel %vm493, %v321, 0
      %v1003 = vsel %vm493, %v322, 0
      %v1006 = vsel %vm493, %v323, 0
      %v1009 = vsel %vm493, %v324, 0
      %v1012 = vsel %vm493, %v325, 0
      %v1015 = vsel %vm493, %v326, 0
      %v1018 = vsel %vm590, %v920, 0
      %1020 = vmatpush.msra.mxu0 0.0
      %1021 = vmatpush.msra.mxu0 0.0
      %1022 = vmatpush.msra.mxu0 0.0
      %1023 = vmatpush.msra.mxu0 0.0
      %1024 = vmatpush.msra.mxu0 0.0
      %1025 = vmatpush.msra.mxu0 0.0
      %1026 = vmatpush.msra.mxu0 0.0
      %1027 = vmatpush.msra.mxu0 0.0
      %1028 = vmatpush.msra.mxu0 0.0
      %1029 = vmatpush.msra.mxu0 0.0
      %1030 = vmatpush.msra.mxu0 0.0
      %1031 = vmatpush.msra.mxu0 0.0
      %1032 = vmatpush.msra.mxu0 0.0
      %1033 = vmatpush.msra.mxu0 0.0
      %1034 = vmatpush.msra.mxu0 0.0
      %1035 = vmatpush.msra.mxu0 %v1018
      %1036 = vmatmul.f32.gmra.mxu0 %v922
      %v1037 = vpop.f32.mrf.mxu0
      %v1038 = vadd.f32 0.0, %v1037
      %1039 = vmatmul.f32.gmra.mxu0 %v925
      %v1040 = vpop.f32.mrf.mxu0
      %v1041 = vadd.f32 0.0, %v1040
      %1042 = vmatmul.f32.gmra.mxu0 %v928
      %v1043 = vpop.f32.mrf.mxu0
      %v1044 = vadd.f32 0.0, %v1043
      %1045 = vmatmul.f32.gmra.mxu0 %v931
      %v1046 = vpop.f32.mrf.mxu0
      %v1047 = vadd.f32 0.0, %v1046
      %1048 = vmatmul.f32.gmra.mxu0 %v934
      %v1049 = vpop.f32.mrf.mxu0
      %v1050 = vadd.f32 0.0, %v1049
      %1051 = vmatmul.f32.gmra.mxu0 %v937
      %v1052 = vpop.f32.mrf.mxu0
      %v1053 = vadd.f32 0.0, %v1052
      %1054 = vmatmul.f32.gmra.mxu0 %v940
      %v1055 = vpop.f32.mrf.mxu0
      %v1056 = vadd.f32 0.0, %v1055
      %1057 = vmatmul.f32.gmra.mxu0 %v943
      %v1058 = vpop.f32.mrf.mxu0
      %v1059 = vadd.f32 0.0, %v1058
      %1060 = vmatmul.f32.gmra.mxu0 %v946
      %v1061 = vpop.f32.mrf.mxu0
      %v1062 = vadd.f32 0.0, %v1061
      %1063 = vmatmul.f32.gmra.mxu0 %v949
      %v1064 = vpop.f32.mrf.mxu0
      %v1065 = vadd.f32 0.0, %v1064
      %1066 = vmatmul.f32.gmra.mxu0 %v952
      %v1067 = vpop.f32.mrf.mxu0
      %v1068 = vadd.f32 0.0, %v1067
      %1069 = vmatmul.f32.gmra.mxu0 %v955
      %v1070 = vpop.f32.mrf.mxu0
      %v1071 = vadd.f32 0.0, %v1070
      %1072 = vmatmul.f32.gmra.mxu0 %v958
      %v1073 = vpop.f32.mrf.mxu0
      %v1074 = vadd.f32 0.0, %v1073
      %1075 = vmatmul.f32.gmra.mxu0 %v961
      %v1076 = vpop.f32.mrf.mxu0
      %v1077 = vadd.f32 0.0, %v1076
      %1078 = vmatmul.f32.gmra.mxu0 %v964
      %v1079 = vpop.f32.mrf.mxu0
      %v1080 = vadd.f32 0.0, %v1079
      %1081 = vmatmul.f32.gmra.mxu0 %v967
      %v1082 = vpop.f32.mrf.mxu0
      %v1083 = vadd.f32 0.0, %v1082
      %1084 = vmatmul.f32.gmra.mxu0 %v970
      %v1085 = vpop.f32.mrf.mxu0
      %v1086 = vadd.f32 0.0, %v1085
      %1087 = vmatmul.f32.gmra.mxu0 %v973
      %v1088 = vpop.f32.mrf.mxu0
      %v1089 = vadd.f32 0.0, %v1088
      %1090 = vmatmul.f32.gmra.mxu0 %v976
      %v1091 = vpop.f32.mrf.mxu0
      %v1092 = vadd.f32 0.0, %v1091
      %1093 = vmatmul.f32.gmra.mxu0 %v979
      %v1094 = vpop.f32.mrf.mxu0
      %v1095 = vadd.f32 0.0, %v1094
      %1096 = vmatmul.f32.gmra.mxu0 %v982
      %v1097 = vpop.f32.mrf.mxu0
      %v1098 = vadd.f32 0.0, %v1097
      %1099 = vmatmul.f32.gmra.mxu0 %v985
      %v1100 = vpop.f32.mrf.mxu0
      %v1101 = vadd.f32 0.0, %v1100
      %1102 = vmatmul.f32.gmra.mxu0 %v988
      %v1103 = vpop.f32.mrf.mxu0
      %v1104 = vadd.f32 0.0, %v1103
      %1105 = vmatmul.f32.gmra.mxu0 %v991
      %v1106 = vpop.f32.mrf.mxu0
      %v1107 = vadd.f32 0.0, %v1106
      %1108 = vmatmul.f32.gmra.mxu0 %v994
      %v1109 = vpop.f32.mrf.mxu0
      %v1110 = vadd.f32 0.0, %v1109
      %1111 = vmatmul.f32.gmra.mxu0 %v997
      %v1112 = vpop.f32.mrf.mxu0
      %v1113 = vadd.f32 0.0, %v1112
      %1114 = vmatmul.f32.gmra.mxu0 %v1000
      %v1115 = vpop.f32.mrf.mxu0
      %v1116 = vadd.f32 0.0, %v1115
      %1117 = vmatmul.f32.gmra.mxu0 %v1003
      %v1118 = vpop.f32.mrf.mxu0
      %v1119 = vadd.f32 0.0, %v1118
      %1120 = vmatmul.f32.gmra.mxu0 %v1006
      %v1121 = vpop.f32.mrf.mxu0
      %v1122 = vadd.f32 0.0, %v1121
      %1123 = vmatmul.f32.gmra.mxu0 %v1009
      %v1124 = vpop.f32.mrf.mxu0
      %v1125 = vadd.f32 0.0, %v1124
      %1126 = vmatmul.f32.gmra.mxu0 %v1012
      %v1127 = vpop.f32.mrf.mxu0
      %v1128 = vadd.f32 0.0, %v1127
      %1129 = vmatmul.f32.gmra.mxu0 %v1015
      %v1130 = vpop.f32.mrf.mxu0
      %v1131 = vadd.f32 0.0, %v1130
      %1132 = vdwg.mxu0
      %v1133 = vadd.f32 %v824, %v1038
      %v1134 = vadd.f32 %v827, %v1041
      %v1135 = vadd.f32 %v830, %v1044
      %v1136 = vadd.f32 %v833, %v1047
      %v1137 = vadd.f32 %v836, %v1050
      %v1138 = vadd.f32 %v839, %v1053
      %v1139 = vadd.f32 %v842, %v1056
      %v1140 = vadd.f32 %v845, %v1059
      %v1141 = vadd.f32 %v848, %v1062
      %v1142 = vadd.f32 %v851, %v1065
      %v1143 = vadd.f32 %v854, %v1068
      %v1144 = vadd.f32 %v857, %v1071
      %v1145 = vadd.f32 %v860, %v1074
      %v1146 = vadd.f32 %v863, %v1077
      %v1147 = vadd.f32 %v866, %v1080
      %v1148 = vadd.f32 %v869, %v1083
      %v1149 = vadd.f32 %v872, %v1086
      %v1150 = vadd.f32 %v875, %v1089
      %v1151 = vadd.f32 %v878, %v1092
      %v1152 = vadd.f32 %v881, %v1095
      %v1153 = vadd.f32 %v884, %v1098
      %v1154 = vadd.f32 %v887, %v1101
      %v1155 = vadd.f32 %v890, %v1104
      %v1156 = vadd.f32 %v893, %v1107
      %v1157 = vadd.f32 %v896, %v1110
      %v1158 = vadd.f32 %v899, %v1113
      %v1159 = vadd.f32 %v902, %v1116
      %v1160 = vadd.f32 %v905, %v1119
      %v1161 = vadd.f32 %v908, %v1122
      %v1162 = vadd.f32 %v911, %v1125
      %v1163 = vadd.f32 %v914, %v1128
      %v1164 = vadd.f32 %v917, %v1131
      %s1165 = scalar_lea.vmem %s1, 12
      %v1166 = vld [vmem:[%s1165] sm:$0xf]
      %v1168 = vsel %vm493, %v327, 0
      %v1171 = vsel %vm493, %v328, 0
      %v1174 = vsel %vm493, %v329, 0
      %v1177 = vsel %vm493, %v330, 0
      %v1180 = vsel %vm493, %v331, 0
      %v1183 = vsel %vm493, %v332, 0
      %v1186 = vsel %vm493, %v333, 0
      %v1189 = vsel %vm493, %v334, 0
      %v1192 = vsel %vm493, %v335, 0
      %v1195 = vsel %vm493, %v336, 0
      %v1198 = vsel %vm493, %v337, 0
      %v1201 = vsel %vm493, %v338, 0
      %v1204 = vsel %vm493, %v339, 0
      %v1207 = vsel %vm493, %v340, 0
      %v1210 = vsel %vm493, %v341, 0
      %v1213 = vsel %vm493, %v342, 0
      %v1216 = vsel %vm493, %v343, 0
      %v1219 = vsel %vm493, %v344, 0
      %v1222 = vsel %vm493, %v345, 0
      %v1225 = vsel %vm493, %v346, 0
      %v1228 = vsel %vm493, %v347, 0
      %v1231 = vsel %vm493, %v348, 0
      %v1234 = vsel %vm493, %v349, 0
      %v1237 = vsel %vm493, %v350, 0
      %v1240 = vsel %vm493, %v351, 0
      %v1243 = vsel %vm493, %v352, 0
      %v1246 = vsel %vm493, %v353, 0
      %v1249 = vsel %vm493, %v354, 0
      %v1252 = vsel %vm493, %v355, 0
      %v1255 = vsel %vm493, %v356, 0
      %v1258 = vsel %vm493, %v357, 0
      %v1261 = vsel %vm493, %v358, 0
      %v1264 = vsel %vm590, %v1166, 0
      %1266 = vmatpush.msra.mxu0 0.0
      %1267 = vmatpush.msra.mxu0 0.0
      %1268 = vmatpush.msra.mxu0 0.0
      %1269 = vmatpush.msra.mxu0 0.0
      %1270 = vmatpush.msra.mxu0 0.0
      %1271 = vmatpush.msra.mxu0 0.0
      %1272 = vmatpush.msra.mxu0 0.0
      %1273 = vmatpush.msra.mxu0 0.0
      %1274 = vmatpush.msra.mxu0 0.0
      %1275 = vmatpush.msra.mxu0 0.0
      %1276 = vmatpush.msra.mxu0 0.0
      %1277 = vmatpush.msra.mxu0 0.0
      %1278 = vmatpush.msra.mxu0 0.0
      %1279 = vmatpush.msra.mxu0 0.0
      %1280 = vmatpush.msra.mxu0 0.0
      %1281 = vmatpush.msra.mxu0 %v1264
      %1282 = vmatmul.f32.gmra.mxu0 %v1168
      %v1283 = vpop.f32.mrf.mxu0
      %v1284 = vadd.f32 0.0, %v1283
      %1285 = vmatmul.f32.gmra.mxu0 %v1171
      %v1286 = vpop.f32.mrf.mxu0
      %v1287 = vadd.f32 0.0, %v1286
      %1288 = vmatmul.f32.gmra.mxu0 %v1174
      %v1289 = vpop.f32.mrf.mxu0
      %v1290 = vadd.f32 0.0, %v1289
      %1291 = vmatmul.f32.gmra.mxu0 %v1177
      %v1292 = vpop.f32.mrf.mxu0
      %v1293 = vadd.f32 0.0, %v1292
      %1294 = vmatmul.f32.gmra.mxu0 %v1180
      %v1295 = vpop.f32.mrf.mxu0
      %v1296 = vadd.f32 0.0, %v1295
      %1297 = vmatmul.f32.gmra.mxu0 %v1183
      %v1298 = vpop.f32.mrf.mxu0
      %v1299 = vadd.f32 0.0, %v1298
      %1300 = vmatmul.f32.gmra.mxu0 %v1186
      %v1301 = vpop.f32.mrf.mxu0
      %v1302 = vadd.f32 0.0, %v1301
      %1303 = vmatmul.f32.gmra.mxu0 %v1189
      %v1304 = vpop.f32.mrf.mxu0
      %v1305 = vadd.f32 0.0, %v1304
      %1306 = vmatmul.f32.gmra.mxu0 %v1192
      %v1307 = vpop.f32.mrf.mxu0
      %v1308 = vadd.f32 0.0, %v1307
      %1309 = vmatmul.f32.gmra.mxu0 %v1195
      %v1310 = vpop.f32.mrf.mxu0
      %v1311 = vadd.f32 0.0, %v1310
      %1312 = vmatmul.f32.gmra.mxu0 %v1198
      %v1313 = vpop.f32.mrf.mxu0
      %v1314 = vadd.f32 0.0, %v1313
      %1315 = vmatmul.f32.gmra.mxu0 %v1201
      %v1316 = vpop.f32.mrf.mxu0
      %v1317 = vadd.f32 0.0, %v1316
      %1318 = vmatmul.f32.gmra.mxu0 %v1204
      %v1319 = vpop.f32.mrf.mxu0
      %v1320 = vadd.f32 0.0, %v1319
      %1321 = vmatmul.f32.gmra.mxu0 %v1207
      %v1322 = vpop.f32.mrf.mxu0
      %v1323 = vadd.f32 0.0, %v1322
      %1324 = vmatmul.f32.gmra.mxu0 %v1210
      %v1325 = vpop.f32.mrf.mxu0
      %v1326 = vadd.f32 0.0, %v1325
      %1327 = vmatmul.f32.gmra.mxu0 %v1213
      %v1328 = vpop.f32.mrf.mxu0
      %v1329 = vadd.f32 0.0, %v1328
      %1330 = vmatmul.f32.gmra.mxu0 %v1216
      %v1331 = vpop.f32.mrf.mxu0
      %v1332 = vadd.f32 0.0, %v1331
      %1333 = vmatmul.f32.gmra.mxu0 %v1219
      %v1334 = vpop.f32.mrf.mxu0
      %v1335 = vadd.f32 0.0, %v1334
      %1336 = vmatmul.f32.gmra.mxu0 %v1222
      %v1337 = vpop.f32.mrf.mxu0
      %v1338 = vadd.f32 0.0, %v1337
      %1339 = vmatmul.f32.gmra.mxu0 %v1225
      %v1340 = vpop.f32.mrf.mxu0
      %v1341 = vadd.f32 0.0, %v1340
      %1342 = vmatmul.f32.gmra.mxu0 %v1228
      %v1343 = vpop.f32.mrf.mxu0
      %v1344 = vadd.f32 0.0, %v1343
      %1345 = vmatmul.f32.gmra.mxu0 %v1231
      %v1346 = vpop.f32.mrf.mxu0
      %v1347 = vadd.f32 0.0, %v1346
      %1348 = vmatmul.f32.gmra.mxu0 %v1234
      %v1349 = vpop.f32.mrf.mxu0
      %v1350 = vadd.f32 0.0, %v1349
      %1351 = vmatmul.f32.gmra.mxu0 %v1237
      %v1352 = vpop.f32.mrf.mxu0
      %v1353 = vadd.f32 0.0, %v1352
      %1354 = vmatmul.f32.gmra.mxu0 %v1240
      %v1355 = vpop.f32.mrf.mxu0
      %v1356 = vadd.f32 0.0, %v1355
      %1357 = vmatmul.f32.gmra.mxu0 %v1243
      %v1358 = vpop.f32.mrf.mxu0
      %v1359 = vadd.f32 0.0, %v1358
      %1360 = vmatmul.f32.gmra.mxu0 %v1246
      %v1361 = vpop.f32.mrf.mxu0
      %v1362 = vadd.f32 0.0, %v1361
      %1363 = vmatmul.f32.gmra.mxu0 %v1249
      %v1364 = vpop.f32.mrf.mxu0
      %v1365 = vadd.f32 0.0, %v1364
      %1366 = vmatmul.f32.gmra.mxu0 %v1252
      %v1367 = vpop.f32.mrf.mxu0
      %v1368 = vadd.f32 0.0, %v1367
      %1369 = vmatmul.f32.gmra.mxu0 %v1255
      %v1370 = vpop.f32.mrf.mxu0
      %v1371 = vadd.f32 0.0, %v1370
      %1372 = vmatmul.f32.gmra.mxu0 %v1258
      %v1373 = vpop.f32.mrf.mxu0
      %v1374 = vadd.f32 0.0, %v1373
      %1375 = vmatmul.f32.gmra.mxu0 %v1261
      %v1376 = vpop.f32.mrf.mxu0
      %v1377 = vadd.f32 0.0, %v1376
      %1378 = vdwg.mxu0
      %v1379 = vadd.f32 %v1133, %v1284
      %v1380 = vadd.f32 %v1134, %v1287
      %v1381 = vadd.f32 %v1135, %v1290
      %v1382 = vadd.f32 %v1136, %v1293
      %v1383 = vadd.f32 %v1137, %v1296
      %v1384 = vadd.f32 %v1138, %v1299
      %v1385 = vadd.f32 %v1139, %v1302
      %v1386 = vadd.f32 %v1140, %v1305
      %v1387 = vadd.f32 %v1141, %v1308
      %v1388 = vadd.f32 %v1142, %v1311
      %v1389 = vadd.f32 %v1143, %v1314
      %v1390 = vadd.f32 %v1144, %v1317
      %v1391 = vadd.f32 %v1145, %v1320
      %v1392 = vadd.f32 %v1146, %v1323
      %v1393 = vadd.f32 %v1147, %v1326
      %v1394 = vadd.f32 %v1148, %v1329
      %v1395 = vadd.f32 %v1149, %v1332
      %v1396 = vadd.f32 %v1150, %v1335
      %v1397 = vadd.f32 %v1151, %v1338
      %v1398 = vadd.f32 %v1152, %v1341
      %v1399 = vadd.f32 %v1153, %v1344
      %v1400 = vadd.f32 %v1154, %v1347
      %v1401 = vadd.f32 %v1155, %v1350
      %v1402 = vadd.f32 %v1156, %v1353
      %v1403 = vadd.f32 %v1157, %v1356
      %v1404 = vadd.f32 %v1158, %v1359
      %v1405 = vadd.f32 %v1159, %v1362
      %v1406 = vadd.f32 %v1160, %v1365
      %v1407 = vadd.f32 %v1161, %v1368
      %v1408 = vadd.f32 %v1162, %v1371
      %v1409 = vadd.f32 %v1163, %v1374
      %v1410 = vadd.f32 %v1164, %v1377
      %v1412 = vperm.slane %v488, 0
      %v1414 = vmul.f32 %v1379, %v1412
      %v1415 = vmul.f32 %v1380, %v1412
      %v1416 = vmul.f32 %v1381, %v1412
      %v1417 = vmul.f32 %v1382, %v1412
      %v1418 = vmul.f32 %v1383, %v1412
      %v1419 = vmul.f32 %v1384, %v1412
      %v1420 = vmul.f32 %v1385, %v1412
      %v1421 = vmul.f32 %v1386, %v1412
      %v1422 = vmul.f32 %v1387, %v1412
      %v1423 = vmul.f32 %v1388, %v1412
      %v1424 = vmul.f32 %v1389, %v1412
      %v1425 = vmul.f32 %v1390, %v1412
      %v1426 = vmul.f32 %v1391, %v1412
      %v1427 = vmul.f32 %v1392, %v1412
      %v1428 = vmul.f32 %v1393, %v1412
      %v1429 = vmul.f32 %v1394, %v1412
      %v1430 = vmul.f32 %v1395, %v1412
      %v1431 = vmul.f32 %v1396, %v1412
      %v1432 = vmul.f32 %v1397, %v1412
      %v1433 = vmul.f32 %v1398, %v1412
      %v1434 = vmul.f32 %v1399, %v1412
      %v1435 = vmul.f32 %v1400, %v1412
      %v1436 = vmul.f32 %v1401, %v1412
      %v1437 = vmul.f32 %v1402, %v1412
      %v1438 = vmul.f32 %v1403, %v1412
      %v1439 = vmul.f32 %v1404, %v1412
      %v1440 = vmul.f32 %v1405, %v1412
      %v1441 = vmul.f32 %v1406, %v1412
      %v1442 = vmul.f32 %v1407, %v1412
      %v1443 = vmul.f32 %v1408, %v1412
      %v1444 = vmul.f32 %v1409, %v1412
      %v1445 = vmul.f32 %v1410, %v1412
      %v1447 = vperm.slane %v489, 0
      %v1449 = vadd.f32 %v1414, %v1447
      %v1450 = vadd.f32 %v1415, %v1447
      %v1451 = vadd.f32 %v1416, %v1447
      %v1452 = vadd.f32 %v1417, %v1447
      %v1453 = vadd.f32 %v1418, %v1447
      %v1454 = vadd.f32 %v1419, %v1447
      %v1455 = vadd.f32 %v1420, %v1447
      %v1456 = vadd.f32 %v1421, %v1447
      %v1457 = vadd.f32 %v1422, %v1447
      %v1458 = vadd.f32 %v1423, %v1447
      %v1459 = vadd.f32 %v1424, %v1447
      %v1460 = vadd.f32 %v1425, %v1447
      %v1461 = vadd.f32 %v1426, %v1447
      %v1462 = vadd.f32 %v1427, %v1447
      %v1463 = vadd.f32 %v1428, %v1447
      %v1464 = vadd.f32 %v1429, %v1447
      %v1465 = vadd.f32 %v1430, %v1447
      %v1466 = vadd.f32 %v1431, %v1447
      %v1467 = vadd.f32 %v1432, %v1447
      %v1468 = vadd.f32 %v1433, %v1447
      %v1469 = vadd.f32 %v1434, %v1447
      %v1470 = vadd.f32 %v1435, %v1447
      %v1471 = vadd.f32 %v1436, %v1447
      %v1472 = vadd.f32 %v1437, %v1447
      %v1473 = vadd.f32 %v1438, %v1447
      %v1474 = vadd.f32 %v1439, %v1447
      %v1475 = vadd.f32 %v1440, %v1447
      %v1476 = vadd.f32 %v1441, %v1447
      %v1477 = vadd.f32 %v1442, %v1447
      %v1478 = vadd.f32 %v1443, %v1447
      %v1479 = vadd.f32 %v1444, %v1447
      %v1480 = vadd.f32 %v1445, %v1447
      %v1481 = vmax.f32 %v1449, 0.0
      %v1482 = vmax.f32 %v1450, 0.0
      %v1483 = vmax.f32 %v1451, 0.0
      %v1484 = vmax.f32 %v1452, 0.0
      %v1485 = vmax.f32 %v1453, 0.0
      %v1486 = vmax.f32 %v1454, 0.0
      %v1487 = vmax.f32 %v1455, 0.0
      %v1488 = vmax.f32 %v1456, 0.0
      %v1489 = vmax.f32 %v1457, 0.0
      %v1490 = vmax.f32 %v1458, 0.0
      %v1491 = vmax.f32 %v1459, 0.0
      %v1492 = vmax.f32 %v1460, 0.0
      %v1493 = vmax.f32 %v1461, 0.0
      %v1494 = vmax.f32 %v1462, 0.0
      %v1495 = vmax.f32 %v1463, 0.0
      %v1496 = vmax.f32 %v1464, 0.0
      %v1497 = vmax.f32 %v1465, 0.0
      %v1498 = vmax.f32 %v1466, 0.0
      %v1499 = vmax.f32 %v1467, 0.0
      %v1500 = vmax.f32 %v1468, 0.0
      %v1501 = vmax.f32 %v1469, 0.0
      %v1502 = vmax.f32 %v1470, 0.0
      %v1503 = vmax.f32 %v1471, 0.0
      %v1504 = vmax.f32 %v1472, 0.0
      %v1505 = vmax.f32 %v1473, 0.0
      %v1506 = vmax.f32 %v1474, 0.0
      %v1507 = vmax.f32 %v1475, 0.0
      %v1508 = vmax.f32 %v1476, 0.0
      %v1509 = vmax.f32 %v1477, 0.0
      %v1510 = vmax.f32 %v1478, 0.0
      %v1511 = vmax.f32 %v1479, 0.0
      %v1512 = vmax.f32 %v1480, 0.0
      %vm1513 = vcmask 64512
      %1514 = vst.msk [vmem:[%s197] sm:$0xff] %vm1513, %v1481
      %1515 = vst.msk [vmem:[%s197 + $0x8] sm:$0xff] %vm1513, %v1482
      %1516 = vst.msk [vmem:[%s197 + $0x20] sm:$0xff] %vm1513, %v1483
      %1517 = vst.msk [vmem:[%s197 + $0x28] sm:$0xff] %vm1513, %v1484
      %1518 = vst.msk [vmem:[%s197 + $0x40] sm:$0xff] %vm1513, %v1485
      %1519 = vst.msk [vmem:[%s197 + $0x48] sm:$0xff] %vm1513, %v1486
      %1520 = vst.msk [vmem:[%s197 + $0x60] sm:$0xff] %vm1513, %v1487
      %1521 = vst.msk [vmem:[%s197 + $0x68] sm:$0xff] %vm1513, %v1488
      %1522 = vst.msk [vmem:[%s197 + $0x80] sm:$0xff] %vm1513, %v1489
      %1523 = vst.msk [vmem:[%s197 + $0x88] sm:$0xff] %vm1513, %v1490
      %1524 = vst.msk [vmem:[%s197 + $0xa0] sm:$0xff] %vm1513, %v1491
      %1525 = vst.msk [vmem:[%s197 + $0xa8] sm:$0xff] %vm1513, %v1492
      %1526 = vst.msk [vmem:[%s197 + $0xc0] sm:$0xff] %vm1513, %v1493
      %1527 = vst.msk [vmem:[%s197 + $0xc8] sm:$0xff] %vm1513, %v1494
      %1528 = vst.msk [vmem:[%s197 + $0xe0] sm:$0xff] %vm1513, %v1495
      %1529 = vst.msk [vmem:[%s197 + $0xe8] sm:$0xff] %vm1513, %v1496
      %1530 = vst.msk [vmem:[%s197 + $0x100] sm:$0xff] %vm1513, %v1497
      %1531 = vst.msk [vmem:[%s197 + $0x108] sm:$0xff] %vm1513, %v1498
      %1532 = vst.msk [vmem:[%s197 + $0x120] sm:$0xff] %vm1513, %v1499
      %1533 = vst.msk [vmem:[%s197 + $0x128] sm:$0xff] %vm1513, %v1500
      %1534 = vst.msk [vmem:[%s197 + $0x140] sm:$0xff] %vm1513, %v1501
      %1535 = vst.msk [vmem:[%s197 + $0x148] sm:$0xff] %vm1513, %v1502
      %1536 = vst.msk [vmem:[%s197 + $0x160] sm:$0xff] %vm1513, %v1503
      %1537 = vst.msk [vmem:[%s197 + $0x168] sm:$0xff] %vm1513, %v1504
      %1538 = vst.msk [vmem:[%s197 + $0x180] sm:$0xff] %vm1513, %v1505
      %1539 = vst.msk [vmem:[%s197 + $0x188] sm:$0xff] %vm1513, %v1506
      %1540 = vst.msk [vmem:[%s197 + $0x1a0] sm:$0xff] %vm1513, %v1507
      %1541 = vst.msk [vmem:[%s197 + $0x1a8] sm:$0xff] %vm1513, %v1508
      %1542 = vst.msk [vmem:[%s197 + $0x1c0] sm:$0xff] %vm1513, %v1509
      %1543 = vst.msk [vmem:[%s197 + $0x1c8] sm:$0xff] %vm1513, %v1510
      %1544 = vst.msk [vmem:[%s197 + $0x1e0] sm:$0xff] %vm1513, %v1511
      %1545 = vst.msk [vmem:[%s197 + $0x1e8] sm:$0xff] %vm1513, %v1512
      %s1546 = scalar_lea.vmem %s1, 16
      %v1547 = vld [vmem:[%s1546] sm:$0xf]
      %s1548 = scalar_lea.vmem %s1, 20
      %v1549 = vld [vmem:[%s1548] sm:$0xf]
      %v1551 = vsel %vm493, %v262, 0
      %v1554 = vsel %vm493, %v263, 0
      %v1557 = vsel %vm493, %v264, 0
      %v1560 = vsel %vm493, %v265, 0
      %v1563 = vsel %vm493, %v266, 0
      %v1566 = vsel %vm493, %v267, 0
      %v1569 = vsel %vm493, %v268, 0
      %v1572 = vsel %vm493, %v269, 0
      %v1575 = vsel %vm493, %v270, 0
      %v1578 = vsel %vm493, %v271, 0
      %v1581 = vsel %vm493, %v272, 0
      %v1584 = vsel %vm493, %v273, 0
      %v1587 = vsel %vm493, %v274, 0
      %v1590 = vsel %vm493, %v275, 0
      %v1593 = vsel %vm493, %v276, 0
      %v1596 = vsel %vm493, %v277, 0
      %v1599 = vsel %vm493, %v278, 0
      %v1602 = vsel %vm493, %v279, 0
      %v1605 = vsel %vm493, %v280, 0
      %v1608 = vsel %vm493, %v281, 0
      %v1611 = vsel %vm493, %v282, 0
      %v1614 = vsel %vm493, %v283, 0
      %v1617 = vsel %vm493, %v284, 0
      %v1620 = vsel %vm493, %v285, 0
      %v1623 = vsel %vm493, %v286, 0
      %v1626 = vsel %vm493, %v287, 0
      %v1629 = vsel %vm493, %v288, 0
      %v1632 = vsel %vm493, %v289, 0
      %v1635 = vsel %vm493, %v290, 0
      %v1638 = vsel %vm493, %v291, 0
      %v1641 = vsel %vm493, %v292, 0
      %v1644 = vsel %vm493, %v293, 0
      %v1647 = vsel %vm590, %v1549, 0
      %1649 = vmatpush.msra.mxu0 0.0
      %1650 = vmatpush.msra.mxu0 0.0
      %1651 = vmatpush.msra.mxu0 0.0
      %1652 = vmatpush.msra.mxu0 0.0
      %1653 = vmatpush.msra.mxu0 0.0
      %1654 = vmatpush.msra.mxu0 0.0
      %1655 = vmatpush.msra.mxu0 0.0
      %1656 = vmatpush.msra.mxu0 0.0
      %1657 = vmatpush.msra.mxu0 0.0
      %1658 = vmatpush.msra.mxu0 0.0
      %1659 = vmatpush.msra.mxu0 0.0
      %1660 = vmatpush.msra.mxu0 0.0
      %1661 = vmatpush.msra.mxu0 0.0
      %1662 = vmatpush.msra.mxu0 0.0
      %1663 = vmatpush.msra.mxu0 0.0
      %1664 = vmatpush.msra.mxu0 %v1647
      %1665 = vmatmul.f32.gmra.mxu0 %v1551
      %v1666 = vpop.f32.mrf.mxu0
      %v1667 = vadd.f32 0.0, %v1666
      %1668 = vmatmul.f32.gmra.mxu0 %v1554
      %v1669 = vpop.f32.mrf.mxu0
      %v1670 = vadd.f32 0.0, %v1669
      %1671 = vmatmul.f32.gmra.mxu0 %v1557
      %v1672 = vpop.f32.mrf.mxu0
      %v1673 = vadd.f32 0.0, %v1672
      %1674 = vmatmul.f32.gmra.mxu0 %v1560
      %v1675 = vpop.f32.mrf.mxu0
      %v1676 = vadd.f32 0.0, %v1675
      %1677 = vmatmul.f32.gmra.mxu0 %v1563
      %v1678 = vpop.f32.mrf.mxu0
      %v1679 = vadd.f32 0.0, %v1678
      %1680 = vmatmul.f32.gmra.mxu0 %v1566
      %v1681 = vpop.f32.mrf.mxu0
      %v1682 = vadd.f32 0.0, %v1681
      %1683 = vmatmul.f32.gmra.mxu0 %v1569
      %v1684 = vpop.f32.mrf.mxu0
      %v1685 = vadd.f32 0.0, %v1684
      %1686 = vmatmul.f32.gmra.mxu0 %v1572
      %v1687 = vpop.f32.mrf.mxu0
      %v1688 = vadd.f32 0.0, %v1687
      %1689 = vmatmul.f32.gmra.mxu0 %v1575
      %v1690 = vpop.f32.mrf.mxu0
      %v1691 = vadd.f32 0.0, %v1690
      %1692 = vmatmul.f32.gmra.mxu0 %v1578
      %v1693 = vpop.f32.mrf.mxu0
      %v1694 = vadd.f32 0.0, %v1693
      %1695 = vmatmul.f32.gmra.mxu0 %v1581
      %v1696 = vpop.f32.mrf.mxu0
      %v1697 = vadd.f32 0.0, %v1696
      %1698 = vmatmul.f32.gmra.mxu0 %v1584
      %v1699 = vpop.f32.mrf.mxu0
      %v1700 = vadd.f32 0.0, %v1699
      %1701 = vmatmul.f32.gmra.mxu0 %v1587
      %v1702 = vpop.f32.mrf.mxu0
      %v1703 = vadd.f32 0.0, %v1702
      %1704 = vmatmul.f32.gmra.mxu0 %v1590
      %v1705 = vpop.f32.mrf.mxu0
      %v1706 = vadd.f32 0.0, %v1705
      %1707 = vmatmul.f32.gmra.mxu0 %v1593
      %v1708 = vpop.f32.mrf.mxu0
      %v1709 = vadd.f32 0.0, %v1708
      %1710 = vmatmul.f32.gmra.mxu0 %v1596
      %v1711 = vpop.f32.mrf.mxu0
      %v1712 = vadd.f32 0.0, %v1711
      %1713 = vmatmul.f32.gmra.mxu0 %v1599
      %v1714 = vpop.f32.mrf.mxu0
      %v1715 = vadd.f32 0.0, %v1714
      %1716 = vmatmul.f32.gmra.mxu0 %v1602
      %v1717 = vpop.f32.mrf.mxu0
      %v1718 = vadd.f32 0.0, %v1717
      %1719 = vmatmul.f32.gmra.mxu0 %v1605
      %v1720 = vpop.f32.mrf.mxu0
      %v1721 = vadd.f32 0.0, %v1720
      %1722 = vmatmul.f32.gmra.mxu0 %v1608
      %v1723 = vpop.f32.mrf.mxu0
      %v1724 = vadd.f32 0.0, %v1723
      %1725 = vmatmul.f32.gmra.mxu0 %v1611
      %v1726 = vpop.f32.mrf.mxu0
      %v1727 = vadd.f32 0.0, %v1726
      %1728 = vmatmul.f32.gmra.mxu0 %v1614
      %v1729 = vpop.f32.mrf.mxu0
      %v1730 = vadd.f32 0.0, %v1729
      %1731 = vmatmul.f32.gmra.mxu0 %v1617
      %v1732 = vpop.f32.mrf.mxu0
      %v1733 = vadd.f32 0.0, %v1732
      %1734 = vmatmul.f32.gmra.mxu0 %v1620
      %v1735 = vpop.f32.mrf.mxu0
      %v1736 = vadd.f32 0.0, %v1735
      %1737 = vmatmul.f32.gmra.mxu0 %v1623
      %v1738 = vpop.f32.mrf.mxu0
      %v1739 = vadd.f32 0.0, %v1738
      %1740 = vmatmul.f32.gmra.mxu0 %v1626
      %v1741 = vpop.f32.mrf.mxu0
      %v1742 = vadd.f32 0.0, %v1741
      %1743 = vmatmul.f32.gmra.mxu0 %v1629
      %v1744 = vpop.f32.mrf.mxu0
      %v1745 = vadd.f32 0.0, %v1744
      %1746 = vmatmul.f32.gmra.mxu0 %v1632
      %v1747 = vpop.f32.mrf.mxu0
      %v1748 = vadd.f32 0.0, %v1747
      %1749 = vmatmul.f32.gmra.mxu0 %v1635
      %v1750 = vpop.f32.mrf.mxu0
      %v1751 = vadd.f32 0.0, %v1750
      %1752 = vmatmul.f32.gmra.mxu0 %v1638
      %v1753 = vpop.f32.mrf.mxu0
      %v1754 = vadd.f32 0.0, %v1753
      %1755 = vmatmul.f32.gmra.mxu0 %v1641
      %v1756 = vpop.f32.mrf.mxu0
      %v1757 = vadd.f32 0.0, %v1756
      %1758 = vmatmul.f32.gmra.mxu0 %v1644
      %v1759 = vpop.f32.mrf.mxu0
      %v1760 = vadd.f32 0.0, %v1759
      %1761 = vdwg.mxu0
      %v1763 = vsel %vm590, %v1547, 0
      %1765 = vmatpush.msra.mxu0 0.0
      %1766 = vmatpush.msra.mxu0 0.0
      %1767 = vmatpush.msra.mxu0 0.0
      %1768 = vmatpush.msra.mxu0 0.0
      %1769 = vmatpush.msra.mxu0 0.0
      %1770 = vmatpush.msra.mxu0 0.0
      %1771 = vmatpush.msra.mxu0 0.0
      %1772 = vmatpush.msra.mxu0 0.0
      %1773 = vmatpush.msra.mxu0 0.0
      %1774 = vmatpush.msra.mxu0 0.0
      %1775 = vmatpush.msra.mxu0 0.0
      %1776 = vmatpush.msra.mxu0 0.0
      %1777 = vmatpush.msra.mxu0 0.0
      %1778 = vmatpush.msra.mxu0 0.0
      %1779 = vmatpush.msra.mxu0 0.0
      %1780 = vmatpush.msra.mxu0 %v1763
      %1781 = vmatmul.f32.gmra.mxu0 %v495
      %v1782 = vpop.f32.mrf.mxu0
      %v1783 = vadd.f32 %v1667, %v1782
      %1784 = vmatmul.f32.gmra.mxu0 %v498
      %v1785 = vpop.f32.mrf.mxu0
      %v1786 = vadd.f32 %v1670, %v1785
      %1787 = vmatmul.f32.gmra.mxu0 %v501
      %v1788 = vpop.f32.mrf.mxu0
      %v1789 = vadd.f32 %v1673, %v1788
      %1790 = vmatmul.f32.gmra.mxu0 %v504
      %v1791 = vpop.f32.mrf.mxu0
      %v1792 = vadd.f32 %v1676, %v1791
      %1793 = vmatmul.f32.gmra.mxu0 %v507
      %v1794 = vpop.f32.mrf.mxu0
      %v1795 = vadd.f32 %v1679, %v1794
      %1796 = vmatmul.f32.gmra.mxu0 %v510
      %v1797 = vpop.f32.mrf.mxu0
      %v1798 = vadd.f32 %v1682, %v1797
      %1799 = vmatmul.f32.gmra.mxu0 %v513
      %v1800 = vpop.f32.mrf.mxu0
      %v1801 = vadd.f32 %v1685, %v1800
      %1802 = vmatmul.f32.gmra.mxu0 %v516
      %v1803 = vpop.f32.mrf.mxu0
      %v1804 = vadd.f32 %v1688, %v1803
      %1805 = vmatmul.f32.gmra.mxu0 %v519
      %v1806 = vpop.f32.mrf.mxu0
      %v1807 = vadd.f32 %v1691, %v1806
      %1808 = vmatmul.f32.gmra.mxu0 %v522
      %v1809 = vpop.f32.mrf.mxu0
      %v1810 = vadd.f32 %v1694, %v1809
      %1811 = vmatmul.f32.gmra.mxu0 %v525
      %v1812 = vpop.f32.mrf.mxu0
      %v1813 = vadd.f32 %v1697, %v1812
      %1814 = vmatmul.f32.gmra.mxu0 %v528
      %v1815 = vpop.f32.mrf.mxu0
      %v1816 = vadd.f32 %v1700, %v1815
      %1817 = vmatmul.f32.gmra.mxu0 %v531
      %v1818 = vpop.f32.mrf.mxu0
      %v1819 = vadd.f32 %v1703, %v1818
      %1820 = vmatmul.f32.gmra.mxu0 %v534
      %v1821 = vpop.f32.mrf.mxu0
      %v1822 = vadd.f32 %v1706, %v1821
      %1823 = vmatmul.f32.gmra.mxu0 %v537
      %v1824 = vpop.f32.mrf.mxu0
      %v1825 = vadd.f32 %v1709, %v1824
      %1826 = vmatmul.f32.gmra.mxu0 %v540
      %v1827 = vpop.f32.mrf.mxu0
      %v1828 = vadd.f32 %v1712, %v1827
      %1829 = vmatmul.f32.gmra.mxu0 %v543
      %v1830 = vpop.f32.mrf.mxu0
      %v1831 = vadd.f32 %v1715, %v1830
      %1832 = vmatmul.f32.gmra.mxu0 %v546
      %v1833 = vpop.f32.mrf.mxu0
      %v1834 = vadd.f32 %v1718, %v1833
      %1835 = vmatmul.f32.gmra.mxu0 %v549
      %v1836 = vpop.f32.mrf.mxu0
      %v1837 = vadd.f32 %v1721, %v1836
      %1838 = vmatmul.f32.gmra.mxu0 %v552
      %v1839 = vpop.f32.mrf.mxu0
      %v1840 = vadd.f32 %v1724, %v1839
      %1841 = vmatmul.f32.gmra.mxu0 %v555
      %v1842 = vpop.f32.mrf.mxu0
      %v1843 = vadd.f32 %v1727, %v1842
      %1844 = vmatmul.f32.gmra.mxu0 %v558
      %v1845 = vpop.f32.mrf.mxu0
      %v1846 = vadd.f32 %v1730, %v1845
      %1847 = vmatmul.f32.gmra.mxu0 %v561
      %v1848 = vpop.f32.mrf.mxu0
      %v1849 = vadd.f32 %v1733, %v1848
      %1850 = vmatmul.f32.gmra.mxu0 %v564
      %v1851 = vpop.f32.mrf.mxu0
      %v1852 = vadd.f32 %v1736, %v1851
      %1853 = vmatmul.f32.gmra.mxu0 %v567
      %v1854 = vpop.f32.mrf.mxu0
      %v1855 = vadd.f32 %v1739, %v1854
      %1856 = vmatmul.f32.gmra.mxu0 %v570
      %v1857 = vpop.f32.mrf.mxu0
      %v1858 = vadd.f32 %v1742, %v1857
      %1859 = vmatmul.f32.gmra.mxu0 %v573
      %v1860 = vpop.f32.mrf.mxu0
      %v1861 = vadd.f32 %v1745, %v1860
      %1862 = vmatmul.f32.gmra.mxu0 %v576
      %v1863 = vpop.f32.mrf.mxu0
      %v1864 = vadd.f32 %v1748, %v1863
      %1865 = vmatmul.f32.gmra.mxu0 %v579
      %v1866 = vpop.f32.mrf.mxu0
      %v1867 = vadd.f32 %v1751, %v1866
      %1868 = vmatmul.f32.gmra.mxu0 %v582
      %v1869 = vpop.f32.mrf.mxu0
      %v1870 = vadd.f32 %v1754, %v1869
      %1871 = vmatmul.f32.gmra.mxu0 %v585
      %v1872 = vpop.f32.mrf.mxu0
      %v1873 = vadd.f32 %v1757, %v1872
      %1874 = vmatmul.f32.gmra.mxu0 %v588
      %v1875 = vpop.f32.mrf.mxu0
      %v1876 = vadd.f32 %v1760, %v1875
      %1877 = vdwg.mxu0
      %s1878 = scalar_lea.vmem %s1, 24
      %v1879 = vld [vmem:[%s1878] sm:$0xf]
      %v1881 = vsel %vm590, %v1879, 0
      %1883 = vmatpush.msra.mxu0 0.0
      %1884 = vmatpush.msra.mxu0 0.0
      %1885 = vmatpush.msra.mxu0 0.0
      %1886 = vmatpush.msra.mxu0 0.0
      %1887 = vmatpush.msra.mxu0 0.0
      %1888 = vmatpush.msra.mxu0 0.0
      %1889 = vmatpush.msra.mxu0 0.0
      %1890 = vmatpush.msra.mxu0 0.0
      %1891 = vmatpush.msra.mxu0 0.0
      %1892 = vmatpush.msra.mxu0 0.0
      %1893 = vmatpush.msra.mxu0 0.0
      %1894 = vmatpush.msra.mxu0 0.0
      %1895 = vmatpush.msra.mxu0 0.0
      %1896 = vmatpush.msra.mxu0 0.0
      %1897 = vmatpush.msra.mxu0 0.0
      %1898 = vmatpush.msra.mxu0 %v1881
      %1899 = vmatmul.f32.gmra.mxu0 %v1168
      %v1900 = vpop.f32.mrf.mxu0
      %v1901 = vadd.f32 0.0, %v1900
      %1902 = vmatmul.f32.gmra.mxu0 %v1171
      %v1903 = vpop.f32.mrf.mxu0
      %v1904 = vadd.f32 0.0, %v1903
      %1905 = vmatmul.f32.gmra.mxu0 %v1174
      %v1906 = vpop.f32.mrf.mxu0
      %v1907 = vadd.f32 0.0, %v1906
      %1908 = vmatmul.f32.gmra.mxu0 %v1177
      %v1909 = vpop.f32.mrf.mxu0
      %v1910 = vadd.f32 0.0, %v1909
      %1911 = vmatmul.f32.gmra.mxu0 %v1180
      %v1912 = vpop.f32.mrf.mxu0
      %v1913 = vadd.f32 0.0, %v1912
      %1914 = vmatmul.f32.gmra.mxu0 %v1183
      %v1915 = vpop.f32.mrf.mxu0
      %v1916 = vadd.f32 0.0, %v1915
      %1917 = vmatmul.f32.gmra.mxu0 %v1186
      %v1918 = vpop.f32.mrf.mxu0
      %v1919 = vadd.f32 0.0, %v1918
      %1920 = vmatmul.f32.gmra.mxu0 %v1189
      %v1921 = vpop.f32.mrf.mxu0
      %v1922 = vadd.f32 0.0, %v1921
      %1923 = vmatmul.f32.gmra.mxu0 %v1192
      %v1924 = vpop.f32.mrf.mxu0
      %v1925 = vadd.f32 0.0, %v1924
      %1926 = vmatmul.f32.gmra.mxu0 %v1195
      %v1927 = vpop.f32.mrf.mxu0
      %v1928 = vadd.f32 0.0, %v1927
      %1929 = vmatmul.f32.gmra.mxu0 %v1198
      %v1930 = vpop.f32.mrf.mxu0
      %v1931 = vadd.f32 0.0, %v1930
      %1932 = vmatmul.f32.gmra.mxu0 %v1201
      %v1933 = vpop.f32.mrf.mxu0
      %v1934 = vadd.f32 0.0, %v1933
      %1935 = vmatmul.f32.gmra.mxu0 %v1204
      %v1936 = vpop.f32.mrf.mxu0
      %v1937 = vadd.f32 0.0, %v1936
      %1938 = vmatmul.f32.gmra.mxu0 %v1207
      %v1939 = vpop.f32.mrf.mxu0
      %v1940 = vadd.f32 0.0, %v1939
      %1941 = vmatmul.f32.gmra.mxu0 %v1210
      %v1942 = vpop.f32.mrf.mxu0
      %v1943 = vadd.f32 0.0, %v1942
      %1944 = vmatmul.f32.gmra.mxu0 %v1213
      %v1945 = vpop.f32.mrf.mxu0
      %v1946 = vadd.f32 0.0, %v1945
      %1947 = vmatmul.f32.gmra.mxu0 %v1216
      %v1948 = vpop.f32.mrf.mxu0
      %v1949 = vadd.f32 0.0, %v1948
      %1950 = vmatmul.f32.gmra.mxu0 %v1219
      %v1951 = vpop.f32.mrf.mxu0
      %v1952 = vadd.f32 0.0, %v1951
      %1953 = vmatmul.f32.gmra.mxu0 %v1222
      %v1954 = vpop.f32.mrf.mxu0
      %v1955 = vadd.f32 0.0, %v1954
      %1956 = vmatmul.f32.gmra.mxu0 %v1225
      %v1957 = vpop.f32.mrf.mxu0
      %v1958 = vadd.f32 0.0, %v1957
      %1959 = vmatmul.f32.gmra.mxu0 %v1228
      %v1960 = vpop.f32.mrf.mxu0
      %v1961 = vadd.f32 0.0, %v1960
      %1962 = vmatmul.f32.gmra.mxu0 %v1231
      %v1963 = vpop.f32.mrf.mxu0
      %v1964 = vadd.f32 0.0, %v1963
      %1965 = vmatmul.f32.gmra.mxu0 %v1234
      %v1966 = vpop.f32.mrf.mxu0
      %v1967 = vadd.f32 0.0, %v1966
      %1968 = vmatmul.f32.gmra.mxu0 %v1237
      %v1969 = vpop.f32.mrf.mxu0
      %v1970 = vadd.f32 0.0, %v1969
      %1971 = vmatmul.f32.gmra.mxu0 %v1240
      %v1972 = vpop.f32.mrf.mxu0
      %v1973 = vadd.f32 0.0, %v1972
      %1974 = vmatmul.f32.gmra.mxu0 %v1243
      %v1975 = vpop.f32.mrf.mxu0
      %v1976 = vadd.f32 0.0, %v1975
      %1977 = vmatmul.f32.gmra.mxu0 %v1246
      %v1978 = vpop.f32.mrf.mxu0
      %v1979 = vadd.f32 0.0, %v1978
      %1980 = vmatmul.f32.gmra.mxu0 %v1249
      %v1981 = vpop.f32.mrf.mxu0
      %v1982 = vadd.f32 0.0, %v1981
      %1983 = vmatmul.f32.gmra.mxu0 %v1252
      %v1984 = vpop.f32.mrf.mxu0
      %v1985 = vadd.f32 0.0, %v1984
      %1986 = vmatmul.f32.gmra.mxu0 %v1255
      %v1987 = vpop.f32.mrf.mxu0
      %v1988 = vadd.f32 0.0, %v1987
      %1989 = vmatmul.f32.gmra.mxu0 %v1258
      %v1990 = vpop.f32.mrf.mxu0
      %v1991 = vadd.f32 0.0, %v1990
      %1992 = vmatmul.f32.gmra.mxu0 %v1261
      %v1993 = vpop.f32.mrf.mxu0
      %v1994 = vadd.f32 0.0, %v1993
      %1995 = vdwg.mxu0
      %v1996 = vadd.f32 %v1783, %v1901
      %v1997 = vadd.f32 %v1786, %v1904
      %v1998 = vadd.f32 %v1789, %v1907
      %v1999 = vadd.f32 %v1792, %v1910
      %v2000 = vadd.f32 %v1795, %v1913
      %v2001 = vadd.f32 %v1798, %v1916
      %v2002 = vadd.f32 %v1801, %v1919
      %v2003 = vadd.f32 %v1804, %v1922
      %v2004 = vadd.f32 %v1807, %v1925
      %v2005 = vadd.f32 %v1810, %v1928
      %v2006 = vadd.f32 %v1813, %v1931
      %v2007 = vadd.f32 %v1816, %v1934
      %v2008 = vadd.f32 %v1819, %v1937
      %v2009 = vadd.f32 %v1822, %v1940
      %v2010 = vadd.f32 %v1825, %v1943
      %v2011 = vadd.f32 %v1828, %v1946
      %v2012 = vadd.f32 %v1831, %v1949
      %v2013 = vadd.f32 %v1834, %v1952
      %v2014 = vadd.f32 %v1837, %v1955
      %v2015 = vadd.f32 %v1840, %v1958
      %v2016 = vadd.f32 %v1843, %v1961
      %v2017 = vadd.f32 %v1846, %v1964
      %v2018 = vadd.f32 %v1849, %v1967
      %v2019 = vadd.f32 %v1852, %v1970
      %v2020 = vadd.f32 %v1855, %v1973
      %v2021 = vadd.f32 %v1858, %v1976
      %v2022 = vadd.f32 %v1861, %v1979
      %v2023 = vadd.f32 %v1864, %v1982
      %v2024 = vadd.f32 %v1867, %v1985
      %v2025 = vadd.f32 %v1870, %v1988
      %v2026 = vadd.f32 %v1873, %v1991
      %v2027 = vadd.f32 %v1876, %v1994
      %s2028 = scalar_lea.vmem %s1, 28
      %v2029 = vld [vmem:[%s2028] sm:$0xf]
      %v2031 = vsel %vm493, %v359, 0
      %v2034 = vsel %vm493, %v360, 0
      %v2037 = vsel %vm493, %v361, 0
      %v2040 = vsel %vm493, %v362, 0
      %v2043 = vsel %vm493, %v363, 0
      %v2046 = vsel %vm493, %v364, 0
      %v2049 = vsel %vm493, %v365, 0
      %v2052 = vsel %vm493, %v366, 0
      %v2055 = vsel %vm493, %v367, 0
      %v2058 = vsel %vm493, %v368, 0
      %v2061 = vsel %vm493, %v369, 0
      %v2064 = vsel %vm493, %v370, 0
      %v2067 = vsel %vm493, %v371, 0
      %v2070 = vsel %vm493, %v372, 0
      %v2073 = vsel %vm493, %v373, 0
      %v2076 = vsel %vm493, %v374, 0
      %v2079 = vsel %vm493, %v375, 0
      %v2082 = vsel %vm493, %v376, 0
      %v2085 = vsel %vm493, %v377, 0
      %v2088 = vsel %vm493, %v378, 0
      %v2091 = vsel %vm493, %v379, 0
      %v2094 = vsel %vm493, %v380, 0
      %v2097 = vsel %vm493, %v381, 0
      %v2100 = vsel %vm493, %v382, 0
      %v2103 = vsel %vm493, %v383, 0
      %v2106 = vsel %vm493, %v384, 0
      %v2109 = vsel %vm493, %v385, 0
      %v2112 = vsel %vm493, %v386, 0
      %v2115 = vsel %vm493, %v387, 0
      %v2118 = vsel %vm493, %v388, 0
      %v2121 = vsel %vm493, %v389, 0
      %v2124 = vsel %vm493, %v390, 0
      %v2127 = vsel %vm590, %v2029, 0
      %2129 = vmatpush.msra.mxu0 0.0
      %2130 = vmatpush.msra.mxu0 0.0
      %2131 = vmatpush.msra.mxu0 0.0
      %2132 = vmatpush.msra.mxu0 0.0
      %2133 = vmatpush.msra.mxu0 0.0
      %2134 = vmatpush.msra.mxu0 0.0
      %2135 = vmatpush.msra.mxu0 0.0
      %2136 = vmatpush.msra.mxu0 0.0
      %2137 = vmatpush.msra.mxu0 0.0
      %2138 = vmatpush.msra.mxu0 0.0
      %2139 = vmatpush.msra.mxu0 0.0
      %2140 = vmatpush.msra.mxu0 0.0
      %2141 = vmatpush.msra.mxu0 0.0
      %2142 = vmatpush.msra.mxu0 0.0
      %2143 = vmatpush.msra.mxu0 0.0
      %2144 = vmatpush.msra.mxu0 %v2127
      %2145 = vmatmul.f32.gmra.mxu0 %v2031
      %v2146 = vpop.f32.mrf.mxu0
      %v2147 = vadd.f32 0.0, %v2146
      %2148 = vmatmul.f32.gmra.mxu0 %v2034
      %v2149 = vpop.f32.mrf.mxu0
      %v2150 = vadd.f32 0.0, %v2149
      %2151 = vmatmul.f32.gmra.mxu0 %v2037
      %v2152 = vpop.f32.mrf.mxu0
      %v2153 = vadd.f32 0.0, %v2152
      %2154 = vmatmul.f32.gmra.mxu0 %v2040
      %v2155 = vpop.f32.mrf.mxu0
      %v2156 = vadd.f32 0.0, %v2155
      %2157 = vmatmul.f32.gmra.mxu0 %v2043
      %v2158 = vpop.f32.mrf.mxu0
      %v2159 = vadd.f32 0.0, %v2158
      %2160 = vmatmul.f32.gmra.mxu0 %v2046
      %v2161 = vpop.f32.mrf.mxu0
      %v2162 = vadd.f32 0.0, %v2161
      %2163 = vmatmul.f32.gmra.mxu0 %v2049
      %v2164 = vpop.f32.mrf.mxu0
      %v2165 = vadd.f32 0.0, %v2164
      %2166 = vmatmul.f32.gmra.mxu0 %v2052
      %v2167 = vpop.f32.mrf.mxu0
      %v2168 = vadd.f32 0.0, %v2167
      %2169 = vmatmul.f32.gmra.mxu0 %v2055
      %v2170 = vpop.f32.mrf.mxu0
      %v2171 = vadd.f32 0.0, %v2170
      %2172 = vmatmul.f32.gmra.mxu0 %v2058
      %v2173 = vpop.f32.mrf.mxu0
      %v2174 = vadd.f32 0.0, %v2173
      %2175 = vmatmul.f32.gmra.mxu0 %v2061
      %v2176 = vpop.f32.mrf.mxu0
      %v2177 = vadd.f32 0.0, %v2176
      %2178 = vmatmul.f32.gmra.mxu0 %v2064
      %v2179 = vpop.f32.mrf.mxu0
      %v2180 = vadd.f32 0.0, %v2179
      %2181 = vmatmul.f32.gmra.mxu0 %v2067
      %v2182 = vpop.f32.mrf.mxu0
      %v2183 = vadd.f32 0.0, %v2182
      %2184 = vmatmul.f32.gmra.mxu0 %v2070
      %v2185 = vpop.f32.mrf.mxu0
      %v2186 = vadd.f32 0.0, %v2185
      %2187 = vmatmul.f32.gmra.mxu0 %v2073
      %v2188 = vpop.f32.mrf.mxu0
      %v2189 = vadd.f32 0.0, %v2188
      %2190 = vmatmul.f32.gmra.mxu0 %v2076
      %v2191 = vpop.f32.mrf.mxu0
      %v2192 = vadd.f32 0.0, %v2191
      %2193 = vmatmul.f32.gmra.mxu0 %v2079
      %v2194 = vpop.f32.mrf.mxu0
      %v2195 = vadd.f32 0.0, %v2194
      %2196 = vmatmul.f32.gmra.mxu0 %v2082
      %v2197 = vpop.f32.mrf.mxu0
      %v2198 = vadd.f32 0.0, %v2197
      %2199 = vmatmul.f32.gmra.mxu0 %v2085
      %v2200 = vpop.f32.mrf.mxu0
      %v2201 = vadd.f32 0.0, %v2200
      %2202 = vmatmul.f32.gmra.mxu0 %v2088
      %v2203 = vpop.f32.mrf.mxu0
      %v2204 = vadd.f32 0.0, %v2203
      %2205 = vmatmul.f32.gmra.mxu0 %v2091
      %v2206 = vpop.f32.mrf.mxu0
      %v2207 = vadd.f32 0.0, %v2206
      %2208 = vmatmul.f32.gmra.mxu0 %v2094
      %v2209 = vpop.f32.mrf.mxu0
      %v2210 = vadd.f32 0.0, %v2209
      %2211 = vmatmul.f32.gmra.mxu0 %v2097
      %v2212 = vpop.f32.mrf.mxu0
      %v2213 = vadd.f32 0.0, %v2212
      %2214 = vmatmul.f32.gmra.mxu0 %v2100
      %v2215 = vpop.f32.mrf.mxu0
      %v2216 = vadd.f32 0.0, %v2215
      %2217 = vmatmul.f32.gmra.mxu0 %v2103
      %v2218 = vpop.f32.mrf.mxu0
      %v2219 = vadd.f32 0.0, %v2218
      %2220 = vmatmul.f32.gmra.mxu0 %v2106
      %v2221 = vpop.f32.mrf.mxu0
      %v2222 = vadd.f32 0.0, %v2221
      %2223 = vmatmul.f32.gmra.mxu0 %v2109
      %v2224 = vpop.f32.mrf.mxu0
      %v2225 = vadd.f32 0.0, %v2224
      %2226 = vmatmul.f32.gmra.mxu0 %v2112
      %v2227 = vpop.f32.mrf.mxu0
      %v2228 = vadd.f32 0.0, %v2227
      %2229 = vmatmul.f32.gmra.mxu0 %v2115
      %v2230 = vpop.f32.mrf.mxu0
      %v2231 = vadd.f32 0.0, %v2230
      %2232 = vmatmul.f32.gmra.mxu0 %v2118
      %v2233 = vpop.f32.mrf.mxu0
      %v2234 = vadd.f32 0.0, %v2233
      %2235 = vmatmul.f32.gmra.mxu0 %v2121
      %v2236 = vpop.f32.mrf.mxu0
      %v2237 = vadd.f32 0.0, %v2236
      %2238 = vmatmul.f32.gmra.mxu0 %v2124
      %v2239 = vpop.f32.mrf.mxu0
      %v2240 = vadd.f32 0.0, %v2239
      %2241 = vdwg.mxu0
      %v2242 = vadd.f32 %v1996, %v2147
      %v2243 = vadd.f32 %v1997, %v2150
      %v2244 = vadd.f32 %v1998, %v2153
      %v2245 = vadd.f32 %v1999, %v2156
      %v2246 = vadd.f32 %v2000, %v2159
      %v2247 = vadd.f32 %v2001, %v2162
      %v2248 = vadd.f32 %v2002, %v2165
      %v2249 = vadd.f32 %v2003, %v2168
      %v2250 = vadd.f32 %v2004, %v2171
      %v2251 = vadd.f32 %v2005, %v2174
      %v2252 = vadd.f32 %v2006, %v2177
      %v2253 = vadd.f32 %v2007, %v2180
      %v2254 = vadd.f32 %v2008, %v2183
      %v2255 = vadd.f32 %v2009, %v2186
      %v2256 = vadd.f32 %v2010, %v2189
      %v2257 = vadd.f32 %v2011, %v2192
      %v2258 = vadd.f32 %v2012, %v2195
      %v2259 = vadd.f32 %v2013, %v2198
      %v2260 = vadd.f32 %v2014, %v2201
      %v2261 = vadd.f32 %v2015, %v2204
      %v2262 = vadd.f32 %v2016, %v2207
      %v2263 = vadd.f32 %v2017, %v2210
      %v2264 = vadd.f32 %v2018, %v2213
      %v2265 = vadd.f32 %v2019, %v2216
      %v2266 = vadd.f32 %v2020, %v2219
      %v2267 = vadd.f32 %v2021, %v2222
      %v2268 = vadd.f32 %v2022, %v2225
      %v2269 = vadd.f32 %v2023, %v2228
      %v2270 = vadd.f32 %v2024, %v2231
      %v2271 = vadd.f32 %v2025, %v2234
      %v2272 = vadd.f32 %v2026, %v2237
      %v2273 = vadd.f32 %v2027, %v2240
      %v2274 = vmul.f32 %v2242, %v1412
      %v2275 = vmul.f32 %v2243, %v1412
      %v2276 = vmul.f32 %v2244, %v1412
      %v2277 = vmul.f32 %v2245, %v1412
      %v2278 = vmul.f32 %v2246, %v1412
      %v2279 = vmul.f32 %v2247, %v1412
      %v2280 = vmul.f32 %v2248, %v1412
      %v2281 = vmul.f32 %v2249, %v1412
      %v2282 = vmul.f32 %v2250, %v1412
      %v2283 = vmul.f32 %v2251, %v1412
      %v2284 = vmul.f32 %v2252, %v1412
      %v2285 = vmul.f32 %v2253, %v1412
      %v2286 = vmul.f32 %v2254, %v1412
      %v2287 = vmul.f32 %v2255, %v1412
      %v2288 = vmul.f32 %v2256, %v1412
      %v2289 = vmul.f32 %v2257, %v1412
      %v2290 = vmul.f32 %v2258, %v1412
      %v2291 = vmul.f32 %v2259, %v1412
      %v2292 = vmul.f32 %v2260, %v1412
      %v2293 = vmul.f32 %v2261, %v1412
      %v2294 = vmul.f32 %v2262, %v1412
      %v2295 = vmul.f32 %v2263, %v1412
      %v2296 = vmul.f32 %v2264, %v1412
      %v2297 = vmul.f32 %v2265, %v1412
      %v2298 = vmul.f32 %v2266, %v1412
      %v2299 = vmul.f32 %v2267, %v1412
      %v2300 = vmul.f32 %v2268, %v1412
      %v2301 = vmul.f32 %v2269, %v1412
      %v2302 = vmul.f32 %v2270, %v1412
      %v2303 = vmul.f32 %v2271, %v1412
      %v2304 = vmul.f32 %v2272, %v1412
      %v2305 = vmul.f32 %v2273, %v1412
      %v2306 = vadd.f32 %v2274, %v1447
      %v2307 = vadd.f32 %v2275, %v1447
      %v2308 = vadd.f32 %v2276, %v1447
      %v2309 = vadd.f32 %v2277, %v1447
      %v2310 = vadd.f32 %v2278, %v1447
      %v2311 = vadd.f32 %v2279, %v1447
      %v2312 = vadd.f32 %v2280, %v1447
      %v2313 = vadd.f32 %v2281, %v1447
      %v2314 = vadd.f32 %v2282, %v1447
      %v2315 = vadd.f32 %v2283, %v1447
      %v2316 = vadd.f32 %v2284, %v1447
      %v2317 = vadd.f32 %v2285, %v1447
      %v2318 = vadd.f32 %v2286, %v1447
      %v2319 = vadd.f32 %v2287, %v1447
      %v2320 = vadd.f32 %v2288, %v1447
      %v2321 = vadd.f32 %v2289, %v1447
      %v2322 = vadd.f32 %v2290, %v1447
      %v2323 = vadd.f32 %v2291, %v1447
      %v2324 = vadd.f32 %v2292, %v1447
      %v2325 = vadd.f32 %v2293, %v1447
      %v2326 = vadd.f32 %v2294, %v1447
      %v2327 = vadd.f32 %v2295, %v1447
      %v2328 = vadd.f32 %v2296, %v1447
      %v2329 = vadd.f32 %v2297, %v1447
      %v2330 = vadd.f32 %v2298, %v1447
      %v2331 = vadd.f32 %v2299, %v1447
      %v2332 = vadd.f32 %v2300, %v1447
      %v2333 = vadd.f32 %v2301, %v1447
      %v2334 = vadd.f32 %v2302, %v1447
      %v2335 = vadd.f32 %v2303, %v1447
      %v2336 = vadd.f32 %v2304, %v1447
      %v2337 = vadd.f32 %v2305, %v1447
      %v2338 = vmax.f32 %v2306, 0.0
      %v2339 = vmax.f32 %v2307, 0.0
      %v2340 = vmax.f32 %v2308, 0.0
      %v2341 = vmax.f32 %v2309, 0.0
      %v2342 = vmax.f32 %v2310, 0.0
      %v2343 = vmax.f32 %v2311, 0.0
      %v2344 = vmax.f32 %v2312, 0.0
      %v2345 = vmax.f32 %v2313, 0.0
      %v2346 = vmax.f32 %v2314, 0.0
      %v2347 = vmax.f32 %v2315, 0.0
      %v2348 = vmax.f32 %v2316, 0.0
      %v2349 = vmax.f32 %v2317, 0.0
      %v2350 = vmax.f32 %v2318, 0.0
      %v2351 = vmax.f32 %v2319, 0.0
      %v2352 = vmax.f32 %v2320, 0.0
      %v2353 = vmax.f32 %v2321, 0.0
      %v2354 = vmax.f32 %v2322, 0.0
      %v2355 = vmax.f32 %v2323, 0.0
      %v2356 = vmax.f32 %v2324, 0.0
      %v2357 = vmax.f32 %v2325, 0.0
      %v2358 = vmax.f32 %v2326, 0.0
      %v2359 = vmax.f32 %v2327, 0.0
      %v2360 = vmax.f32 %v2328, 0.0
      %v2361 = vmax.f32 %v2329, 0.0
      %v2362 = vmax.f32 %v2330, 0.0
      %v2363 = vmax.f32 %v2331, 0.0
      %v2364 = vmax.f32 %v2332, 0.0
      %v2365 = vmax.f32 %v2333, 0.0
      %v2366 = vmax.f32 %v2334, 0.0
      %v2367 = vmax.f32 %v2335, 0.0
      %v2368 = vmax.f32 %v2336, 0.0
      %v2369 = vmax.f32 %v2337, 0.0
      %2402 = vrot.lane.b32.xlu0 %v2338, 8
      %v2403 = vpop.permute.xlu0 %2402
      %2404 = vrot.lane.b32.xlu0 %v2339, 8
      %v2405 = vpop.permute.xlu0 %2404
      %2406 = vrot.lane.b32.xlu0 %v2340, 8
      %v2407 = vpop.permute.xlu0 %2406
      %2408 = vrot.lane.b32.xlu0 %v2341, 8
      %v2409 = vpop.permute.xlu0 %2408
      %2410 = vrot.lane.b32.xlu0 %v2342, 8
      %v2411 = vpop.permute.xlu0 %2410
      %2412 = vrot.lane.b32.xlu0 %v2343, 8
      %v2413 = vpop.permute.xlu0 %2412
      %2414 = vrot.lane.b32.xlu0 %v2344, 8
      %v2415 = vpop.permute.xlu0 %2414
      %2416 = vrot.lane.b32.xlu0 %v2345, 8
      %v2417 = vpop.permute.xlu0 %2416
      %2418 = vrot.lane.b32.xlu0 %v2346, 8
      %v2419 = vpop.permute.xlu0 %2418
      %2420 = vrot.lane.b32.xlu0 %v2347, 8
      %v2421 = vpop.permute.xlu0 %2420
      %2422 = vrot.lane.b32.xlu0 %v2348, 8
      %v2423 = vpop.permute.xlu0 %2422
      %2424 = vrot.lane.b32.xlu0 %v2349, 8
      %v2425 = vpop.permute.xlu0 %2424
      %2426 = vrot.lane.b32.xlu0 %v2350, 8
      %v2427 = vpop.permute.xlu0 %2426
      %2428 = vrot.lane.b32.xlu0 %v2351, 8
      %v2429 = vpop.permute.xlu0 %2428
      %2430 = vrot.lane.b32.xlu0 %v2352, 8
      %v2431 = vpop.permute.xlu0 %2430
      %2432 = vrot.lane.b32.xlu0 %v2353, 8
      %v2433 = vpop.permute.xlu0 %2432
      %2434 = vrot.lane.b32.xlu0 %v2354, 8
      %v2435 = vpop.permute.xlu0 %2434
      %2436 = vrot.lane.b32.xlu0 %v2355, 8
      %v2437 = vpop.permute.xlu0 %2436
      %2438 = vrot.lane.b32.xlu0 %v2356, 8
      %v2439 = vpop.permute.xlu0 %2438
      %2440 = vrot.lane.b32.xlu0 %v2357, 8
      %v2441 = vpop.permute.xlu0 %2440
      %2442 = vrot.lane.b32.xlu0 %v2358, 8
      %v2443 = vpop.permute.xlu0 %2442
      %2444 = vrot.lane.b32.xlu0 %v2359, 8
      %v2445 = vpop.permute.xlu0 %2444
      %2446 = vrot.lane.b32.xlu0 %v2360, 8
      %v2447 = vpop.permute.xlu0 %2446
      %2448 = vrot.lane.b32.xlu0 %v2361, 8
      %v2449 = vpop.permute.xlu0 %2448
      %2450 = vrot.lane.b32.xlu0 %v2362, 8
      %v2451 = vpop.permute.xlu0 %2450
      %2452 = vrot.lane.b32.xlu0 %v2363, 8
      %v2453 = vpop.permute.xlu0 %2452
      %2454 = vrot.lane.b32.xlu0 %v2364, 8
      %v2455 = vpop.permute.xlu0 %2454
      %2456 = vrot.lane.b32.xlu0 %v2365, 8
      %v2457 = vpop.permute.xlu0 %2456
      %2458 = vrot.lane.b32.xlu0 %v2366, 8
      %v2459 = vpop.permute.xlu0 %2458
      %2460 = vrot.lane.b32.xlu0 %v2367, 8
      %v2461 = vpop.permute.xlu0 %2460
      %2462 = vrot.lane.b32.xlu0 %v2368, 8
      %v2463 = vpop.permute.xlu0 %2462
      %2464 = vrot.lane.b32.xlu0 %v2369, 8
      %v2465 = vpop.permute.xlu0 %2464
      %vm2498 = vcmask 130112
      %2499 = vst.msk [vmem:[%s197] sm:$0xff] %vm2498, %v2403
      %2500 = vst.msk [vmem:[%s197 + $0x8] sm:$0xff] %vm2498, %v2405
      %2501 = vst.msk [vmem:[%s197 + $0x20] sm:$0xff] %vm2498, %v2407
      %2502 = vst.msk [vmem:[%s197 + $0x28] sm:$0xff] %vm2498, %v2409
      %2503 = vst.msk [vmem:[%s197 + $0x40] sm:$0xff] %vm2498, %v2411
      %2504 = vst.msk [vmem:[%s197 + $0x48] sm:$0xff] %vm2498, %v2413
      %2505 = vst.msk [vmem:[%s197 + $0x60] sm:$0xff] %vm2498, %v2415
      %2506 = vst.msk [vmem:[%s197 + $0x68] sm:$0xff] %vm2498, %v2417
      %2507 = vst.msk [vmem:[%s197 + $0x80] sm:$0xff] %vm2498, %v2419
      %2508 = vst.msk [vmem:[%s197 + $0x88] sm:$0xff] %vm2498, %v2421
      %2509 = vst.msk [vmem:[%s197 + $0xa0] sm:$0xff] %vm2498, %v2423
      %2510 = vst.msk [vmem:[%s197 + $0xa8] sm:$0xff] %vm2498, %v2425
      %2511 = vst.msk [vmem:[%s197 + $0xc0] sm:$0xff] %vm2498, %v2427
      %2512 = vst.msk [vmem:[%s197 + $0xc8] sm:$0xff] %vm2498, %v2429
      %2513 = vst.msk [vmem:[%s197 + $0xe0] sm:$0xff] %vm2498, %v2431
      %2514 = vst.msk [vmem:[%s197 + $0xe8] sm:$0xff] %vm2498, %v2433
      %2515 = vst.msk [vmem:[%s197 + $0x100] sm:$0xff] %vm2498, %v2435
      %2516 = vst.msk [vmem:[%s197 + $0x108] sm:$0xff] %vm2498, %v2437
      %2517 = vst.msk [vmem:[%s197 + $0x120] sm:$0xff] %vm2498, %v2439
      %2518 = vst.msk [vmem:[%s197 + $0x128] sm:$0xff] %vm2498, %v2441
      %2519 = vst.msk [vmem:[%s197 + $0x140] sm:$0xff] %vm2498, %v2443
      %2520 = vst.msk [vmem:[%s197 + $0x148] sm:$0xff] %vm2498, %v2445
      %2521 = vst.msk [vmem:[%s197 + $0x160] sm:$0xff] %vm2498, %v2447
      %2522 = vst.msk [vmem:[%s197 + $0x168] sm:$0xff] %vm2498, %v2449
      %2523 = vst.msk [vmem:[%s197 + $0x180] sm:$0xff] %vm2498, %v2451
      %2524 = vst.msk [vmem:[%s197 + $0x188] sm:$0xff] %vm2498, %v2453
      %2525 = vst.msk [vmem:[%s197 + $0x1a0] sm:$0xff] %vm2498, %v2455
      %2526 = vst.msk [vmem:[%s197 + $0x1a8] sm:$0xff] %vm2498, %v2457
      %2527 = vst.msk [vmem:[%s197 + $0x1c0] sm:$0xff] %vm2498, %v2459
      %2528 = vst.msk [vmem:[%s197 + $0x1c8] sm:$0xff] %vm2498, %v2461
      %2529 = vst.msk [vmem:[%s197 + $0x1e0] sm:$0xff] %vm2498, %v2463
      %2530 = vst.msk [vmem:[%s197 + $0x1e8] sm:$0xff] %vm2498, %v2465
      %s2531 = scalar_lea.vmem %s1, 32
      %v2532 = vld [vmem:[%s2531] sm:$0xf]
      %s2533 = scalar_lea.vmem %s1, 36
      %v2534 = vld [vmem:[%s2533] sm:$0xf]
      %v2536 = vsel %vm590, %v2534, 0
      %2538 = vmatpush.msra.mxu0 0.0
      %2539 = vmatpush.msra.mxu0 0.0
      %2540 = vmatpush.msra.mxu0 0.0
      %2541 = vmatpush.msra.mxu0 0.0
      %2542 = vmatpush.msra.mxu0 0.0
      %2543 = vmatpush.msra.mxu0 0.0
      %2544 = vmatpush.msra.mxu0 0.0
      %2545 = vmatpush.msra.mxu0 0.0
      %2546 = vmatpush.msra.mxu0 0.0
      %2547 = vmatpush.msra.mxu0 0.0
      %2548 = vmatpush.msra.mxu0 0.0
      %2549 = vmatpush.msra.mxu0 0.0
      %2550 = vmatpush.msra.mxu0 0.0
      %2551 = vmatpush.msra.mxu0 0.0
      %2552 = vmatpush.msra.mxu0 0.0
      %2553 = vmatpush.msra.mxu0 %v2536
      %2554 = vmatmul.f32.gmra.mxu0 %v1168
      %v2555 = vpop.f32.mrf.mxu0
      %v2556 = vadd.f32 0.0, %v2555
      %2557 = vmatmul.f32.gmra.mxu0 %v1171
      %v2558 = vpop.f32.mrf.mxu0
      %v2559 = vadd.f32 0.0, %v2558
      %2560 = vmatmul.f32.gmra.mxu0 %v1174
      %v2561 = vpop.f32.mrf.mxu0
      %v2562 = vadd.f32 0.0, %v2561
      %2563 = vmatmul.f32.gmra.mxu0 %v1177
      %v2564 = vpop.f32.mrf.mxu0
      %v2565 = vadd.f32 0.0, %v2564
      %2566 = vmatmul.f32.gmra.mxu0 %v1180
      %v2567 = vpop.f32.mrf.mxu0
      %v2568 = vadd.f32 0.0, %v2567
      %2569 = vmatmul.f32.gmra.mxu0 %v1183
      %v2570 = vpop.f32.mrf.mxu0
      %v2571 = vadd.f32 0.0, %v2570
      %2572 = vmatmul.f32.gmra.mxu0 %v1186
      %v2573 = vpop.f32.mrf.mxu0
      %v2574 = vadd.f32 0.0, %v2573
      %2575 = vmatmul.f32.gmra.mxu0 %v1189
      %v2576 = vpop.f32.mrf.mxu0
      %v2577 = vadd.f32 0.0, %v2576
      %2578 = vmatmul.f32.gmra.mxu0 %v1192
      %v2579 = vpop.f32.mrf.mxu0
      %v2580 = vadd.f32 0.0, %v2579
      %2581 = vmatmul.f32.gmra.mxu0 %v1195
      %v2582 = vpop.f32.mrf.mxu0
      %v2583 = vadd.f32 0.0, %v2582
      %2584 = vmatmul.f32.gmra.mxu0 %v1198
      %v2585 = vpop.f32.mrf.mxu0
      %v2586 = vadd.f32 0.0, %v2585
      %2587 = vmatmul.f32.gmra.mxu0 %v1201
      %v2588 = vpop.f32.mrf.mxu0
      %v2589 = vadd.f32 0.0, %v2588
      %2590 = vmatmul.f32.gmra.mxu0 %v1204
      %v2591 = vpop.f32.mrf.mxu0
      %v2592 = vadd.f32 0.0, %v2591
      %2593 = vmatmul.f32.gmra.mxu0 %v1207
      %v2594 = vpop.f32.mrf.mxu0
      %v2595 = vadd.f32 0.0, %v2594
      %2596 = vmatmul.f32.gmra.mxu0 %v1210
      %v2597 = vpop.f32.mrf.mxu0
      %v2598 = vadd.f32 0.0, %v2597
      %2599 = vmatmul.f32.gmra.mxu0 %v1213
      %v2600 = vpop.f32.mrf.mxu0
      %v2601 = vadd.f32 0.0, %v2600
      %2602 = vmatmul.f32.gmra.mxu0 %v1216
      %v2603 = vpop.f32.mrf.mxu0
      %v2604 = vadd.f32 0.0, %v2603
      %2605 = vmatmul.f32.gmra.mxu0 %v1219
      %v2606 = vpop.f32.mrf.mxu0
      %v2607 = vadd.f32 0.0, %v2606
      %2608 = vmatmul.f32.gmra.mxu0 %v1222
      %v2609 = vpop.f32.mrf.mxu0
      %v2610 = vadd.f32 0.0, %v2609
      %2611 = vmatmul.f32.gmra.mxu0 %v1225
      %v2612 = vpop.f32.mrf.mxu0
      %v2613 = vadd.f32 0.0, %v2612
      %2614 = vmatmul.f32.gmra.mxu0 %v1228
      %v2615 = vpop.f32.mrf.mxu0
      %v2616 = vadd.f32 0.0, %v2615
      %2617 = vmatmul.f32.gmra.mxu0 %v1231
      %v2618 = vpop.f32.mrf.mxu0
      %v2619 = vadd.f32 0.0, %v2618
      %2620 = vmatmul.f32.gmra.mxu0 %v1234
      %v2621 = vpop.f32.mrf.mxu0
      %v2622 = vadd.f32 0.0, %v2621
      %2623 = vmatmul.f32.gmra.mxu0 %v1237
      %v2624 = vpop.f32.mrf.mxu0
      %v2625 = vadd.f32 0.0, %v2624
      %2626 = vmatmul.f32.gmra.mxu0 %v1240
      %v2627 = vpop.f32.mrf.mxu0
      %v2628 = vadd.f32 0.0, %v2627
      %2629 = vmatmul.f32.gmra.mxu0 %v1243
      %v2630 = vpop.f32.mrf.mxu0
      %v2631 = vadd.f32 0.0, %v2630
      %2632 = vmatmul.f32.gmra.mxu0 %v1246
      %v2633 = vpop.f32.mrf.mxu0
      %v2634 = vadd.f32 0.0, %v2633
      %2635 = vmatmul.f32.gmra.mxu0 %v1249
      %v2636 = vpop.f32.mrf.mxu0
      %v2637 = vadd.f32 0.0, %v2636
      %2638 = vmatmul.f32.gmra.mxu0 %v1252
      %v2639 = vpop.f32.mrf.mxu0
      %v2640 = vadd.f32 0.0, %v2639
      %2641 = vmatmul.f32.gmra.mxu0 %v1255
      %v2642 = vpop.f32.mrf.mxu0
      %v2643 = vadd.f32 0.0, %v2642
      %2644 = vmatmul.f32.gmra.mxu0 %v1258
      %v2645 = vpop.f32.mrf.mxu0
      %v2646 = vadd.f32 0.0, %v2645
      %2647 = vmatmul.f32.gmra.mxu0 %v1261
      %v2648 = vpop.f32.mrf.mxu0
      %v2649 = vadd.f32 0.0, %v2648
      %2650 = vdwg.mxu0
      %v2652 = vsel %vm590, %v2532, 0
      %2654 = vmatpush.msra.mxu0 0.0
      %2655 = vmatpush.msra.mxu0 0.0
      %2656 = vmatpush.msra.mxu0 0.0
      %2657 = vmatpush.msra.mxu0 0.0
      %2658 = vmatpush.msra.mxu0 0.0
      %2659 = vmatpush.msra.mxu0 0.0
      %2660 = vmatpush.msra.mxu0 0.0
      %2661 = vmatpush.msra.mxu0 0.0
      %2662 = vmatpush.msra.mxu0 0.0
      %2663 = vmatpush.msra.mxu0 0.0
      %2664 = vmatpush.msra.mxu0 0.0
      %2665 = vmatpush.msra.mxu0 0.0
      %2666 = vmatpush.msra.mxu0 0.0
      %2667 = vmatpush.msra.mxu0 0.0
      %2668 = vmatpush.msra.mxu0 0.0
      %2669 = vmatpush.msra.mxu0 %v2652
      %2670 = vmatmul.f32.gmra.mxu0 %v922
      %v2671 = vpop.f32.mrf.mxu0
      %v2672 = vadd.f32 %v2556, %v2671
      %2673 = vmatmul.f32.gmra.mxu0 %v925
      %v2674 = vpop.f32.mrf.mxu0
      %v2675 = vadd.f32 %v2559, %v2674
      %2676 = vmatmul.f32.gmra.mxu0 %v928
      %v2677 = vpop.f32.mrf.mxu0
      %v2678 = vadd.f32 %v2562, %v2677
      %2679 = vmatmul.f32.gmra.mxu0 %v931
      %v2680 = vpop.f32.mrf.mxu0
      %v2681 = vadd.f32 %v2565, %v2680
      %2682 = vmatmul.f32.gmra.mxu0 %v934
      %v2683 = vpop.f32.mrf.mxu0
      %v2684 = vadd.f32 %v2568, %v2683
      %2685 = vmatmul.f32.gmra.mxu0 %v937
      %v2686 = vpop.f32.mrf.mxu0
      %v2687 = vadd.f32 %v2571, %v2686
      %2688 = vmatmul.f32.gmra.mxu0 %v940
      %v2689 = vpop.f32.mrf.mxu0
      %v2690 = vadd.f32 %v2574, %v2689
      %2691 = vmatmul.f32.gmra.mxu0 %v943
      %v2692 = vpop.f32.mrf.mxu0
      %v2693 = vadd.f32 %v2577, %v2692
      %2694 = vmatmul.f32.gmra.mxu0 %v946
      %v2695 = vpop.f32.mrf.mxu0
      %v2696 = vadd.f32 %v2580, %v2695
      %2697 = vmatmul.f32.gmra.mxu0 %v949
      %v2698 = vpop.f32.mrf.mxu0
      %v2699 = vadd.f32 %v2583, %v2698
      %2700 = vmatmul.f32.gmra.mxu0 %v952
      %v2701 = vpop.f32.mrf.mxu0
      %v2702 = vadd.f32 %v2586, %v2701
      %2703 = vmatmul.f32.gmra.mxu0 %v955
      %v2704 = vpop.f32.mrf.mxu0
      %v2705 = vadd.f32 %v2589, %v2704
      %2706 = vmatmul.f32.gmra.mxu0 %v958
      %v2707 = vpop.f32.mrf.mxu0
      %v2708 = vadd.f32 %v2592, %v2707
      %2709 = vmatmul.f32.gmra.mxu0 %v961
      %v2710 = vpop.f32.mrf.mxu0
      %v2711 = vadd.f32 %v2595, %v2710
      %2712 = vmatmul.f32.gmra.mxu0 %v964
      %v2713 = vpop.f32.mrf.mxu0
      %v2714 = vadd.f32 %v2598, %v2713
      %2715 = vmatmul.f32.gmra.mxu0 %v967
      %v2716 = vpop.f32.mrf.mxu0
      %v2717 = vadd.f32 %v2601, %v2716
      %2718 = vmatmul.f32.gmra.mxu0 %v970
      %v2719 = vpop.f32.mrf.mxu0
      %v2720 = vadd.f32 %v2604, %v2719
      %2721 = vmatmul.f32.gmra.mxu0 %v973
      %v2722 = vpop.f32.mrf.mxu0
      %v2723 = vadd.f32 %v2607, %v2722
      %2724 = vmatmul.f32.gmra.mxu0 %v976
      %v2725 = vpop.f32.mrf.mxu0
      %v2726 = vadd.f32 %v2610, %v2725
      %2727 = vmatmul.f32.gmra.mxu0 %v979
      %v2728 = vpop.f32.mrf.mxu0
      %v2729 = vadd.f32 %v2613, %v2728
      %2730 = vmatmul.f32.gmra.mxu0 %v982
      %v2731 = vpop.f32.mrf.mxu0
      %v2732 = vadd.f32 %v2616, %v2731
      %2733 = vmatmul.f32.gmra.mxu0 %v985
      %v2734 = vpop.f32.mrf.mxu0
      %v2735 = vadd.f32 %v2619, %v2734
      %2736 = vmatmul.f32.gmra.mxu0 %v988
      %v2737 = vpop.f32.mrf.mxu0
      %v2738 = vadd.f32 %v2622, %v2737
      %2739 = vmatmul.f32.gmra.mxu0 %v991
      %v2740 = vpop.f32.mrf.mxu0
      %v2741 = vadd.f32 %v2625, %v2740
      %2742 = vmatmul.f32.gmra.mxu0 %v994
      %v2743 = vpop.f32.mrf.mxu0
      %v2744 = vadd.f32 %v2628, %v2743
      %2745 = vmatmul.f32.gmra.mxu0 %v997
      %v2746 = vpop.f32.mrf.mxu0
      %v2747 = vadd.f32 %v2631, %v2746
      %2748 = vmatmul.f32.gmra.mxu0 %v1000
      %v2749 = vpop.f32.mrf.mxu0
      %v2750 = vadd.f32 %v2634, %v2749
      %2751 = vmatmul.f32.gmra.mxu0 %v1003
      %v2752 = vpop.f32.mrf.mxu0
      %v2753 = vadd.f32 %v2637, %v2752
      %2754 = vmatmul.f32.gmra.mxu0 %v1006
      %v2755 = vpop.f32.mrf.mxu0
      %v2756 = vadd.f32 %v2640, %v2755
      %2757 = vmatmul.f32.gmra.mxu0 %v1009
      %v2758 = vpop.f32.mrf.mxu0
      %v2759 = vadd.f32 %v2643, %v2758
      %2760 = vmatmul.f32.gmra.mxu0 %v1012
      %v2761 = vpop.f32.mrf.mxu0
      %v2762 = vadd.f32 %v2646, %v2761
      %2763 = vmatmul.f32.gmra.mxu0 %v1015
      %v2764 = vpop.f32.mrf.mxu0
      %v2765 = vadd.f32 %v2649, %v2764
      %2766 = vdwg.mxu0
      %s2767 = scalar_lea.vmem %s1, 40
      %v2768 = vld [vmem:[%s2767] sm:$0xf]
      %v2770 = vsel %vm493, %v392, 0
      %v2773 = vsel %vm493, %v393, 0
      %v2776 = vsel %vm493, %v394, 0
      %v2779 = vsel %vm493, %v395, 0
      %v2782 = vsel %vm493, %v396, 0
      %v2785 = vsel %vm493, %v397, 0
      %v2788 = vsel %vm493, %v398, 0
      %v2791 = vsel %vm493, %v399, 0
      %v2794 = vsel %vm493, %v400, 0
      %v2797 = vsel %vm493, %v401, 0
      %v2800 = vsel %vm493, %v402, 0
      %v2803 = vsel %vm493, %v403, 0
      %v2806 = vsel %vm493, %v404, 0
      %v2809 = vsel %vm493, %v405, 0
      %v2812 = vsel %vm493, %v406, 0
      %v2815 = vsel %vm493, %v407, 0
      %v2818 = vsel %vm493, %v408, 0
      %v2821 = vsel %vm493, %v409, 0
      %v2824 = vsel %vm493, %v410, 0
      %v2827 = vsel %vm493, %v411, 0
      %v2830 = vsel %vm493, %v412, 0
      %v2833 = vsel %vm493, %v413, 0
      %v2836 = vsel %vm493, %v414, 0
      %v2839 = vsel %vm493, %v415, 0
      %v2842 = vsel %vm493, %v416, 0
      %v2845 = vsel %vm493, %v417, 0
      %v2848 = vsel %vm493, %v418, 0
      %v2851 = vsel %vm493, %v419, 0
      %v2854 = vsel %vm493, %v420, 0
      %v2857 = vsel %vm493, %v421, 0
      %v2860 = vsel %vm493, %v422, 0
      %v2863 = vsel %vm493, %v423, 0
      %v2866 = vsel %vm590, %v2768, 0
      %2868 = vmatpush.msra.mxu0 0.0
      %2869 = vmatpush.msra.mxu0 0.0
      %2870 = vmatpush.msra.mxu0 0.0
      %2871 = vmatpush.msra.mxu0 0.0
      %2872 = vmatpush.msra.mxu0 0.0
      %2873 = vmatpush.msra.mxu0 0.0
      %2874 = vmatpush.msra.mxu0 0.0
      %2875 = vmatpush.msra.mxu0 0.0
      %2876 = vmatpush.msra.mxu0 0.0
      %2877 = vmatpush.msra.mxu0 0.0
      %2878 = vmatpush.msra.mxu0 0.0
      %2879 = vmatpush.msra.mxu0 0.0
      %2880 = vmatpush.msra.mxu0 0.0
      %2881 = vmatpush.msra.mxu0 0.0
      %2882 = vmatpush.msra.mxu0 0.0
      %2883 = vmatpush.msra.mxu0 %v2866
      %2884 = vmatmul.f32.gmra.mxu0 %v2770
      %v2885 = vpop.f32.mrf.mxu0
      %v2886 = vadd.f32 0.0, %v2885
      %2887 = vmatmul.f32.gmra.mxu0 %v2773
      %v2888 = vpop.f32.mrf.mxu0
      %v2889 = vadd.f32 0.0, %v2888
      %2890 = vmatmul.f32.gmra.mxu0 %v2776
      %v2891 = vpop.f32.mrf.mxu0
      %v2892 = vadd.f32 0.0, %v2891
      %2893 = vmatmul.f32.gmra.mxu0 %v2779
      %v2894 = vpop.f32.mrf.mxu0
      %v2895 = vadd.f32 0.0, %v2894
      %2896 = vmatmul.f32.gmra.mxu0 %v2782
      %v2897 = vpop.f32.mrf.mxu0
      %v2898 = vadd.f32 0.0, %v2897
      %2899 = vmatmul.f32.gmra.mxu0 %v2785
      %v2900 = vpop.f32.mrf.mxu0
      %v2901 = vadd.f32 0.0, %v2900
      %2902 = vmatmul.f32.gmra.mxu0 %v2788
      %v2903 = vpop.f32.mrf.mxu0
      %v2904 = vadd.f32 0.0, %v2903
      %2905 = vmatmul.f32.gmra.mxu0 %v2791
      %v2906 = vpop.f32.mrf.mxu0
      %v2907 = vadd.f32 0.0, %v2906
      %2908 = vmatmul.f32.gmra.mxu0 %v2794
      %v2909 = vpop.f32.mrf.mxu0
      %v2910 = vadd.f32 0.0, %v2909
      %2911 = vmatmul.f32.gmra.mxu0 %v2797
      %v2912 = vpop.f32.mrf.mxu0
      %v2913 = vadd.f32 0.0, %v2912
      %2914 = vmatmul.f32.gmra.mxu0 %v2800
      %v2915 = vpop.f32.mrf.mxu0
      %v2916 = vadd.f32 0.0, %v2915
      %2917 = vmatmul.f32.gmra.mxu0 %v2803
      %v2918 = vpop.f32.mrf.mxu0
      %v2919 = vadd.f32 0.0, %v2918
      %2920 = vmatmul.f32.gmra.mxu0 %v2806
      %v2921 = vpop.f32.mrf.mxu0
      %v2922 = vadd.f32 0.0, %v2921
      %2923 = vmatmul.f32.gmra.mxu0 %v2809
      %v2924 = vpop.f32.mrf.mxu0
      %v2925 = vadd.f32 0.0, %v2924
      %2926 = vmatmul.f32.gmra.mxu0 %v2812
      %v2927 = vpop.f32.mrf.mxu0
      %v2928 = vadd.f32 0.0, %v2927
      %2929 = vmatmul.f32.gmra.mxu0 %v2815
      %v2930 = vpop.f32.mrf.mxu0
      %v2931 = vadd.f32 0.0, %v2930
      %2932 = vmatmul.f32.gmra.mxu0 %v2818
      %v2933 = vpop.f32.mrf.mxu0
      %v2934 = vadd.f32 0.0, %v2933
      %2935 = vmatmul.f32.gmra.mxu0 %v2821
      %v2936 = vpop.f32.mrf.mxu0
      %v2937 = vadd.f32 0.0, %v2936
      %2938 = vmatmul.f32.gmra.mxu0 %v2824
      %v2939 = vpop.f32.mrf.mxu0
      %v2940 = vadd.f32 0.0, %v2939
      %2941 = vmatmul.f32.gmra.mxu0 %v2827
      %v2942 = vpop.f32.mrf.mxu0
      %v2943 = vadd.f32 0.0, %v2942
      %2944 = vmatmul.f32.gmra.mxu0 %v2830
      %v2945 = vpop.f32.mrf.mxu0
      %v2946 = vadd.f32 0.0, %v2945
      %2947 = vmatmul.f32.gmra.mxu0 %v2833
      %v2948 = vpop.f32.mrf.mxu0
      %v2949 = vadd.f32 0.0, %v2948
      %2950 = vmatmul.f32.gmra.mxu0 %v2836
      %v2951 = vpop.f32.mrf.mxu0
      %v2952 = vadd.f32 0.0, %v2951
      %2953 = vmatmul.f32.gmra.mxu0 %v2839
      %v2954 = vpop.f32.mrf.mxu0
      %v2955 = vadd.f32 0.0, %v2954
      %2956 = vmatmul.f32.gmra.mxu0 %v2842
      %v2957 = vpop.f32.mrf.mxu0
      %v2958 = vadd.f32 0.0, %v2957
      %2959 = vmatmul.f32.gmra.mxu0 %v2845
      %v2960 = vpop.f32.mrf.mxu0
      %v2961 = vadd.f32 0.0, %v2960
      %2962 = vmatmul.f32.gmra.mxu0 %v2848
      %v2963 = vpop.f32.mrf.mxu0
      %v2964 = vadd.f32 0.0, %v2963
      %2965 = vmatmul.f32.gmra.mxu0 %v2851
      %v2966 = vpop.f32.mrf.mxu0
      %v2967 = vadd.f32 0.0, %v2966
      %2968 = vmatmul.f32.gmra.mxu0 %v2854
      %v2969 = vpop.f32.mrf.mxu0
      %v2970 = vadd.f32 0.0, %v2969
      %2971 = vmatmul.f32.gmra.mxu0 %v2857
      %v2972 = vpop.f32.mrf.mxu0
      %v2973 = vadd.f32 0.0, %v2972
      %2974 = vmatmul.f32.gmra.mxu0 %v2860
      %v2975 = vpop.f32.mrf.mxu0
      %v2976 = vadd.f32 0.0, %v2975
      %2977 = vmatmul.f32.gmra.mxu0 %v2863
      %v2978 = vpop.f32.mrf.mxu0
      %v2979 = vadd.f32 0.0, %v2978
      %2980 = vdwg.mxu0
      %v2981 = vadd.f32 %v2672, %v2886
      %v2982 = vadd.f32 %v2675, %v2889
      %v2983 = vadd.f32 %v2678, %v2892
      %v2984 = vadd.f32 %v2681, %v2895
      %v2985 = vadd.f32 %v2684, %v2898
      %v2986 = vadd.f32 %v2687, %v2901
      %v2987 = vadd.f32 %v2690, %v2904
      %v2988 = vadd.f32 %v2693, %v2907
      %v2989 = vadd.f32 %v2696, %v2910
      %v2990 = vadd.f32 %v2699, %v2913
      %v2991 = vadd.f32 %v2702, %v2916
      %v2992 = vadd.f32 %v2705, %v2919
      %v2993 = vadd.f32 %v2708, %v2922
      %v2994 = vadd.f32 %v2711, %v2925
      %v2995 = vadd.f32 %v2714, %v2928
      %v2996 = vadd.f32 %v2717, %v2931
      %v2997 = vadd.f32 %v2720, %v2934
      %v2998 = vadd.f32 %v2723, %v2937
      %v2999 = vadd.f32 %v2726, %v2940
      %v3000 = vadd.f32 %v2729, %v2943
      %v3001 = vadd.f32 %v2732, %v2946
      %v3002 = vadd.f32 %v2735, %v2949
      %v3003 = vadd.f32 %v2738, %v2952
      %v3004 = vadd.f32 %v2741, %v2955
      %v3005 = vadd.f32 %v2744, %v2958
      %v3006 = vadd.f32 %v2747, %v2961
      %v3007 = vadd.f32 %v2750, %v2964
      %v3008 = vadd.f32 %v2753, %v2967
      %v3009 = vadd.f32 %v2756, %v2970
      %v3010 = vadd.f32 %v2759, %v2973
      %v3011 = vadd.f32 %v2762, %v2976
      %v3012 = vadd.f32 %v2765, %v2979
      %s3013 = scalar_lea.vmem %s1, 44
      %v3014 = vld [vmem:[%s3013] sm:$0xf]
      %v3016 = vsel %vm493, %v424, 0
      %v3019 = vsel %vm493, %v425, 0
      %v3022 = vsel %vm493, %v426, 0
      %v3025 = vsel %vm493, %v427, 0
      %v3028 = vsel %vm493, %v428, 0
      %v3031 = vsel %vm493, %v429, 0
      %v3034 = vsel %vm493, %v430, 0
      %v3037 = vsel %vm493, %v431, 0
      %v3040 = vsel %vm493, %v432, 0
      %v3043 = vsel %vm493, %v433, 0
      %v3046 = vsel %vm493, %v434, 0
      %v3049 = vsel %vm493, %v435, 0
      %v3052 = vsel %vm493, %v436, 0
      %v3055 = vsel %vm493, %v437, 0
      %v3058 = vsel %vm493, %v438, 0
      %v3061 = vsel %vm493, %v439, 0
      %v3064 = vsel %vm493, %v440, 0
      %v3067 = vsel %vm493, %v441, 0
      %v3070 = vsel %vm493, %v442, 0
      %v3073 = vsel %vm493, %v443, 0
      %v3076 = vsel %vm493, %v444, 0
      %v3079 = vsel %vm493, %v445, 0
      %v3082 = vsel %vm493, %v446, 0
      %v3085 = vsel %vm493, %v447, 0
      %v3088 = vsel %vm493, %v448, 0
      %v3091 = vsel %vm493, %v449, 0
      %v3094 = vsel %vm493, %v450, 0
      %v3097 = vsel %vm493, %v451, 0
      %v3100 = vsel %vm493, %v452, 0
      %v3103 = vsel %vm493, %v453, 0
      %v3106 = vsel %vm493, %v454, 0
      %v3109 = vsel %vm493, %v455, 0
      %v3112 = vsel %vm590, %v3014, 0
      %3114 = vmatpush.msra.mxu0 0.0
      %3115 = vmatpush.msra.mxu0 0.0
      %3116 = vmatpush.msra.mxu0 0.0
      %3117 = vmatpush.msra.mxu0 0.0
      %3118 = vmatpush.msra.mxu0 0.0
      %3119 = vmatpush.msra.mxu0 0.0
      %3120 = vmatpush.msra.mxu0 0.0
      %3121 = vmatpush.msra.mxu0 0.0
      %3122 = vmatpush.msra.mxu0 0.0
      %3123 = vmatpush.msra.mxu0 0.0
      %3124 = vmatpush.msra.mxu0 0.0
      %3125 = vmatpush.msra.mxu0 0.0
      %3126 = vmatpush.msra.mxu0 0.0
      %3127 = vmatpush.msra.mxu0 0.0
      %3128 = vmatpush.msra.mxu0 0.0
      %3129 = vmatpush.msra.mxu0 %v3112
      %3130 = vmatmul.f32.gmra.mxu0 %v3016
      %v3131 = vpop.f32.mrf.mxu0
      %v3132 = vadd.f32 0.0, %v3131
      %3133 = vmatmul.f32.gmra.mxu0 %v3019
      %v3134 = vpop.f32.mrf.mxu0
      %v3135 = vadd.f32 0.0, %v3134
      %3136 = vmatmul.f32.gmra.mxu0 %v3022
      %v3137 = vpop.f32.mrf.mxu0
      %v3138 = vadd.f32 0.0, %v3137
      %3139 = vmatmul.f32.gmra.mxu0 %v3025
      %v3140 = vpop.f32.mrf.mxu0
      %v3141 = vadd.f32 0.0, %v3140
      %3142 = vmatmul.f32.gmra.mxu0 %v3028
      %v3143 = vpop.f32.mrf.mxu0
      %v3144 = vadd.f32 0.0, %v3143
      %3145 = vmatmul.f32.gmra.mxu0 %v3031
      %v3146 = vpop.f32.mrf.mxu0
      %v3147 = vadd.f32 0.0, %v3146
      %3148 = vmatmul.f32.gmra.mxu0 %v3034
      %v3149 = vpop.f32.mrf.mxu0
      %v3150 = vadd.f32 0.0, %v3149
      %3151 = vmatmul.f32.gmra.mxu0 %v3037
      %v3152 = vpop.f32.mrf.mxu0
      %v3153 = vadd.f32 0.0, %v3152
      %3154 = vmatmul.f32.gmra.mxu0 %v3040
      %v3155 = vpop.f32.mrf.mxu0
      %v3156 = vadd.f32 0.0, %v3155
      %3157 = vmatmul.f32.gmra.mxu0 %v3043
      %v3158 = vpop.f32.mrf.mxu0
      %v3159 = vadd.f32 0.0, %v3158
      %3160 = vmatmul.f32.gmra.mxu0 %v3046
      %v3161 = vpop.f32.mrf.mxu0
      %v3162 = vadd.f32 0.0, %v3161
      %3163 = vmatmul.f32.gmra.mxu0 %v3049
      %v3164 = vpop.f32.mrf.mxu0
      %v3165 = vadd.f32 0.0, %v3164
      %3166 = vmatmul.f32.gmra.mxu0 %v3052
      %v3167 = vpop.f32.mrf.mxu0
      %v3168 = vadd.f32 0.0, %v3167
      %3169 = vmatmul.f32.gmra.mxu0 %v3055
      %v3170 = vpop.f32.mrf.mxu0
      %v3171 = vadd.f32 0.0, %v3170
      %3172 = vmatmul.f32.gmra.mxu0 %v3058
      %v3173 = vpop.f32.mrf.mxu0
      %v3174 = vadd.f32 0.0, %v3173
      %3175 = vmatmul.f32.gmra.mxu0 %v3061
      %v3176 = vpop.f32.mrf.mxu0
      %v3177 = vadd.f32 0.0, %v3176
      %3178 = vmatmul.f32.gmra.mxu0 %v3064
      %v3179 = vpop.f32.mrf.mxu0
      %v3180 = vadd.f32 0.0, %v3179
      %3181 = vmatmul.f32.gmra.mxu0 %v3067
      %v3182 = vpop.f32.mrf.mxu0
      %v3183 = vadd.f32 0.0, %v3182
      %3184 = vmatmul.f32.gmra.mxu0 %v3070
      %v3185 = vpop.f32.mrf.mxu0
      %v3186 = vadd.f32 0.0, %v3185
      %3187 = vmatmul.f32.gmra.mxu0 %v3073
      %v3188 = vpop.f32.mrf.mxu0
      %v3189 = vadd.f32 0.0, %v3188
      %3190 = vmatmul.f32.gmra.mxu0 %v3076
      %v3191 = vpop.f32.mrf.mxu0
      %v3192 = vadd.f32 0.0, %v3191
      %3193 = vmatmul.f32.gmra.mxu0 %v3079
      %v3194 = vpop.f32.mrf.mxu0
      %v3195 = vadd.f32 0.0, %v3194
      %3196 = vmatmul.f32.gmra.mxu0 %v3082
      %v3197 = vpop.f32.mrf.mxu0
      %v3198 = vadd.f32 0.0, %v3197
      %3199 = vmatmul.f32.gmra.mxu0 %v3085
      %v3200 = vpop.f32.mrf.mxu0
      %v3201 = vadd.f32 0.0, %v3200
      %3202 = vmatmul.f32.gmra.mxu0 %v3088
      %v3203 = vpop.f32.mrf.mxu0
      %v3204 = vadd.f32 0.0, %v3203
      %3205 = vmatmul.f32.gmra.mxu0 %v3091
      %v3206 = vpop.f32.mrf.mxu0
      %v3207 = vadd.f32 0.0, %v3206
      %3208 = vmatmul.f32.gmra.mxu0 %v3094
      %v3209 = vpop.f32.mrf.mxu0
      %v3210 = vadd.f32 0.0, %v3209
      %3211 = vmatmul.f32.gmra.mxu0 %v3097
      %v3212 = vpop.f32.mrf.mxu0
      %v3213 = vadd.f32 0.0, %v3212
      %3214 = vmatmul.f32.gmra.mxu0 %v3100
      %v3215 = vpop.f32.mrf.mxu0
      %v3216 = vadd.f32 0.0, %v3215
      %3217 = vmatmul.f32.gmra.mxu0 %v3103
      %v3218 = vpop.f32.mrf.mxu0
      %v3219 = vadd.f32 0.0, %v3218
      %3220 = vmatmul.f32.gmra.mxu0 %v3106
      %v3221 = vpop.f32.mrf.mxu0
      %v3222 = vadd.f32 0.0, %v3221
      %3223 = vmatmul.f32.gmra.mxu0 %v3109
      %v3224 = vpop.f32.mrf.mxu0
      %v3225 = vadd.f32 0.0, %v3224
      %3226 = vdwg.mxu0
      %v3227 = vadd.f32 %v2981, %v3132
      %v3228 = vadd.f32 %v2982, %v3135
      %v3229 = vadd.f32 %v2983, %v3138
      %v3230 = vadd.f32 %v2984, %v3141
      %v3231 = vadd.f32 %v2985, %v3144
      %v3232 = vadd.f32 %v2986, %v3147
      %v3233 = vadd.f32 %v2987, %v3150
      %v3234 = vadd.f32 %v2988, %v3153
      %v3235 = vadd.f32 %v2989, %v3156
      %v3236 = vadd.f32 %v2990, %v3159
      %v3237 = vadd.f32 %v2991, %v3162
      %v3238 = vadd.f32 %v2992, %v3165
      %v3239 = vadd.f32 %v2993, %v3168
      %v3240 = vadd.f32 %v2994, %v3171
      %v3241 = vadd.f32 %v2995, %v3174
      %v3242 = vadd.f32 %v2996, %v3177
      %v3243 = vadd.f32 %v2997, %v3180
      %v3244 = vadd.f32 %v2998, %v3183
      %v3245 = vadd.f32 %v2999, %v3186
      %v3246 = vadd.f32 %v3000, %v3189
      %v3247 = vadd.f32 %v3001, %v3192
      %v3248 = vadd.f32 %v3002, %v3195
      %v3249 = vadd.f32 %v3003, %v3198
      %v3250 = vadd.f32 %v3004, %v3201
      %v3251 = vadd.f32 %v3005, %v3204
      %v3252 = vadd.f32 %v3006, %v3207
      %v3253 = vadd.f32 %v3007, %v3210
      %v3254 = vadd.f32 %v3008, %v3213
      %v3255 = vadd.f32 %v3009, %v3216
      %v3256 = vadd.f32 %v3010, %v3219
      %v3257 = vadd.f32 %v3011, %v3222
      %v3258 = vadd.f32 %v3012, %v3225
      %v3259 = vmul.f32 %v3227, %v1412
      %v3260 = vmul.f32 %v3228, %v1412
      %v3261 = vmul.f32 %v3229, %v1412
      %v3262 = vmul.f32 %v3230, %v1412
      %v3263 = vmul.f32 %v3231, %v1412
      %v3264 = vmul.f32 %v3232, %v1412
      %v3265 = vmul.f32 %v3233, %v1412
      %v3266 = vmul.f32 %v3234, %v1412
      %v3267 = vmul.f32 %v3235, %v1412
      %v3268 = vmul.f32 %v3236, %v1412
      %v3269 = vmul.f32 %v3237, %v1412
      %v3270 = vmul.f32 %v3238, %v1412
      %v3271 = vmul.f32 %v3239, %v1412
      %v3272 = vmul.f32 %v3240, %v1412
      %v3273 = vmul.f32 %v3241, %v1412
      %v3274 = vmul.f32 %v3242, %v1412
      %v3275 = vmul.f32 %v3243, %v1412
      %v3276 = vmul.f32 %v3244, %v1412
      %v3277 = vmul.f32 %v3245, %v1412
      %v3278 = vmul.f32 %v3246, %v1412
      %v3279 = vmul.f32 %v3247, %v1412
      %v3280 = vmul.f32 %v3248, %v1412
      %v3281 = vmul.f32 %v3249, %v1412
      %v3282 = vmul.f32 %v3250, %v1412
      %v3283 = vmul.f32 %v3251, %v1412
      %v3284 = vmul.f32 %v3252, %v1412
      %v3285 = vmul.f32 %v3253, %v1412
      %v3286 = vmul.f32 %v3254, %v1412
      %v3287 = vmul.f32 %v3255, %v1412
      %v3288 = vmul.f32 %v3256, %v1412
      %v3289 = vmul.f32 %v3257, %v1412
      %v3290 = vmul.f32 %v3258, %v1412
      %v3291 = vadd.f32 %v3259, %v1447
      %v3292 = vadd.f32 %v3260, %v1447
      %v3293 = vadd.f32 %v3261, %v1447
      %v3294 = vadd.f32 %v3262, %v1447
      %v3295 = vadd.f32 %v3263, %v1447
      %v3296 = vadd.f32 %v3264, %v1447
      %v3297 = vadd.f32 %v3265, %v1447
      %v3298 = vadd.f32 %v3266, %v1447
      %v3299 = vadd.f32 %v3267, %v1447
      %v3300 = vadd.f32 %v3268, %v1447
      %v3301 = vadd.f32 %v3269, %v1447
      %v3302 = vadd.f32 %v3270, %v1447
      %v3303 = vadd.f32 %v3271, %v1447
      %v3304 = vadd.f32 %v3272, %v1447
      %v3305 = vadd.f32 %v3273, %v1447
      %v3306 = vadd.f32 %v3274, %v1447
      %v3307 = vadd.f32 %v3275, %v1447
      %v3308 = vadd.f32 %v3276, %v1447
      %v3309 = vadd.f32 %v3277, %v1447
      %v3310 = vadd.f32 %v3278, %v1447
      %v3311 = vadd.f32 %v3279, %v1447
      %v3312 = vadd.f32 %v3280, %v1447
      %v3313 = vadd.f32 %v3281, %v1447
      %v3314 = vadd.f32 %v3282, %v1447
      %v3315 = vadd.f32 %v3283, %v1447
      %v3316 = vadd.f32 %v3284, %v1447
      %v3317 = vadd.f32 %v3285, %v1447
      %v3318 = vadd.f32 %v3286, %v1447
      %v3319 = vadd.f32 %v3287, %v1447
      %v3320 = vadd.f32 %v3288, %v1447
      %v3321 = vadd.f32 %v3289, %v1447
      %v3322 = vadd.f32 %v3290, %v1447
      %v3323 = vmax.f32 %v3291, 0.0
      %v3324 = vmax.f32 %v3292, 0.0
      %v3325 = vmax.f32 %v3293, 0.0
      %v3326 = vmax.f32 %v3294, 0.0
      %v3327 = vmax.f32 %v3295, 0.0
      %v3328 = vmax.f32 %v3296, 0.0
      %v3329 = vmax.f32 %v3297, 0.0
      %v3330 = vmax.f32 %v3298, 0.0
      %v3331 = vmax.f32 %v3299, 0.0
      %v3332 = vmax.f32 %v3300, 0.0
      %v3333 = vmax.f32 %v3301, 0.0
      %v3334 = vmax.f32 %v3302, 0.0
      %v3335 = vmax.f32 %v3303, 0.0
      %v3336 = vmax.f32 %v3304, 0.0
      %v3337 = vmax.f32 %v3305, 0.0
      %v3338 = vmax.f32 %v3306, 0.0
      %v3339 = vmax.f32 %v3307, 0.0
      %v3340 = vmax.f32 %v3308, 0.0
      %v3341 = vmax.f32 %v3309, 0.0
      %v3342 = vmax.f32 %v3310, 0.0
      %v3343 = vmax.f32 %v3311, 0.0
      %v3344 = vmax.f32 %v3312, 0.0
      %v3345 = vmax.f32 %v3313, 0.0
      %v3346 = vmax.f32 %v3314, 0.0
      %v3347 = vmax.f32 %v3315, 0.0
      %v3348 = vmax.f32 %v3316, 0.0
      %v3349 = vmax.f32 %v3317, 0.0
      %v3350 = vmax.f32 %v3318, 0.0
      %v3351 = vmax.f32 %v3319, 0.0
      %v3352 = vmax.f32 %v3320, 0.0
      %v3353 = vmax.f32 %v3321, 0.0
      %v3354 = vmax.f32 %v3322, 0.0
      %s3355 = scalar_lea.vmem %s197, 16
      %3356 = vst.msk [vmem:[%s3355] sm:$0xff] %vm1513, %v3323
      %3357 = vst.msk [vmem:[%s3355 + $0x8] sm:$0xff] %vm1513, %v3324
      %3358 = vst.msk [vmem:[%s3355 + $0x20] sm:$0xff] %vm1513, %v3325
      %3359 = vst.msk [vmem:[%s3355 + $0x28] sm:$0xff] %vm1513, %v3326
      %3360 = vst.msk [vmem:[%s3355 + $0x40] sm:$0xff] %vm1513, %v3327
      %3361 = vst.msk [vmem:[%s3355 + $0x48] sm:$0xff] %vm1513, %v3328
      %3362 = vst.msk [vmem:[%s3355 + $0x60] sm:$0xff] %vm1513, %v3329
      %3363 = vst.msk [vmem:[%s3355 + $0x68] sm:$0xff] %vm1513, %v3330
      %3364 = vst.msk [vmem:[%s3355 + $0x80] sm:$0xff] %vm1513, %v3331
      %3365 = vst.msk [vmem:[%s3355 + $0x88] sm:$0xff] %vm1513, %v3332
      %3366 = vst.msk [vmem:[%s3355 + $0xa0] sm:$0xff] %vm1513, %v3333
      %3367 = vst.msk [vmem:[%s3355 + $0xa8] sm:$0xff] %vm1513, %v3334
      %3368 = vst.msk [vmem:[%s3355 + $0xc0] sm:$0xff] %vm1513, %v3335
      %3369 = vst.msk [vmem:[%s3355 + $0xc8] sm:$0xff] %vm1513, %v3336
      %3370 = vst.msk [vmem:[%s3355 + $0xe0] sm:$0xff] %vm1513, %v3337
      %3371 = vst.msk [vmem:[%s3355 + $0xe8] sm:$0xff] %vm1513, %v3338
      %3372 = vst.msk [vmem:[%s3355 + $0x100] sm:$0xff] %vm1513, %v3339
      %3373 = vst.msk [vmem:[%s3355 + $0x108] sm:$0xff] %vm1513, %v3340
      %3374 = vst.msk [vmem:[%s3355 + $0x120] sm:$0xff] %vm1513, %v3341
      %3375 = vst.msk [vmem:[%s3355 + $0x128] sm:$0xff] %vm1513, %v3342
      %3376 = vst.msk [vmem:[%s3355 + $0x140] sm:$0xff] %vm1513, %v3343
      %3377 = vst.msk [vmem:[%s3355 + $0x148] sm:$0xff] %vm1513, %v3344
      %3378 = vst.msk [vmem:[%s3355 + $0x160] sm:$0xff] %vm1513, %v3345
      %3379 = vst.msk [vmem:[%s3355 + $0x168] sm:$0xff] %vm1513, %v3346
      %3380 = vst.msk [vmem:[%s3355 + $0x180] sm:$0xff] %vm1513, %v3347
      %3381 = vst.msk [vmem:[%s3355 + $0x188] sm:$0xff] %vm1513, %v3348
      %3382 = vst.msk [vmem:[%s3355 + $0x1a0] sm:$0xff] %vm1513, %v3349
      %3383 = vst.msk [vmem:[%s3355 + $0x1a8] sm:$0xff] %vm1513, %v3350
      %3384 = vst.msk [vmem:[%s3355 + $0x1c0] sm:$0xff] %vm1513, %v3351
      %3385 = vst.msk [vmem:[%s3355 + $0x1c8] sm:$0xff] %vm1513, %v3352
      %3386 = vst.msk [vmem:[%s3355 + $0x1e0] sm:$0xff] %vm1513, %v3353
      %3387 = vst.msk [vmem:[%s3355 + $0x1e8] sm:$0xff] %vm1513, %v3354
      %s3388 = scalar_lea.vmem %s1, 48
      %v3389 = vld [vmem:[%s3388] sm:$0xf]
      %s3390 = scalar_lea.vmem %s1, 52
      %v3391 = vld [vmem:[%s3390] sm:$0xf]
      %v3393 = vsel %vm590, %v3391, 0
      %3395 = vmatpush.msra.mxu0 0.0
      %3396 = vmatpush.msra.mxu0 0.0
      %3397 = vmatpush.msra.mxu0 0.0
      %3398 = vmatpush.msra.mxu0 0.0
      %3399 = vmatpush.msra.mxu0 0.0
      %3400 = vmatpush.msra.mxu0 0.0
      %3401 = vmatpush.msra.mxu0 0.0
      %3402 = vmatpush.msra.mxu0 0.0
      %3403 = vmatpush.msra.mxu0 0.0
      %3404 = vmatpush.msra.mxu0 0.0
      %3405 = vmatpush.msra.mxu0 0.0
      %3406 = vmatpush.msra.mxu0 0.0
      %3407 = vmatpush.msra.mxu0 0.0
      %3408 = vmatpush.msra.mxu0 0.0
      %3409 = vmatpush.msra.mxu0 0.0
      %3410 = vmatpush.msra.mxu0 %v3393
      %3411 = vmatmul.f32.gmra.mxu0 %v2031
      %v3412 = vpop.f32.mrf.mxu0
      %v3413 = vadd.f32 0.0, %v3412
      %3414 = vmatmul.f32.gmra.mxu0 %v2034
      %v3415 = vpop.f32.mrf.mxu0
      %v3416 = vadd.f32 0.0, %v3415
      %3417 = vmatmul.f32.gmra.mxu0 %v2037
      %v3418 = vpop.f32.mrf.mxu0
      %v3419 = vadd.f32 0.0, %v3418
      %3420 = vmatmul.f32.gmra.mxu0 %v2040
      %v3421 = vpop.f32.mrf.mxu0
      %v3422 = vadd.f32 0.0, %v3421
      %3423 = vmatmul.f32.gmra.mxu0 %v2043
      %v3424 = vpop.f32.mrf.mxu0
      %v3425 = vadd.f32 0.0, %v3424
      %3426 = vmatmul.f32.gmra.mxu0 %v2046
      %v3427 = vpop.f32.mrf.mxu0
      %v3428 = vadd.f32 0.0, %v3427
      %3429 = vmatmul.f32.gmra.mxu0 %v2049
      %v3430 = vpop.f32.mrf.mxu0
      %v3431 = vadd.f32 0.0, %v3430
      %3432 = vmatmul.f32.gmra.mxu0 %v2052
      %v3433 = vpop.f32.mrf.mxu0
      %v3434 = vadd.f32 0.0, %v3433
      %3435 = vmatmul.f32.gmra.mxu0 %v2055
      %v3436 = vpop.f32.mrf.mxu0
      %v3437 = vadd.f32 0.0, %v3436
      %3438 = vmatmul.f32.gmra.mxu0 %v2058
      %v3439 = vpop.f32.mrf.mxu0
      %v3440 = vadd.f32 0.0, %v3439
      %3441 = vmatmul.f32.gmra.mxu0 %v2061
      %v3442 = vpop.f32.mrf.mxu0
      %v3443 = vadd.f32 0.0, %v3442
      %3444 = vmatmul.f32.gmra.mxu0 %v2064
      %v3445 = vpop.f32.mrf.mxu0
      %v3446 = vadd.f32 0.0, %v3445
      %3447 = vmatmul.f32.gmra.mxu0 %v2067
      %v3448 = vpop.f32.mrf.mxu0
      %v3449 = vadd.f32 0.0, %v3448
      %3450 = vmatmul.f32.gmra.mxu0 %v2070
      %v3451 = vpop.f32.mrf.mxu0
      %v3452 = vadd.f32 0.0, %v3451
      %3453 = vmatmul.f32.gmra.mxu0 %v2073
      %v3454 = vpop.f32.mrf.mxu0
      %v3455 = vadd.f32 0.0, %v3454
      %3456 = vmatmul.f32.gmra.mxu0 %v2076
      %v3457 = vpop.f32.mrf.mxu0
      %v3458 = vadd.f32 0.0, %v3457
      %3459 = vmatmul.f32.gmra.mxu0 %v2079
      %v3460 = vpop.f32.mrf.mxu0
      %v3461 = vadd.f32 0.0, %v3460
      %3462 = vmatmul.f32.gmra.mxu0 %v2082
      %v3463 = vpop.f32.mrf.mxu0
      %v3464 = vadd.f32 0.0, %v3463
      %3465 = vmatmul.f32.gmra.mxu0 %v2085
      %v3466 = vpop.f32.mrf.mxu0
      %v3467 = vadd.f32 0.0, %v3466
      %3468 = vmatmul.f32.gmra.mxu0 %v2088
      %v3469 = vpop.f32.mrf.mxu0
      %v3470 = vadd.f32 0.0, %v3469
      %3471 = vmatmul.f32.gmra.mxu0 %v2091
      %v3472 = vpop.f32.mrf.mxu0
      %v3473 = vadd.f32 0.0, %v3472
      %3474 = vmatmul.f32.gmra.mxu0 %v2094
      %v3475 = vpop.f32.mrf.mxu0
      %v3476 = vadd.f32 0.0, %v3475
      %3477 = vmatmul.f32.gmra.mxu0 %v2097
      %v3478 = vpop.f32.mrf.mxu0
      %v3479 = vadd.f32 0.0, %v3478
      %3480 = vmatmul.f32.gmra.mxu0 %v2100
      %v3481 = vpop.f32.mrf.mxu0
      %v3482 = vadd.f32 0.0, %v3481
      %3483 = vmatmul.f32.gmra.mxu0 %v2103
      %v3484 = vpop.f32.mrf.mxu0
      %v3485 = vadd.f32 0.0, %v3484
      %3486 = vmatmul.f32.gmra.mxu0 %v2106
      %v3487 = vpop.f32.mrf.mxu0
      %v3488 = vadd.f32 0.0, %v3487
      %3489 = vmatmul.f32.gmra.mxu0 %v2109
      %v3490 = vpop.f32.mrf.mxu0
      %v3491 = vadd.f32 0.0, %v3490
      %3492 = vmatmul.f32.gmra.mxu0 %v2112
      %v3493 = vpop.f32.mrf.mxu0
      %v3494 = vadd.f32 0.0, %v3493
      %3495 = vmatmul.f32.gmra.mxu0 %v2115
      %v3496 = vpop.f32.mrf.mxu0
      %v3497 = vadd.f32 0.0, %v3496
      %3498 = vmatmul.f32.gmra.mxu0 %v2118
      %v3499 = vpop.f32.mrf.mxu0
      %v3500 = vadd.f32 0.0, %v3499
      %3501 = vmatmul.f32.gmra.mxu0 %v2121
      %v3502 = vpop.f32.mrf.mxu0
      %v3503 = vadd.f32 0.0, %v3502
      %3504 = vmatmul.f32.gmra.mxu0 %v2124
      %v3505 = vpop.f32.mrf.mxu0
      %v3506 = vadd.f32 0.0, %v3505
      %3507 = vdwg.mxu0
      %v3509 = vsel %vm590, %v3389, 0
      %3511 = vmatpush.msra.mxu0 0.0
      %3512 = vmatpush.msra.mxu0 0.0
      %3513 = vmatpush.msra.mxu0 0.0
      %3514 = vmatpush.msra.mxu0 0.0
      %3515 = vmatpush.msra.mxu0 0.0
      %3516 = vmatpush.msra.mxu0 0.0
      %3517 = vmatpush.msra.mxu0 0.0
      %3518 = vmatpush.msra.mxu0 0.0
      %3519 = vmatpush.msra.mxu0 0.0
      %3520 = vmatpush.msra.mxu0 0.0
      %3521 = vmatpush.msra.mxu0 0.0
      %3522 = vmatpush.msra.mxu0 0.0
      %3523 = vmatpush.msra.mxu0 0.0
      %3524 = vmatpush.msra.mxu0 0.0
      %3525 = vmatpush.msra.mxu0 0.0
      %3526 = vmatpush.msra.mxu0 %v3509
      %3527 = vmatmul.f32.gmra.mxu0 %v1168
      %v3528 = vpop.f32.mrf.mxu0
      %v3529 = vadd.f32 %v3413, %v3528
      %3530 = vmatmul.f32.gmra.mxu0 %v1171
      %v3531 = vpop.f32.mrf.mxu0
      %v3532 = vadd.f32 %v3416, %v3531
      %3533 = vmatmul.f32.gmra.mxu0 %v1174
      %v3534 = vpop.f32.mrf.mxu0
      %v3535 = vadd.f32 %v3419, %v3534
      %3536 = vmatmul.f32.gmra.mxu0 %v1177
      %v3537 = vpop.f32.mrf.mxu0
      %v3538 = vadd.f32 %v3422, %v3537
      %3539 = vmatmul.f32.gmra.mxu0 %v1180
      %v3540 = vpop.f32.mrf.mxu0
      %v3541 = vadd.f32 %v3425, %v3540
      %3542 = vmatmul.f32.gmra.mxu0 %v1183
      %v3543 = vpop.f32.mrf.mxu0
      %v3544 = vadd.f32 %v3428, %v3543
      %3545 = vmatmul.f32.gmra.mxu0 %v1186
      %v3546 = vpop.f32.mrf.mxu0
      %v3547 = vadd.f32 %v3431, %v3546
      %3548 = vmatmul.f32.gmra.mxu0 %v1189
      %v3549 = vpop.f32.mrf.mxu0
      %v3550 = vadd.f32 %v3434, %v3549
      %3551 = vmatmul.f32.gmra.mxu0 %v1192
      %v3552 = vpop.f32.mrf.mxu0
      %v3553 = vadd.f32 %v3437, %v3552
      %3554 = vmatmul.f32.gmra.mxu0 %v1195
      %v3555 = vpop.f32.mrf.mxu0
      %v3556 = vadd.f32 %v3440, %v3555
      %3557 = vmatmul.f32.gmra.mxu0 %v1198
      %v3558 = vpop.f32.mrf.mxu0
      %v3559 = vadd.f32 %v3443, %v3558
      %3560 = vmatmul.f32.gmra.mxu0 %v1201
      %v3561 = vpop.f32.mrf.mxu0
      %v3562 = vadd.f32 %v3446, %v3561
      %3563 = vmatmul.f32.gmra.mxu0 %v1204
      %v3564 = vpop.f32.mrf.mxu0
      %v3565 = vadd.f32 %v3449, %v3564
      %3566 = vmatmul.f32.gmra.mxu0 %v1207
      %v3567 = vpop.f32.mrf.mxu0
      %v3568 = vadd.f32 %v3452, %v3567
      %3569 = vmatmul.f32.gmra.mxu0 %v1210
      %v3570 = vpop.f32.mrf.mxu0
      %v3571 = vadd.f32 %v3455, %v3570
      %3572 = vmatmul.f32.gmra.mxu0 %v1213
      %v3573 = vpop.f32.mrf.mxu0
      %v3574 = vadd.f32 %v3458, %v3573
      %3575 = vmatmul.f32.gmra.mxu0 %v1216
      %v3576 = vpop.f32.mrf.mxu0
      %v3577 = vadd.f32 %v3461, %v3576
      %3578 = vmatmul.f32.gmra.mxu0 %v1219
      %v3579 = vpop.f32.mrf.mxu0
      %v3580 = vadd.f32 %v3464, %v3579
      %3581 = vmatmul.f32.gmra.mxu0 %v1222
      %v3582 = vpop.f32.mrf.mxu0
      %v3583 = vadd.f32 %v3467, %v3582
      %3584 = vmatmul.f32.gmra.mxu0 %v1225
      %v3585 = vpop.f32.mrf.mxu0
      %v3586 = vadd.f32 %v3470, %v3585
      %3587 = vmatmul.f32.gmra.mxu0 %v1228
      %v3588 = vpop.f32.mrf.mxu0
      %v3589 = vadd.f32 %v3473, %v3588
      %3590 = vmatmul.f32.gmra.mxu0 %v1231
      %v3591 = vpop.f32.mrf.mxu0
      %v3592 = vadd.f32 %v3476, %v3591
      %3593 = vmatmul.f32.gmra.mxu0 %v1234
      %v3594 = vpop.f32.mrf.mxu0
      %v3595 = vadd.f32 %v3479, %v3594
      %3596 = vmatmul.f32.gmra.mxu0 %v1237
      %v3597 = vpop.f32.mrf.mxu0
      %v3598 = vadd.f32 %v3482, %v3597
      %3599 = vmatmul.f32.gmra.mxu0 %v1240
      %v3600 = vpop.f32.mrf.mxu0
      %v3601 = vadd.f32 %v3485, %v3600
      %3602 = vmatmul.f32.gmra.mxu0 %v1243
      %v3603 = vpop.f32.mrf.mxu0
      %v3604 = vadd.f32 %v3488, %v3603
      %3605 = vmatmul.f32.gmra.mxu0 %v1246
      %v3606 = vpop.f32.mrf.mxu0
      %v3607 = vadd.f32 %v3491, %v3606
      %3608 = vmatmul.f32.gmra.mxu0 %v1249
      %v3609 = vpop.f32.mrf.mxu0
      %v3610 = vadd.f32 %v3494, %v3609
      %3611 = vmatmul.f32.gmra.mxu0 %v1252
      %v3612 = vpop.f32.mrf.mxu0
      %v3613 = vadd.f32 %v3497, %v3612
      %3614 = vmatmul.f32.gmra.mxu0 %v1255
      %v3615 = vpop.f32.mrf.mxu0
      %v3616 = vadd.f32 %v3500, %v3615
      %3617 = vmatmul.f32.gmra.mxu0 %v1258
      %v3618 = vpop.f32.mrf.mxu0
      %v3619 = vadd.f32 %v3503, %v3618
      %3620 = vmatmul.f32.gmra.mxu0 %v1261
      %v3621 = vpop.f32.mrf.mxu0
      %v3622 = vadd.f32 %v3506, %v3621
      %3623 = vdwg.mxu0
      %s3624 = scalar_lea.vmem %s1, 56
      %v3625 = vld [vmem:[%s3624] sm:$0xf]
      %v3627 = vsel %vm590, %v3625, 0
      %3629 = vmatpush.msra.mxu0 0.0
      %3630 = vmatpush.msra.mxu0 0.0
      %3631 = vmatpush.msra.mxu0 0.0
      %3632 = vmatpush.msra.mxu0 0.0
      %3633 = vmatpush.msra.mxu0 0.0
      %3634 = vmatpush.msra.mxu0 0.0
      %3635 = vmatpush.msra.mxu0 0.0
      %3636 = vmatpush.msra.mxu0 0.0
      %3637 = vmatpush.msra.mxu0 0.0
      %3638 = vmatpush.msra.mxu0 0.0
      %3639 = vmatpush.msra.mxu0 0.0
      %3640 = vmatpush.msra.mxu0 0.0
      %3641 = vmatpush.msra.mxu0 0.0
      %3642 = vmatpush.msra.mxu0 0.0
      %3643 = vmatpush.msra.mxu0 0.0
      %3644 = vmatpush.msra.mxu0 %v3627
      %3645 = vmatmul.f32.gmra.mxu0 %v3016
      %v3646 = vpop.f32.mrf.mxu0
      %v3647 = vadd.f32 0.0, %v3646
      %3648 = vmatmul.f32.gmra.mxu0 %v3019
      %v3649 = vpop.f32.mrf.mxu0
      %v3650 = vadd.f32 0.0, %v3649
      %3651 = vmatmul.f32.gmra.mxu0 %v3022
      %v3652 = vpop.f32.mrf.mxu0
      %v3653 = vadd.f32 0.0, %v3652
      %3654 = vmatmul.f32.gmra.mxu0 %v3025
      %v3655 = vpop.f32.mrf.mxu0
      %v3656 = vadd.f32 0.0, %v3655
      %3657 = vmatmul.f32.gmra.mxu0 %v3028
      %v3658 = vpop.f32.mrf.mxu0
      %v3659 = vadd.f32 0.0, %v3658
      %3660 = vmatmul.f32.gmra.mxu0 %v3031
      %v3661 = vpop.f32.mrf.mxu0
      %v3662 = vadd.f32 0.0, %v3661
      %3663 = vmatmul.f32.gmra.mxu0 %v3034
      %v3664 = vpop.f32.mrf.mxu0
      %v3665 = vadd.f32 0.0, %v3664
      %3666 = vmatmul.f32.gmra.mxu0 %v3037
      %v3667 = vpop.f32.mrf.mxu0
      %v3668 = vadd.f32 0.0, %v3667
      %3669 = vmatmul.f32.gmra.mxu0 %v3040
      %v3670 = vpop.f32.mrf.mxu0
      %v3671 = vadd.f32 0.0, %v3670
      %3672 = vmatmul.f32.gmra.mxu0 %v3043
      %v3673 = vpop.f32.mrf.mxu0
      %v3674 = vadd.f32 0.0, %v3673
      %3675 = vmatmul.f32.gmra.mxu0 %v3046
      %v3676 = vpop.f32.mrf.mxu0
      %v3677 = vadd.f32 0.0, %v3676
      %3678 = vmatmul.f32.gmra.mxu0 %v3049
      %v3679 = vpop.f32.mrf.mxu0
      %v3680 = vadd.f32 0.0, %v3679
      %3681 = vmatmul.f32.gmra.mxu0 %v3052
      %v3682 = vpop.f32.mrf.mxu0
      %v3683 = vadd.f32 0.0, %v3682
      %3684 = vmatmul.f32.gmra.mxu0 %v3055
      %v3685 = vpop.f32.mrf.mxu0
      %v3686 = vadd.f32 0.0, %v3685
      %3687 = vmatmul.f32.gmra.mxu0 %v3058
      %v3688 = vpop.f32.mrf.mxu0
      %v3689 = vadd.f32 0.0, %v3688
      %3690 = vmatmul.f32.gmra.mxu0 %v3061
      %v3691 = vpop.f32.mrf.mxu0
      %v3692 = vadd.f32 0.0, %v3691
      %3693 = vmatmul.f32.gmra.mxu0 %v3064
      %v3694 = vpop.f32.mrf.mxu0
      %v3695 = vadd.f32 0.0, %v3694
      %3696 = vmatmul.f32.gmra.mxu0 %v3067
      %v3697 = vpop.f32.mrf.mxu0
      %v3698 = vadd.f32 0.0, %v3697
      %3699 = vmatmul.f32.gmra.mxu0 %v3070
      %v3700 = vpop.f32.mrf.mxu0
      %v3701 = vadd.f32 0.0, %v3700
      %3702 = vmatmul.f32.gmra.mxu0 %v3073
      %v3703 = vpop.f32.mrf.mxu0
      %v3704 = vadd.f32 0.0, %v3703
      %3705 = vmatmul.f32.gmra.mxu0 %v3076
      %v3706 = vpop.f32.mrf.mxu0
      %v3707 = vadd.f32 0.0, %v3706
      %3708 = vmatmul.f32.gmra.mxu0 %v3079
      %v3709 = vpop.f32.mrf.mxu0
      %v3710 = vadd.f32 0.0, %v3709
      %3711 = vmatmul.f32.gmra.mxu0 %v3082
      %v3712 = vpop.f32.mrf.mxu0
      %v3713 = vadd.f32 0.0, %v3712
      %3714 = vmatmul.f32.gmra.mxu0 %v3085
      %v3715 = vpop.f32.mrf.mxu0
      %v3716 = vadd.f32 0.0, %v3715
      %3717 = vmatmul.f32.gmra.mxu0 %v3088
      %v3718 = vpop.f32.mrf.mxu0
      %v3719 = vadd.f32 0.0, %v3718
      %3720 = vmatmul.f32.gmra.mxu0 %v3091
      %v3721 = vpop.f32.mrf.mxu0
      %v3722 = vadd.f32 0.0, %v3721
      %3723 = vmatmul.f32.gmra.mxu0 %v3094
      %v3724 = vpop.f32.mrf.mxu0
      %v3725 = vadd.f32 0.0, %v3724
      %3726 = vmatmul.f32.gmra.mxu0 %v3097
      %v3727 = vpop.f32.mrf.mxu0
      %v3728 = vadd.f32 0.0, %v3727
      %3729 = vmatmul.f32.gmra.mxu0 %v3100
      %v3730 = vpop.f32.mrf.mxu0
      %v3731 = vadd.f32 0.0, %v3730
      %3732 = vmatmul.f32.gmra.mxu0 %v3103
      %v3733 = vpop.f32.mrf.mxu0
      %v3734 = vadd.f32 0.0, %v3733
      %3735 = vmatmul.f32.gmra.mxu0 %v3106
      %v3736 = vpop.f32.mrf.mxu0
      %v3737 = vadd.f32 0.0, %v3736
      %3738 = vmatmul.f32.gmra.mxu0 %v3109
      %v3739 = vpop.f32.mrf.mxu0
      %v3740 = vadd.f32 0.0, %v3739
      %3741 = vdwg.mxu0
      %v3742 = vadd.f32 %v3529, %v3647
      %v3743 = vadd.f32 %v3532, %v3650
      %v3744 = vadd.f32 %v3535, %v3653
      %v3745 = vadd.f32 %v3538, %v3656
      %v3746 = vadd.f32 %v3541, %v3659
      %v3747 = vadd.f32 %v3544, %v3662
      %v3748 = vadd.f32 %v3547, %v3665
      %v3749 = vadd.f32 %v3550, %v3668
      %v3750 = vadd.f32 %v3553, %v3671
      %v3751 = vadd.f32 %v3556, %v3674
      %v3752 = vadd.f32 %v3559, %v3677
      %v3753 = vadd.f32 %v3562, %v3680
      %v3754 = vadd.f32 %v3565, %v3683
      %v3755 = vadd.f32 %v3568, %v3686
      %v3756 = vadd.f32 %v3571, %v3689
      %v3757 = vadd.f32 %v3574, %v3692
      %v3758 = vadd.f32 %v3577, %v3695
      %v3759 = vadd.f32 %v3580, %v3698
      %v3760 = vadd.f32 %v3583, %v3701
      %v3761 = vadd.f32 %v3586, %v3704
      %v3762 = vadd.f32 %v3589, %v3707
      %v3763 = vadd.f32 %v3592, %v3710
      %v3764 = vadd.f32 %v3595, %v3713
      %v3765 = vadd.f32 %v3598, %v3716
      %v3766 = vadd.f32 %v3601, %v3719
      %v3767 = vadd.f32 %v3604, %v3722
      %v3768 = vadd.f32 %v3607, %v3725
      %v3769 = vadd.f32 %v3610, %v3728
      %v3770 = vadd.f32 %v3613, %v3731
      %v3771 = vadd.f32 %v3616, %v3734
      %v3772 = vadd.f32 %v3619, %v3737
      %v3773 = vadd.f32 %v3622, %v3740
      %s3774 = scalar_lea.vmem %s1, 60
      %v3775 = vld [vmem:[%s3774] sm:$0xf]
      %v3777 = vsel %vm493, %v456, 0
      %v3780 = vsel %vm493, %v457, 0
      %v3783 = vsel %vm493, %v458, 0
      %v3786 = vsel %vm493, %v459, 0
      %v3789 = vsel %vm493, %v460, 0
      %v3792 = vsel %vm493, %v461, 0
      %v3795 = vsel %vm493, %v462, 0
      %v3798 = vsel %vm493, %v463, 0
      %v3801 = vsel %vm493, %v464, 0
      %v3804 = vsel %vm493, %v465, 0
      %v3807 = vsel %vm493, %v466, 0
      %v3810 = vsel %vm493, %v467, 0
      %v3813 = vsel %vm493, %v468, 0
      %v3816 = vsel %vm493, %v469, 0
      %v3819 = vsel %vm493, %v470, 0
      %v3822 = vsel %vm493, %v471, 0
      %v3825 = vsel %vm493, %v472, 0
      %v3828 = vsel %vm493, %v473, 0
      %v3831 = vsel %vm493, %v474, 0
      %v3834 = vsel %vm493, %v475, 0
      %v3837 = vsel %vm493, %v476, 0
      %v3840 = vsel %vm493, %v477, 0
      %v3843 = vsel %vm493, %v478, 0
      %v3846 = vsel %vm493, %v479, 0
      %v3849 = vsel %vm493, %v480, 0
      %v3852 = vsel %vm493, %v481, 0
      %v3855 = vsel %vm493, %v482, 0
      %v3858 = vsel %vm493, %v483, 0
      %v3861 = vsel %vm493, %v484, 0
      %v3864 = vsel %vm493, %v485, 0
      %v3867 = vsel %vm493, %v486, 0
      %v3870 = vsel %vm493, %v487, 0
      %v3873 = vsel %vm590, %v3775, 0
      %3875 = vmatpush.msra.mxu0 0.0
      %3876 = vmatpush.msra.mxu0 0.0
      %3877 = vmatpush.msra.mxu0 0.0
      %3878 = vmatpush.msra.mxu0 0.0
      %3879 = vmatpush.msra.mxu0 0.0
      %3880 = vmatpush.msra.mxu0 0.0
      %3881 = vmatpush.msra.mxu0 0.0
      %3882 = vmatpush.msra.mxu0 0.0
      %3883 = vmatpush.msra.mxu0 0.0
      %3884 = vmatpush.msra.mxu0 0.0
      %3885 = vmatpush.msra.mxu0 0.0
      %3886 = vmatpush.msra.mxu0 0.0
      %3887 = vmatpush.msra.mxu0 0.0
      %3888 = vmatpush.msra.mxu0 0.0
      %3889 = vmatpush.msra.mxu0 0.0
      %3890 = vmatpush.msra.mxu0 %v3873
      %3891 = vmatmul.f32.gmra.mxu0 %v3777
      %v3892 = vpop.f32.mrf.mxu0
      %v3893 = vadd.f32 0.0, %v3892
      %3894 = vmatmul.f32.gmra.mxu0 %v3780
      %v3895 = vpop.f32.mrf.mxu0
      %v3896 = vadd.f32 0.0, %v3895
      %3897 = vmatmul.f32.gmra.mxu0 %v3783
      %v3898 = vpop.f32.mrf.mxu0
      %v3899 = vadd.f32 0.0, %v3898
      %3900 = vmatmul.f32.gmra.mxu0 %v3786
      %v3901 = vpop.f32.mrf.mxu0
      %v3902 = vadd.f32 0.0, %v3901
      %3903 = vmatmul.f32.gmra.mxu0 %v3789
      %v3904 = vpop.f32.mrf.mxu0
      %v3905 = vadd.f32 0.0, %v3904
      %3906 = vmatmul.f32.gmra.mxu0 %v3792
      %v3907 = vpop.f32.mrf.mxu0
      %v3908 = vadd.f32 0.0, %v3907
      %3909 = vmatmul.f32.gmra.mxu0 %v3795
      %v3910 = vpop.f32.mrf.mxu0
      %v3911 = vadd.f32 0.0, %v3910
      %3912 = vmatmul.f32.gmra.mxu0 %v3798
      %v3913 = vpop.f32.mrf.mxu0
      %v3914 = vadd.f32 0.0, %v3913
      %3915 = vmatmul.f32.gmra.mxu0 %v3801
      %v3916 = vpop.f32.mrf.mxu0
      %v3917 = vadd.f32 0.0, %v3916
      %3918 = vmatmul.f32.gmra.mxu0 %v3804
      %v3919 = vpop.f32.mrf.mxu0
      %v3920 = vadd.f32 0.0, %v3919
      %3921 = vmatmul.f32.gmra.mxu0 %v3807
      %v3922 = vpop.f32.mrf.mxu0
      %v3923 = vadd.f32 0.0, %v3922
      %3924 = vmatmul.f32.gmra.mxu0 %v3810
      %v3925 = vpop.f32.mrf.mxu0
      %v3926 = vadd.f32 0.0, %v3925
      %3927 = vmatmul.f32.gmra.mxu0 %v3813
      %v3928 = vpop.f32.mrf.mxu0
      %v3929 = vadd.f32 0.0, %v3928
      %3930 = vmatmul.f32.gmra.mxu0 %v3816
      %v3931 = vpop.f32.mrf.mxu0
      %v3932 = vadd.f32 0.0, %v3931
      %3933 = vmatmul.f32.gmra.mxu0 %v3819
      %v3934 = vpop.f32.mrf.mxu0
      %v3935 = vadd.f32 0.0, %v3934
      %3936 = vmatmul.f32.gmra.mxu0 %v3822
      %v3937 = vpop.f32.mrf.mxu0
      %v3938 = vadd.f32 0.0, %v3937
      %3939 = vmatmul.f32.gmra.mxu0 %v3825
      %v3940 = vpop.f32.mrf.mxu0
      %v3941 = vadd.f32 0.0, %v3940
      %3942 = vmatmul.f32.gmra.mxu0 %v3828
      %v3943 = vpop.f32.mrf.mxu0
      %v3944 = vadd.f32 0.0, %v3943
      %3945 = vmatmul.f32.gmra.mxu0 %v3831
      %v3946 = vpop.f32.mrf.mxu0
      %v3947 = vadd.f32 0.0, %v3946
      %3948 = vmatmul.f32.gmra.mxu0 %v3834
      %v3949 = vpop.f32.mrf.mxu0
      %v3950 = vadd.f32 0.0, %v3949
      %3951 = vmatmul.f32.gmra.mxu0 %v3837
      %v3952 = vpop.f32.mrf.mxu0
      %v3953 = vadd.f32 0.0, %v3952
      %3954 = vmatmul.f32.gmra.mxu0 %v3840
      %v3955 = vpop.f32.mrf.mxu0
      %v3956 = vadd.f32 0.0, %v3955
      %3957 = vmatmul.f32.gmra.mxu0 %v3843
      %v3958 = vpop.f32.mrf.mxu0
      %v3959 = vadd.f32 0.0, %v3958
      %3960 = vmatmul.f32.gmra.mxu0 %v3846
      %v3961 = vpop.f32.mrf.mxu0
      %v3962 = vadd.f32 0.0, %v3961
      %3963 = vmatmul.f32.gmra.mxu0 %v3849
      %v3964 = vpop.f32.mrf.mxu0
      %v3965 = vadd.f32 0.0, %v3964
      %3966 = vmatmul.f32.gmra.mxu0 %v3852
      %v3967 = vpop.f32.mrf.mxu0
      %v3968 = vadd.f32 0.0, %v3967
      %3969 = vmatmul.f32.gmra.mxu0 %v3855
      %v3970 = vpop.f32.mrf.mxu0
      %v3971 = vadd.f32 0.0, %v3970
      %3972 = vmatmul.f32.gmra.mxu0 %v3858
      %v3973 = vpop.f32.mrf.mxu0
      %v3974 = vadd.f32 0.0, %v3973
      %3975 = vmatmul.f32.gmra.mxu0 %v3861
      %v3976 = vpop.f32.mrf.mxu0
      %v3977 = vadd.f32 0.0, %v3976
      %3978 = vmatmul.f32.gmra.mxu0 %v3864
      %v3979 = vpop.f32.mrf.mxu0
      %v3980 = vadd.f32 0.0, %v3979
      %3981 = vmatmul.f32.gmra.mxu0 %v3867
      %v3982 = vpop.f32.mrf.mxu0
      %v3983 = vadd.f32 0.0, %v3982
      %3984 = vmatmul.f32.gmra.mxu0 %v3870
      %v3985 = vpop.f32.mrf.mxu0
      %v3986 = vadd.f32 0.0, %v3985
      %3987 = vdwg.mxu0
      %v3988 = vadd.f32 %v3742, %v3893
      %v3989 = vadd.f32 %v3743, %v3896
      %v3990 = vadd.f32 %v3744, %v3899
      %v3991 = vadd.f32 %v3745, %v3902
      %v3992 = vadd.f32 %v3746, %v3905
      %v3993 = vadd.f32 %v3747, %v3908
      %v3994 = vadd.f32 %v3748, %v3911
      %v3995 = vadd.f32 %v3749, %v3914
      %v3996 = vadd.f32 %v3750, %v3917
      %v3997 = vadd.f32 %v3751, %v3920
      %v3998 = vadd.f32 %v3752, %v3923
      %v3999 = vadd.f32 %v3753, %v3926
      %v4000 = vadd.f32 %v3754, %v3929
      %v4001 = vadd.f32 %v3755, %v3932
      %v4002 = vadd.f32 %v3756, %v3935
      %v4003 = vadd.f32 %v3757, %v3938
      %v4004 = vadd.f32 %v3758, %v3941
      %v4005 = vadd.f32 %v3759, %v3944
      %v4006 = vadd.f32 %v3760, %v3947
      %v4007 = vadd.f32 %v3761, %v3950
      %v4008 = vadd.f32 %v3762, %v3953
      %v4009 = vadd.f32 %v3763, %v3956
      %v4010 = vadd.f32 %v3764, %v3959
      %v4011 = vadd.f32 %v3765, %v3962
      %v4012 = vadd.f32 %v3766, %v3965
      %v4013 = vadd.f32 %v3767, %v3968
      %v4014 = vadd.f32 %v3768, %v3971
      %v4015 = vadd.f32 %v3769, %v3974
      %v4016 = vadd.f32 %v3770, %v3977
      %v4017 = vadd.f32 %v3771, %v3980
      %v4018 = vadd.f32 %v3772, %v3983
      %v4019 = vadd.f32 %v3773, %v3986
      %v4020 = vmul.f32 %v3988, %v1412
      %v4021 = vmul.f32 %v3989, %v1412
      %v4022 = vmul.f32 %v3990, %v1412
      %v4023 = vmul.f32 %v3991, %v1412
      %v4024 = vmul.f32 %v3992, %v1412
      %v4025 = vmul.f32 %v3993, %v1412
      %v4026 = vmul.f32 %v3994, %v1412
      %v4027 = vmul.f32 %v3995, %v1412
      %v4028 = vmul.f32 %v3996, %v1412
      %v4029 = vmul.f32 %v3997, %v1412
      %v4030 = vmul.f32 %v3998, %v1412
      %v4031 = vmul.f32 %v3999, %v1412
      %v4032 = vmul.f32 %v4000, %v1412
      %v4033 = vmul.f32 %v4001, %v1412
      %v4034 = vmul.f32 %v4002, %v1412
      %v4035 = vmul.f32 %v4003, %v1412
      %v4036 = vmul.f32 %v4004, %v1412
      %v4037 = vmul.f32 %v4005, %v1412
      %v4038 = vmul.f32 %v4006, %v1412
      %v4039 = vmul.f32 %v4007, %v1412
      %v4040 = vmul.f32 %v4008, %v1412
      %v4041 = vmul.f32 %v4009, %v1412
      %v4042 = vmul.f32 %v4010, %v1412
      %v4043 = vmul.f32 %v4011, %v1412
      %v4044 = vmul.f32 %v4012, %v1412
      %v4045 = vmul.f32 %v4013, %v1412
      %v4046 = vmul.f32 %v4014, %v1412
      %v4047 = vmul.f32 %v4015, %v1412
      %v4048 = vmul.f32 %v4016, %v1412
      %v4049 = vmul.f32 %v4017, %v1412
      %v4050 = vmul.f32 %v4018, %v1412
      %v4051 = vmul.f32 %v4019, %v1412
      %v4052 = vadd.f32 %v4020, %v1447
      %v4053 = vadd.f32 %v4021, %v1447
      %v4054 = vadd.f32 %v4022, %v1447
      %v4055 = vadd.f32 %v4023, %v1447
      %v4056 = vadd.f32 %v4024, %v1447
      %v4057 = vadd.f32 %v4025, %v1447
      %v4058 = vadd.f32 %v4026, %v1447
      %v4059 = vadd.f32 %v4027, %v1447
      %v4060 = vadd.f32 %v4028, %v1447
      %v4061 = vadd.f32 %v4029, %v1447
      %v4062 = vadd.f32 %v4030, %v1447
      %v4063 = vadd.f32 %v4031, %v1447
      %v4064 = vadd.f32 %v4032, %v1447
      %v4065 = vadd.f32 %v4033, %v1447
      %v4066 = vadd.f32 %v4034, %v1447
      %v4067 = vadd.f32 %v4035, %v1447
      %v4068 = vadd.f32 %v4036, %v1447
      %v4069 = vadd.f32 %v4037, %v1447
      %v4070 = vadd.f32 %v4038, %v1447
      %v4071 = vadd.f32 %v4039, %v1447
      %v4072 = vadd.f32 %v4040, %v1447
      %v4073 = vadd.f32 %v4041, %v1447
      %v4074 = vadd.f32 %v4042, %v1447
      %v4075 = vadd.f32 %v4043, %v1447
      %v4076 = vadd.f32 %v4044, %v1447
      %v4077 = vadd.f32 %v4045, %v1447
      %v4078 = vadd.f32 %v4046, %v1447
      %v4079 = vadd.f32 %v4047, %v1447
      %v4080 = vadd.f32 %v4048, %v1447
      %v4081 = vadd.f32 %v4049, %v1447
      %v4082 = vadd.f32 %v4050, %v1447
      %v4083 = vadd.f32 %v4051, %v1447
      %v4084 = vmax.f32 %v4052, 0.0
      %v4085 = vmax.f32 %v4053, 0.0
      %v4086 = vmax.f32 %v4054, 0.0
      %v4087 = vmax.f32 %v4055, 0.0
      %v4088 = vmax.f32 %v4056, 0.0
      %v4089 = vmax.f32 %v4057, 0.0
      %v4090 = vmax.f32 %v4058, 0.0
      %v4091 = vmax.f32 %v4059, 0.0
      %v4092 = vmax.f32 %v4060, 0.0
      %v4093 = vmax.f32 %v4061, 0.0
      %v4094 = vmax.f32 %v4062, 0.0
      %v4095 = vmax.f32 %v4063, 0.0
      %v4096 = vmax.f32 %v4064, 0.0
      %v4097 = vmax.f32 %v4065, 0.0
      %v4098 = vmax.f32 %v4066, 0.0
      %v4099 = vmax.f32 %v4067, 0.0
      %v4100 = vmax.f32 %v4068, 0.0
      %v4101 = vmax.f32 %v4069, 0.0
      %v4102 = vmax.f32 %v4070, 0.0
      %v4103 = vmax.f32 %v4071, 0.0
      %v4104 = vmax.f32 %v4072, 0.0
      %v4105 = vmax.f32 %v4073, 0.0
      %v4106 = vmax.f32 %v4074, 0.0
      %v4107 = vmax.f32 %v4075, 0.0
      %v4108 = vmax.f32 %v4076, 0.0
      %v4109 = vmax.f32 %v4077, 0.0
      %v4110 = vmax.f32 %v4078, 0.0
      %v4111 = vmax.f32 %v4079, 0.0
      %v4112 = vmax.f32 %v4080, 0.0
      %v4113 = vmax.f32 %v4081, 0.0
      %v4114 = vmax.f32 %v4082, 0.0
      %v4115 = vmax.f32 %v4083, 0.0
      %4148 = vrot.lane.b32.xlu0 %v4084, 8
      %v4149 = vpop.permute.xlu0 %4148
      %4150 = vrot.lane.b32.xlu0 %v4085, 8
      %v4151 = vpop.permute.xlu0 %4150
      %4152 = vrot.lane.b32.xlu0 %v4086, 8
      %v4153 = vpop.permute.xlu0 %4152
      %4154 = vrot.lane.b32.xlu0 %v4087, 8
      %v4155 = vpop.permute.xlu0 %4154
      %4156 = vrot.lane.b32.xlu0 %v4088, 8
      %v4157 = vpop.permute.xlu0 %4156
      %4158 = vrot.lane.b32.xlu0 %v4089, 8
      %v4159 = vpop.permute.xlu0 %4158
      %4160 = vrot.lane.b32.xlu0 %v4090, 8
      %v4161 = vpop.permute.xlu0 %4160
      %4162 = vrot.lane.b32.xlu0 %v4091, 8
      %v4163 = vpop.permute.xlu0 %4162
      %4164 = vrot.lane.b32.xlu0 %v4092, 8
      %v4165 = vpop.permute.xlu0 %4164
      %4166 = vrot.lane.b32.xlu0 %v4093, 8
      %v4167 = vpop.permute.xlu0 %4166
      %4168 = vrot.lane.b32.xlu0 %v4094, 8
      %v4169 = vpop.permute.xlu0 %4168
      %4170 = vrot.lane.b32.xlu0 %v4095, 8
      %v4171 = vpop.permute.xlu0 %4170
      %4172 = vrot.lane.b32.xlu0 %v4096, 8
      %v4173 = vpop.permute.xlu0 %4172
      %4174 = vrot.lane.b32.xlu0 %v4097, 8
      %v4175 = vpop.permute.xlu0 %4174
      %4176 = vrot.lane.b32.xlu0 %v4098, 8
      %v4177 = vpop.permute.xlu0 %4176
      %4178 = vrot.lane.b32.xlu0 %v4099, 8
      %v4179 = vpop.permute.xlu0 %4178
      %4180 = vrot.lane.b32.xlu0 %v4100, 8
      %v4181 = vpop.permute.xlu0 %4180
      %4182 = vrot.lane.b32.xlu0 %v4101, 8
      %v4183 = vpop.permute.xlu0 %4182
      %4184 = vrot.lane.b32.xlu0 %v4102, 8
      %v4185 = vpop.permute.xlu0 %4184
      %4186 = vrot.lane.b32.xlu0 %v4103, 8
      %v4187 = vpop.permute.xlu0 %4186
      %4188 = vrot.lane.b32.xlu0 %v4104, 8
      %v4189 = vpop.permute.xlu0 %4188
      %4190 = vrot.lane.b32.xlu0 %v4105, 8
      %v4191 = vpop.permute.xlu0 %4190
      %4192 = vrot.lane.b32.xlu0 %v4106, 8
      %v4193 = vpop.permute.xlu0 %4192
      %4194 = vrot.lane.b32.xlu0 %v4107, 8
      %v4195 = vpop.permute.xlu0 %4194
      %4196 = vrot.lane.b32.xlu0 %v4108, 8
      %v4197 = vpop.permute.xlu0 %4196
      %4198 = vrot.lane.b32.xlu0 %v4109, 8
      %v4199 = vpop.permute.xlu0 %4198
      %4200 = vrot.lane.b32.xlu0 %v4110, 8
      %v4201 = vpop.permute.xlu0 %4200
      %4202 = vrot.lane.b32.xlu0 %v4111, 8
      %v4203 = vpop.permute.xlu0 %4202
      %4204 = vrot.lane.b32.xlu0 %v4112, 8
      %v4205 = vpop.permute.xlu0 %4204
      %4206 = vrot.lane.b32.xlu0 %v4113, 8
      %v4207 = vpop.permute.xlu0 %4206
      %4208 = vrot.lane.b32.xlu0 %v4114, 8
      %v4209 = vpop.permute.xlu0 %4208
      %4210 = vrot.lane.b32.xlu0 %v4115, 8
      %v4211 = vpop.permute.xlu0 %4210
      %4244 = vst.msk [vmem:[%s3355] sm:$0xff] %vm2498, %v4149
      %4245 = vst.msk [vmem:[%s3355 + $0x8] sm:$0xff] %vm2498, %v4151
      %4246 = vst.msk [vmem:[%s3355 + $0x20] sm:$0xff] %vm2498, %v4153
      %4247 = vst.msk [vmem:[%s3355 + $0x28] sm:$0xff] %vm2498, %v4155
      %4248 = vst.msk [vmem:[%s3355 + $0x40] sm:$0xff] %vm2498, %v4157
      %4249 = vst.msk [vmem:[%s3355 + $0x48] sm:$0xff] %vm2498, %v4159
      %4250 = vst.msk [vmem:[%s3355 + $0x60] sm:$0xff] %vm2498, %v4161
      %4251 = vst.msk [vmem:[%s3355 + $0x68] sm:$0xff] %vm2498, %v4163
      %4252 = vst.msk [vmem:[%s3355 + $0x80] sm:$0xff] %vm2498, %v4165
      %4253 = vst.msk [vmem:[%s3355 + $0x88] sm:$0xff] %vm2498, %v4167
      %4254 = vst.msk [vmem:[%s3355 + $0xa0] sm:$0xff] %vm2498, %v4169
      %4255 = vst.msk [vmem:[%s3355 + $0xa8] sm:$0xff] %vm2498, %v4171
      %4256 = vst.msk [vmem:[%s3355 + $0xc0] sm:$0xff] %vm2498, %v4173
      %4257 = vst.msk [vmem:[%s3355 + $0xc8] sm:$0xff] %vm2498, %v4175
      %4258 = vst.msk [vmem:[%s3355 + $0xe0] sm:$0xff] %vm2498, %v4177
      %4259 = vst.msk [vmem:[%s3355 + $0xe8] sm:$0xff] %vm2498, %v4179
      %4260 = vst.msk [vmem:[%s3355 + $0x100] sm:$0xff] %vm2498, %v4181
      %4261 = vst.msk [vmem:[%s3355 + $0x108] sm:$0xff] %vm2498, %v4183
      %4262 = vst.msk [vmem:[%s3355 + $0x120] sm:$0xff] %vm2498, %v4185
      %4263 = vst.msk [vmem:[%s3355 + $0x128] sm:$0xff] %vm2498, %v4187
      %4264 = vst.msk [vmem:[%s3355 + $0x140] sm:$0xff] %vm2498, %v4189
      %4265 = vst.msk [vmem:[%s3355 + $0x148] sm:$0xff] %vm2498, %v4191
      %4266 = vst.msk [vmem:[%s3355 + $0x160] sm:$0xff] %vm2498, %v4193
      %4267 = vst.msk [vmem:[%s3355 + $0x168] sm:$0xff] %vm2498, %v4195
      %4268 = vst.msk [vmem:[%s3355 + $0x180] sm:$0xff] %vm2498, %v4197
      %4269 = vst.msk [vmem:[%s3355 + $0x188] sm:$0xff] %vm2498, %v4199
      %4270 = vst.msk [vmem:[%s3355 + $0x1a0] sm:$0xff] %vm2498, %v4201
      %4271 = vst.msk [vmem:[%s3355 + $0x1a8] sm:$0xff] %vm2498, %v4203
      %4272 = vst.msk [vmem:[%s3355 + $0x1c0] sm:$0xff] %vm2498, %v4205
      %4273 = vst.msk [vmem:[%s3355 + $0x1c8] sm:$0xff] %vm2498, %v4207
      %4274 = vst.msk [vmem:[%s3355 + $0x1e0] sm:$0xff] %vm2498, %v4209
      %4275 = vst.msk [vmem:[%s3355 + $0x1e8] sm:$0xff] %vm2498, %v4211
      %p4276 = scmp.lt.s32.totalorder %s15, 1
      %s4277 = scalar_select %p4276, %s15, 1
      %s4278 = smul.addr %s4277, 64
      %s4279 = smul.addr %s4278, 8
      %s4280 = scalar_lea.vmem %s4, %s4279
      // Predicated region
      $region37: #{up_conv_forward.1} parent=35 // pred_check
        %p4281 = pneg %p122
      $region38: #{up_conv_forward.1} parent=35 // pred_check_branch
        %4283 = sbr.rel (%p4281) target = $region40
      $region39: #{up_conv_forward.1} parent=35 // pred_region
        _
      $region40: #{up_conv_forward.1} parent=35 // pred_fallthru
        _
    $region36: #{up_conv_forward.1} parent=5 // pred_fallthru
      _
    %p4284 = scmp.le.s32.totalorder 2, %s10
    // Predicated region
    $region41: #{up_conv_forward.1} parent=5 // pred_check
      %p4285 = pneg %p4284
    $region42: #{up_conv_forward.1} parent=5 // pred_check_branch
      %4287 = sbr.rel (%p4285) target = $region44
    $region43: #{up_conv_forward.1} parent=5 // pred_region
      %s4288 = ssub.s32 %s10, 2
      // Predicated region
      $region45: #{up_conv_forward.1} parent=43 // pred_check
        %p4289 = pneg %p128
      $region46: #{up_conv_forward.1} parent=43 // pred_check_branch
        %4291 = sbr.rel (%p4289) target = $region48
      $region47: #{up_conv_forward.1} parent=43 // pred_region
        %p4292 = scmp.lt.s32.totalorder %s16, 1
        %s4293 = scalar_select %p4292, %s16, 1
        %s4294 = smul.addr %s4293, 64
        %s4295 = smul.addr %s4294, 8
        %s4296 = scalar_lea.vmem %s4, %s4295
      $region48: #{up_conv_forward.1} parent=43 // pred_fallthru
        _
    $region44: #{up_conv_forward.1} parent=5 // pred_fallthru
      _
  $region6: #{up_conv_forward.1} parent=0 // loop_footer
    %s14 = sadd.s32 1, %s10
  $region7: #{up_conv_forward.1} parent=0 // loop_footer_branch
    %9 = sbr.rel target = $region3
  $region8: #{up_conv_forward.1} parent=0 // loop_exit
    _

</llo_original>
